<compile_context>
chip_gen: v5e
topology: v5e:2x2
jax: 0.10.0
libtpu: 0.0.40
codegen_flags: <defaults>
</compile_context>

<pallas_src>
import functools

import numpy as np
import jax
import jax.numpy as jnp
from jax.experimental import pallas as pl
from jax.experimental.pallas import tpu as pltpu


def _leaky_relu(x, slope):
    return jnp.where(x >= 0, x, slope * x)


# ------------------------------ Pallas kernels -------------------------------

def _cell_project_kernel(h_ref, x_ref, whT_ref, bh_ref, wxT_ref, bx_ref,
                         wir_ref, armab_ref, wgT_ref, att_bd_ref,
                         xphp_ref, rootatt_ref, *, out_dim, heads):
    """Fused per-node-tile projections feeding the aggregation kernel.

    Emits two lane-dense slabs:
      xphp    (bf16): [ xp (heads*out_dim) | hp=h1@W_init (out_dim) ]
      rootatt (f32) : [ h1@W_root + b (out_dim) | a_dst (heads) | a_src (heads) ]
    """
    # preprocessor_h / preprocessor_x (Linear, f32 accumulate)
    h1 = jnp.dot(h_ref[...], whT_ref[...],
                 preferred_element_type=jnp.float32) + bh_ref[...]
    x1 = jnp.dot(x_ref[...], wxT_ref[...],
                 preferred_element_type=jnp.float32) + bx_ref[...]
    # ARMA: one lane-dense matmul for h1 @ [W_init | W_root]
    ir = jnp.dot(h1, wir_ref[...], preferred_element_type=jnp.float32)
    # GAT: projected features + ALL per-head attention coefficients with a
    # single block-diagonal MXU matmul ([hd, 2*heads]).
    xp = jnp.dot(x1, wgT_ref[...], preferred_element_type=jnp.float32)
    att = jnp.dot(xp, att_bd_ref[...], preferred_element_type=jnp.float32)
    # single bf16 [tm, hd+out_dim] store (lane-dense)
    xphp_ref[...] = jnp.concatenate(
        [xp, ir[:, :out_dim]], axis=1).astype(xphp_ref.dtype)
    # single f32 [tm, out_dim + 2*heads] store
    rootatt_ref[...] = jnp.concatenate(
        [ir[:, out_dim:] + armab_ref[...], att], axis=1)


def _cell_aggregate_kernel(*refs, heads, out_dim, num_class):
    """Tiled ARMA propagation + online-softmax GAT; one fused output store.

    If num_class is not None, the classifier (Linear + log_softmax) is fused
    into the finalize step and the output is the per-node log-probabilities.
    """
    if num_class is None:
        (a_norm_ref, xphp_ref, ra_ref, asrcT_ref, gatb_ref,
         o_ref, acc_arma, m_sc, l_sc, acc_gat) = refs
    else:
        (a_norm_ref, xphp_ref, ra_ref, asrcT_ref, gatb_ref, wcT_ref, bc_ref,
         o_ref, acc_arma, m_sc, l_sc, acc_gat) = refs

    k = pl.program_id(1)
    nk = pl.num_programs(1)
    hd = heads * out_dim
    neg = jnp.float32(-1e30)

    @pl.when(k == 0)
    def _():
        acc_arma[...] = jnp.zeros_like(acc_arma)
        acc_gat[...] = jnp.zeros_like(acc_gat)
        m_sc[...] = jnp.full_like(m_sc, neg)
        l_sc[...] = jnp.zeros_like(l_sc)

    a_norm = a_norm_ref[...]                 # [tm, tk] bf16
    xphp = xphp_ref[...]                     # [tk, hd+out_dim] bf16

    # ---- ARMA: acc += A_norm[i-tile, k-tile] @ (h1 @ W_init)[k-tile]
    acc_arma[...] += jnp.dot(a_norm, xphp[:, hd:],
                             preferred_element_type=jnp.float32)

    # ---- GAT mask derived in-kernel (no separate adj stream):
    #      edges of the gcn-normalized adjacency plus self-loops (incl. pad
    #      rows, which keeps every softmax denominator finite).
    tm, tk = a_norm.shape
    row = (jax.lax.broadcasted_iota(jnp.int32, (tm, tk), 0)
           + pl.program_id(0) * tm)
    col = jax.lax.broadcasted_iota(jnp.int32, (tm, tk), 1) + k * tk
    mask = (a_norm != 0) | (row == col)
    bias = jnp.where(mask, 0.0, neg)         # hoisted out of the head loop

    ra = ra_ref[...]                         # [tm, out_dim + heads] f32
    adst = ra[:, out_dim:]                   # [tm, heads]
    asrcT = asrcT_ref[...]                   # [heads, tk] f32

    # ---- flash-style online softmax per head over source-node tiles
    for h in range(heads):
        sl = slice(h * out_dim, (h + 1) * out_dim)
        e = _leaky_relu(adst[:, h:h + 1] + asrcT[h:h + 1, :], 0.2) + bias
        m_old = m_sc[:, h:h + 1]
        m_new = jnp.maximum(m_old, jnp.max(e, axis=-1, keepdims=True))
        # guard needed: a fully-masked tile with m still at -1e30 would
        # otherwise yield p=1 for non-edges.
        p = jnp.where(mask, jnp.exp(e - m_new), 0.0)
        alpha = jnp.exp(m_old - m_new)
        l_sc[:, h:h + 1] = (alpha * l_sc[:, h:h + 1]
                            + jnp.sum(p, axis=-1, keepdims=True))
        acc_gat[:, sl] = alpha * acc_gat[:, sl] + jnp.dot(
            p.astype(xphp.dtype), xphp[:, sl],
            preferred_element_type=jnp.float32)
        m_sc[:, h:h + 1] = m_new

    @pl.when(k == nk - 1)
    def _():
        # ARMA branch: ReLU (ARMA act); cell leaky_relu is identity after ReLU.
        arma_out = jnp.tanh(jnp.maximum(acc_arma[...] + ra[:, :out_dim], 0.0))
        gatb = gatb_ref[...]
        cols = [arma_out]
        for h in range(heads):
            sl = slice(h * out_dim, (h + 1) * out_dim)
            inv_l = pl.reciprocal(l_sc[:, h:h + 1], approx=True)
            gh = acc_gat[:, sl] * inv_l + gatb[:, sl]
            gh = _leaky_relu(gh, 0.01)                  # cell F.leaky_relu
            cols.append(jnp.tanh(gh))
        cell = jnp.concatenate(cols, axis=1)            # [tm, out_dim + hd]
        if num_class is None:
            # intermediate cell: one lane-dense bf16 store
            o_ref[...] = cell.astype(o_ref.dtype)
        else:
            # last cell: fused classifier Linear + log_softmax
            logits = jnp.dot(cell, wcT_ref[...],
                             preferred_element_type=jnp.float32) + bc_ref[...]
            m = jnp.max(logits, axis=-1, keepdims=True)
            lse = m + jnp.log(jnp.sum(jnp.exp(logits - m), axis=-1,
                                      keepdims=True))
            o_ref[...] = (logits - lse).astype(o_ref.dtype)


# ------------------------------ kernel wrappers -------------------------------

def pallas_cell_project(h, x, c, *, tm):
    n = h.shape[0]
    his_dim, cur_dim = h.shape[1], x.shape[1]
    hidden = c["whT"].shape[1]
    heads, out_dim = c["heads"], c["out_dim"]
    hd = heads * out_dim
    ni = n // tm

    def full(r, cc):
        return pl.BlockSpec((r, cc), lambda i: (0, 0))

    grid_spec = pltpu.PrefetchScalarGridSpec(
        num_scalar_prefetch=0, grid=(ni,),
        in_specs=[
            pl.BlockSpec((tm, his_dim), lambda i: (i, 0)),   # h
            pl.BlockSpec((tm, cur_dim), lambda i: (i, 0)),   # x
            full(his_dim, hidden), full(1, hidden),          # Wh^T, bh
            full(cur_dim, hidden), full(1, hidden),          # Wx^T, bx
            full(hidden, 2 * out_dim), full(1, out_dim),     # [Wi|Wr], arma b
            full(hidden, hd),                                # Wgat^T
            full(hd, 2 * heads),                             # [att_dst|att_src]
        ],
        out_specs=[
            pl.BlockSpec((tm, hd + out_dim), lambda i: (i, 0)),       # xp|hp
            pl.BlockSpec((tm, out_dim + 2 * heads), lambda i: (i, 0)),  # root|att
        ])
    out_shape = (
        jax.ShapeDtypeStruct((n, hd + out_dim), jnp.bfloat16),
        jax.ShapeDtypeStruct((n, out_dim + 2 * heads), jnp.float32),
    )
    return pl.pallas_call(
        functools.partial(_cell_project_kernel, out_dim=out_dim, heads=heads),
        out_shape=out_shape, grid_spec=grid_spec,
        compiler_params=pltpu.CompilerParams(
            dimension_semantics=("parallel",)),
    )(h, x, c["whT"], c["bh"], c["wxT"], c["bx"], c["wir"], c["armab"],
      c["wgT"], c["att_bd"])


def pallas_cell_aggregate(a_norm, xphp, rootb_adst, asrcT, gatb, clf,
                          *, heads, out_dim, tm, tk):
    n = a_norm.shape[0]
    hd = heads * out_dim
    ni, nk = n // tm, n // tk

    in_specs = [
        pl.BlockSpec((tm, tk), lambda i, k: (i, k)),            # A_norm (bf16)
        pl.BlockSpec((tk, hd + out_dim), lambda i, k: (k, 0)),  # [xp|hp] bf16
        pl.BlockSpec((tm, out_dim + heads), lambda i, k: (i, 0)),  # root|a_dst
        pl.BlockSpec((heads, tk), lambda i, k: (0, k)),         # a_src^T
        pl.BlockSpec((1, hd), lambda i, k: (0, 0)),             # gat bias
    ]
    args = [a_norm, xphp, rootb_adst, asrcT, gatb]
    if clf is None:
        num_class = None
        out_shape = jax.ShapeDtypeStruct((n, out_dim + hd), jnp.bfloat16)
        out_spec = pl.BlockSpec((tm, out_dim + hd), lambda i, k: (i, 0))
    else:
        wcT, bc = clf
        num_class = wcT.shape[1]
        in_specs += [pl.BlockSpec((out_dim + hd, num_class),
                                  lambda i, k: (0, 0)),
                     pl.BlockSpec((1, num_class), lambda i, k: (0, 0))]
        args += [wcT, bc]
        out_shape = jax.ShapeDtypeStruct((n, num_class), jnp.float32)
        out_spec = pl.BlockSpec((tm, num_class), lambda i, k: (i, 0))

    grid_spec = pltpu.PrefetchScalarGridSpec(
        num_scalar_prefetch=0, grid=(ni, nk),
        in_specs=in_specs, out_specs=out_spec,
        scratch_shapes=[
            pltpu.VMEM((tm, out_dim), jnp.float32),   # ARMA accumulator
            pltpu.VMEM((tm, heads), jnp.float32),     # softmax running max
            pltpu.VMEM((tm, heads), jnp.float32),     # softmax running sum
            pltpu.VMEM((tm, hd), jnp.float32),        # GAT accumulator
        ])
    return pl.pallas_call(
        functools.partial(_cell_aggregate_kernel, heads=heads,
                          out_dim=out_dim, num_class=num_class),
        out_shape=out_shape, grid_spec=grid_spec,
        compiler_params=pltpu.CompilerParams(
            dimension_semantics=("parallel", "arbitrary"),
            vmem_limit_bytes=32 * 1024 * 1024),
    )(*args)


# ---------------------------- graph preprocessing -----------------------------

def build_gcn_norm_adj(edge_index, edge_weight, num_nodes, num_pad):
    """ARMAConv gcn_norm(add_self_loops=False) dense adjacency (bf16).

    The GAT edge mask is derived in-kernel as (a_norm != 0) | diag, so only
    this one O(n^2) array is materialized / streamed.  Edges whose normalized
    weight is exactly zero would drop from the GAT mask (none at these scales).
    """
    src, dst = edge_index[0], edge_index[1]
    deg = jnp.zeros((num_nodes,), jnp.float32).at[dst].add(edge_weight)
    dinv = jnp.where(deg > 0, 1.0 / jnp.sqrt(jnp.maximum(deg, 1e-12)), 0.0)
    norm = dinv[src] * edge_weight * dinv[dst]
    a_norm = jnp.zeros((num_pad, num_pad), jnp.float32).at[dst, src].add(norm)
    return a_norm.astype(jnp.bfloat16)


# -------------------------------- parameters ----------------------------------

def _init_linear(key, in_dim, out_dim):
    k1, k2 = jax.random.split(key)
    bound = 1.0 / np.sqrt(in_dim)
    w = jax.random.uniform(k1, (out_dim, in_dim), jnp.float32, -bound, bound)
    b = jax.random.uniform(k2, (out_dim,), jnp.float32, -bound, bound)
    return w, b


def _glorot(key, shape):
    fan_in, fan_out = shape[-1], shape[0]
    s = float(np.sqrt(6.0 / (fan_in + fan_out)))
    return jax.random.uniform(key, shape, jnp.float32, -s, s)


def _block_diag_att(att):
    """att: [heads, D] -> [heads*D, heads] block-diagonal matrix so that
    xp @ bd gives per-head attention coefficients via one MXU matmul."""
    heads, d = att.shape
    bd = jnp.zeros((heads * d, heads), jnp.float32)
    for h in range(heads):
        bd = bd.at[h * d:(h + 1) * d, h].set(att[h])
    return bd


def init_nas_pubmed(key, features_num, num_class, num_layers=2, hidden=64,
                    edge_num=1000):
    hidden_dim = max(hidden, num_class * 2)
    his_dim, cur_dim, output_dim = features_num, features_num, hidden_dim
    heads = 8 if edge_num < 1400000 else 1
    cells = []
    for _ in range(num_layers):
        key, k0, k1, k2, k3, k4, k5, k6 = jax.random.split(key, 8)
        wh, bh = _init_linear(k0, his_dim, hidden_dim)       # preprocessor_h
        wx, bx = _init_linear(k1, cur_dim, hidden_dim)       # preprocessor_x
        arma_wi = _glorot(k2, (hidden_dim, output_dim))      # ARMA init_weight
        arma_wr = _glorot(k3, (hidden_dim, output_dim))      # ARMA root_weight
        gat_w = _glorot(k4, (heads * output_dim, hidden_dim))
        att_src = _glorot(k5, (heads, output_dim))
        att_dst = _glorot(k6, (heads, output_dim))
        cells.append(dict(
            # pre-transposed / pre-packed once at init (no per-call w.T)
            whT=wh.T, bh=bh.reshape(1, -1),
            wxT=wx.T, bx=bx.reshape(1, -1),
            wir=jnp.concatenate([arma_wi, arma_wr], axis=1),
            armab=jnp.zeros((1, output_dim), jnp.float32),
            wgT=gat_w.T,
            # fused [att_dst | att_src] block-diagonal matrix -> one matmul
            att_bd=jnp.concatenate(
                [_block_diag_att(att_dst), _block_diag_att(att_src)], axis=1),
            gatb=jnp.zeros((1, heads * output_dim), jnp.float32),
            heads=heads, out_dim=output_dim,
        ))
        his_dim, cur_dim = cur_dim, output_dim * (1 + heads)
    key, kc = jax.random.split(key)
    clf_w, clf_b = _init_linear(kc, cur_dim, num_class)
    return dict(cells=cells, clf_wT=clf_w.T, clf_b=clf_b.reshape(1, -1))


# ---------------------------------- forward -----------------------------------

def nas_pubmed_forward(x, edge_index, edge_weight, params, *, tm=512, tk=256):
    # tm=512 amortizes per-i-tile reloads of the xp/hp stream; tk=256 fills
    # the 256-deep MXU on v6e/v7x (tk=128 already fills it on v5e).  At real
    # Pubmed scale keep n_pad/tm >= 2 so the i axis shards across v7x's 2 TCs.
    n = x.shape[0]
    tile = int(np.lcm(tm, tk))
    n_pad = ((n + tile - 1) // tile) * tile
    a_norm = build_gcn_norm_adj(edge_index, edge_weight, n, n_pad)
    if n_pad != n:
        x = jnp.pad(x, ((0, n_pad - n), (0, 0)))
    # F.dropout(p=0.5) is identity in eval mode.
    h = x
    num_cells = len(params["cells"])
    for ci, c in enumerate(params["cells"]):
        out_dim, heads = c["out_dim"], c["heads"]
        xphp, rootatt = pallas_cell_project(h, x, c, tm=tm)
        rootb_adst = rootatt[:, :out_dim + heads]
        asrcT = rootatt[:, out_dim + heads:].T
        last = ci == num_cells - 1
        clf = (params["clf_wT"], params["clf_b"]) if last else None
        out = pallas_cell_aggregate(
            a_norm, xphp, rootb_adst, asrcT, c["gatb"], clf,
            heads=heads, out_dim=out_dim, tm=tm, tk=tk)
        if last:
            return out[:n]          # fused classifier already applied
        h, x = x, out               # (his, o5) of the PyTorch cell (bf16)


if __name__ == "__main__":
    N = 200              # real node count (padded to 512 internally)
    features_num = 32
    num_class = 8
    hidden = 32          # hidden_dim = max(32, 16) = 32, output_dim = 32
    num_layers = 2

    key = jax.random.PRNGKey(0)
    kx, kw, kp = jax.random.split(key, 3)

    # Small deterministic graph: bidirectional ring + a few chords.
    src_np = np.concatenate([np.arange(N), (np.arange(N) + 1) % N,
                             np.arange(0, N, 4)])
    dst_np = np.concatenate([(np.arange(N) + 1) % N, np.arange(N),
                             (np.arange(0, N, 4) + 5) % N])
    edge_index = jnp.asarray(np.stack([src_np, dst_np]), jnp.int32)
    num_edges = int(edge_index.shape[1])
    edge_weight = jax.random.uniform(kw, (num_edges,), jnp.float32, 0.5, 1.5)

    x = jax.random.normal(kx, (N, features_num), jnp.float32)

    params = init_nas_pubmed(kp, features_num, num_class,
                             num_layers=num_layers, hidden=hidden,
                             edge_num=num_edges)

    out = nas_pubmed_forward(x, edge_index, edge_weight, params,
                             tm=512, tk=256)
    out = jax.block_until_ready(out)
    assert out.shape == (N, num_class)
    assert bool(jnp.all(jnp.isfinite(out)))
    print("KERNEL_OK")
</pallas_src>

<mosaic_0001>
module attributes {stable_mosaic.version = 11 : i64} {
  func.func @_cell_project_kernel(%arg0: i32, %arg1: memref<512x32xf32, #tpu.memory_space<vmem>>, %arg2: memref<512x32xf32, #tpu.memory_space<vmem>>, %arg3: memref<32x32xf32, #tpu.memory_space<vmem>>, %arg4: memref<1x32xf32, #tpu.memory_space<vmem>>, %arg5: memref<32x32xf32, #tpu.memory_space<vmem>>, %arg6: memref<1x32xf32, #tpu.memory_space<vmem>>, %arg7: memref<32x64xf32, #tpu.memory_space<vmem>>, %arg8: memref<1x32xf32, #tpu.memory_space<vmem>>, %arg9: memref<32x256xf32, #tpu.memory_space<vmem>>, %arg10: memref<256x16xf32, #tpu.memory_space<vmem>>, %arg11: memref<512x288xbf16, #tpu.memory_space<vmem>>, %arg12: memref<512x48xf32, #tpu.memory_space<vmem>>) attributes {dimension_semantics = [#tpu.dimension_semantics<parallel>], iteration_bounds = array<i64: 1>, scalar_prefetch = 0 : i64, scratch_operands = 0 : i64, tpu.core_type = #tpu.core_type<tc>, window_params = [{transform_indices = @transform_0, window_bounds = array<i64: 512, 32>}, {transform_indices = @transform_1, window_bounds = array<i64: 512, 32>}, {pipeline_mode = #tpu.pipeline_mode<synchronous>, transform_indices = @transform_2, window_bounds = array<i64: 32, 32>}, {pipeline_mode = #tpu.pipeline_mode<synchronous>, transform_indices = @transform_3, window_bounds = array<i64: 1, 32>}, {pipeline_mode = #tpu.pipeline_mode<synchronous>, transform_indices = @transform_4, window_bounds = array<i64: 32, 32>}, {pipeline_mode = #tpu.pipeline_mode<synchronous>, transform_indices = @transform_5, window_bounds = array<i64: 1, 32>}, {pipeline_mode = #tpu.pipeline_mode<synchronous>, transform_indices = @transform_6, window_bounds = array<i64: 32, 64>}, {pipeline_mode = #tpu.pipeline_mode<synchronous>, transform_indices = @transform_7, window_bounds = array<i64: 1, 32>}, {pipeline_mode = #tpu.pipeline_mode<synchronous>, transform_indices = @transform_8, window_bounds = array<i64: 32, 256>}, {pipeline_mode = #tpu.pipeline_mode<synchronous>, transform_indices = @transform_9, window_bounds = array<i64: 256, 16>}, {transform_indices = @transform_10, window_bounds = array<i64: 512, 288>}, {transform_indices = @transform_11, window_bounds = array<i64: 512, 48>}]} {
    %c0 = arith.constant 0 : index
    %c0_0 = arith.constant 0 : index
    %0 = vector.load %arg1[%c0, %c0_0] : memref<512x32xf32, #tpu.memory_space<vmem>>, vector<512x32xf32>
    %c0_1 = arith.constant 0 : index
    %c0_2 = arith.constant 0 : index
    %1 = vector.load %arg3[%c0_1, %c0_2] : memref<32x32xf32, #tpu.memory_space<vmem>>, vector<32x32xf32>
    %cst = arith.constant dense<0.000000e+00> : vector<512x32xf32>
    %2 = tpu.matmul %0, %1, %cst {dimension_numbers = #tpu.dot_dimension_numbers<[1], [0], [0], [1], [0, 0, 1, 1], [], []>} : vector<512x32xf32>, vector<32x32xf32>, vector<512x32xf32> -> vector<512x32xf32>
    %c0_3 = arith.constant 0 : index
    %c0_4 = arith.constant 0 : index
    %3 = vector.load %arg4[%c0_3, %c0_4] : memref<1x32xf32, #tpu.memory_space<vmem>>, vector<1x32xf32>
    %4 = vector.broadcast %3 : vector<1x32xf32> to vector<512x32xf32>
    %5 = arith.addf %2, %4 : vector<512x32xf32>
    %c0_5 = arith.constant 0 : index
    %c0_6 = arith.constant 0 : index
    %6 = vector.load %arg2[%c0_5, %c0_6] : memref<512x32xf32, #tpu.memory_space<vmem>>, vector<512x32xf32>
    %c0_7 = arith.constant 0 : index
    %c0_8 = arith.constant 0 : index
    %7 = vector.load %arg5[%c0_7, %c0_8] : memref<32x32xf32, #tpu.memory_space<vmem>>, vector<32x32xf32>
    %cst_9 = arith.constant dense<0.000000e+00> : vector<512x32xf32>
    %8 = tpu.matmul %6, %7, %cst_9 {dimension_numbers = #tpu.dot_dimension_numbers<[1], [0], [0], [1], [0, 0, 1, 1], [], []>} : vector<512x32xf32>, vector<32x32xf32>, vector<512x32xf32> -> vector<512x32xf32>
    %c0_10 = arith.constant 0 : index
    %c0_11 = arith.constant 0 : index
    %9 = vector.load %arg6[%c0_10, %c0_11] : memref<1x32xf32, #tpu.memory_space<vmem>>, vector<1x32xf32>
    %10 = vector.broadcast %9 : vector<1x32xf32> to vector<512x32xf32>
    %11 = arith.addf %8, %10 : vector<512x32xf32>
    %c0_12 = arith.constant 0 : index
    %c0_13 = arith.constant 0 : index
    %12 = vector.load %arg7[%c0_12, %c0_13] : memref<32x64xf32, #tpu.memory_space<vmem>>, vector<32x64xf32>
    %cst_14 = arith.constant dense<0.000000e+00> : vector<512x64xf32>
    %13 = tpu.matmul %5, %12, %cst_14 {dimension_numbers = #tpu.dot_dimension_numbers<[1], [0], [0], [1], [0, 0, 1, 1], [], []>} : vector<512x32xf32>, vector<32x64xf32>, vector<512x64xf32> -> vector<512x64xf32>
    %c0_15 = arith.constant 0 : index
    %c0_16 = arith.constant 0 : index
    %14 = vector.load %arg9[%c0_15, %c0_16] : memref<32x256xf32, #tpu.memory_space<vmem>>, vector<32x256xf32>
    %cst_17 = arith.constant dense<0.000000e+00> : vector<512x256xf32>
    %15 = tpu.matmul %11, %14, %cst_17 {dimension_numbers = #tpu.dot_dimension_numbers<[1], [0], [0], [1], [0, 0, 1, 1], [], []>} : vector<512x32xf32>, vector<32x256xf32>, vector<512x256xf32> -> vector<512x256xf32>
    %c0_18 = arith.constant 0 : index
    %c0_19 = arith.constant 0 : index
    %16 = vector.load %arg10[%c0_18, %c0_19] : memref<256x16xf32, #tpu.memory_space<vmem>>, vector<256x16xf32>
    %cst_20 = arith.constant dense<0.000000e+00> : vector<512x16xf32>
    %17 = tpu.matmul %15, %16, %cst_20 {dimension_numbers = #tpu.dot_dimension_numbers<[1], [0], [0], [1], [0, 0, 1, 1], [], []>} : vector<512x256xf32>, vector<256x16xf32>, vector<512x16xf32> -> vector<512x16xf32>
    %18 = vector.extract_strided_slice %13 {offsets = [0, 0], sizes = [512, 32], strides = [1, 1]} : vector<512x64xf32> to vector<512x32xf32>
    %19 = tpu.concatenate %15, %18 in 1 : vector<512x256xf32>, vector<512x32xf32> -> vector<512x288xf32>
    %20 = arith.truncf %19 : vector<512x288xf32> to vector<512x288xbf16>
    %c0_21 = arith.constant 0 : index
    %c0_22 = arith.constant 0 : index
    %21 = vector.load %arg11[%c0_21, %c0_22] : memref<512x288xbf16, #tpu.memory_space<vmem>>, vector<512x288xbf16>
    tpu.vector_store %arg11[%c0_21, %c0_22], %20 {strides = array<i32>} : memref<512x288xbf16, #tpu.memory_space<vmem>>, vector<512x288xbf16>,
    %22 = vector.extract_strided_slice %13 {offsets = [0, 32], sizes = [512, 32], strides = [1, 1]} : vector<512x64xf32> to vector<512x32xf32>
    %c0_23 = arith.constant 0 : index
    %c0_24 = arith.constant 0 : index
    %23 = vector.load %arg8[%c0_23, %c0_24] : memref<1x32xf32, #tpu.memory_space<vmem>>, vector<1x32xf32>
    %24 = vector.broadcast %23 : vector<1x32xf32> to vector<512x32xf32>
    %25 = arith.addf %22, %24 : vector<512x32xf32>
    %26 = tpu.concatenate %25, %17 in 1 : vector<512x32xf32>, vector<512x16xf32> -> vector<512x48xf32>
    %c0_25 = arith.constant 0 : index
    %c0_26 = arith.constant 0 : index
    %27 = vector.load %arg12[%c0_25, %c0_26] : memref<512x48xf32, #tpu.memory_space<vmem>>, vector<512x48xf32>
    tpu.vector_store %arg12[%c0_25, %c0_26], %26 {strides = array<i32>} : memref<512x48xf32, #tpu.memory_space<vmem>>, vector<512x48xf32>,
    return
  }
  func.func @transform_0(%arg0: i32) -> (i32, i32) {
    %c0_i32 = arith.constant 0 : i32
    %c0_i32_0 = arith.constant 0 : i32
    return %arg0, %c0_i32 : i32, i32
  }
  func.func @transform_1(%arg0: i32) -> (i32, i32) {
    %c0_i32 = arith.constant 0 : i32
    %c0_i32_0 = arith.constant 0 : i32
    return %arg0, %c0_i32 : i32, i32
  }
  func.func @transform_2(%arg0: i32) -> (i32, i32) {
    %c0_i32 = arith.constant 0 : i32
    %c0_i32_0 = arith.constant 0 : i32
    %c0_i32_1 = arith.constant 0 : i32
    return %c0_i32, %c0_i32_0 : i32, i32
  }
  func.func @transform_3(%arg0: i32) -> (i32, i32) {
    %c0_i32 = arith.constant 0 : i32
    %c0_i32_0 = arith.constant 0 : i32
    %c0_i32_1 = arith.constant 0 : i32
    return %c0_i32, %c0_i32_0 : i32, i32
  }
  func.func @transform_4(%arg0: i32) -> (i32, i32) {
    %c0_i32 = arith.constant 0 : i32
    %c0_i32_0 = arith.constant 0 : i32
    %c0_i32_1 = arith.constant 0 : i32
    return %c0_i32, %c0_i32_0 : i32, i32
  }
  func.func @transform_5(%arg0: i32) -> (i32, i32) {
    %c0_i32 = arith.constant 0 : i32
    %c0_i32_0 = arith.constant 0 : i32
    %c0_i32_1 = arith.constant 0 : i32
    return %c0_i32, %c0_i32_0 : i32, i32
  }
  func.func @transform_6(%arg0: i32) -> (i32, i32) {
    %c0_i32 = arith.constant 0 : i32
    %c0_i32_0 = arith.constant 0 : i32
    %c0_i32_1 = arith.constant 0 : i32
    return %c0_i32, %c0_i32_0 : i32, i32
  }
  func.func @transform_7(%arg0: i32) -> (i32, i32) {
    %c0_i32 = arith.constant 0 : i32
    %c0_i32_0 = arith.constant 0 : i32
    %c0_i32_1 = arith.constant 0 : i32
    return %c0_i32, %c0_i32_0 : i32, i32
  }
  func.func @transform_8(%arg0: i32) -> (i32, i32) {
    %c0_i32 = arith.constant 0 : i32
    %c0_i32_0 = arith.constant 0 : i32
    %c0_i32_1 = arith.constant 0 : i32
    return %c0_i32, %c0_i32_0 : i32, i32
  }
  func.func @transform_9(%arg0: i32) -> (i32, i32) {
    %c0_i32 = arith.constant 0 : i32
    %c0_i32_0 = arith.constant 0 : i32
    %c0_i32_1 = arith.constant 0 : i32
    return %c0_i32, %c0_i32_0 : i32, i32
  }
  func.func @transform_10(%arg0: i32) -> (i32, i32) {
    %c0_i32 = arith.constant 0 : i32
    %c0_i32_0 = arith.constant 0 : i32
    return %arg0, %c0_i32 : i32, i32
  }
  func.func @transform_11(%arg0: i32) -> (i32, i32) {
    %c0_i32 = arith.constant 0 : i32
    %c0_i32_0 = arith.constant 0 : i32
    return %arg0, %c0_i32 : i32, i32
  }
}

</mosaic_0001>

<llo_original>
// kernel: tpu_custom_call.1
$region0: #{tpu_custom_call.1}
  #allocation0 [shape = 'u32[]', space=smem, size = 0x4, offset = 0x4, fixed_abs, tag = 'smem constant byte address 0x4 - core index']
  #allocation1 [shape = 'u32[72,128]{1,0:T(1,128)}', space=vmem, size = 0x9000, scoped, tag = 'internal scratch']
  %s0 = inlined_call_operand.vmem [shape: f32[512,32], index: 0, kind: input, shape index: {}]
  %s1 = inlined_call_operand.vmem [shape: f32[512,32], index: 1, kind: input, shape index: {}]
  %s2 = inlined_call_operand.vmem [shape: f32[32,32], index: 2, kind: input, shape index: {}]
  %s3 = inlined_call_operand.vmem [shape: f32[1,32], index: 3, kind: input, shape index: {}]
  %s4 = inlined_call_operand.vmem [shape: f32[32,32], index: 4, kind: input, shape index: {}]
  %s5 = inlined_call_operand.vmem [shape: f32[1,32], index: 5, kind: input, shape index: {}]
  %s6 = inlined_call_operand.vmem [shape: f32[32,64], index: 6, kind: input, shape index: {}]
  %s7 = inlined_call_operand.vmem [shape: f32[1,32], index: 7, kind: input, shape index: {}]
  %s8 = inlined_call_operand.vmem [shape: f32[32,256], index: 8, kind: input, shape index: {}]
  %s9 = inlined_call_operand.vmem [shape: f32[256,16], index: 9, kind: input, shape index: {}]
  %s10 = inlined_call_operand.vmem [shape: bf16[512,288], index: 10, kind: output, shape index: {0}]
  %s11 = inlined_call_operand.vmem [shape: f32[512,48], index: 11, kind: output, shape index: {1}]
  %12 = xla_tuple %s10, %s11
  %s13 = sld [smem:[#allocation0]]
  $region58: #{tpu_custom_call.1} parent=0
    _
  %s15 = ssub.s32 1, %s13
  %s16 = scalar_select 0, %s15, %s13
  // Predicated region
  $region2: #{tpu_custom_call.1} parent=0 // pred_check
    _
  $region3: #{tpu_custom_call.1} parent=0 // pred_check_branch
    %18 = sbr.rel (0) target = $region5
  $region4: #{tpu_custom_call.1} parent=0 // pred_region
    _
  $region5: #{tpu_custom_call.1} parent=0 // pred_fallthru
    _
  // Predicated region
  $region6: #{tpu_custom_call.1} parent=0 // pred_check
    _
  $region7: #{tpu_custom_call.1} parent=0 // pred_check_branch
    %20 = sbr.rel (0) target = $region9
  $region8: #{tpu_custom_call.1} parent=0 // pred_region
    _
  $region9: #{tpu_custom_call.1} parent=0 // pred_fallthru
    _
  // Predicated region
  $region10: #{tpu_custom_call.1} parent=0 // pred_check
    _
  $region11: #{tpu_custom_call.1} parent=0 // pred_check_branch
    %22 = sbr.rel (0) target = $region13
  $region12: #{tpu_custom_call.1} parent=0 // pred_region
    _
  $region13: #{tpu_custom_call.1} parent=0 // pred_fallthru
    _
  // Predicated region
  $region14: #{tpu_custom_call.1} parent=0 // pred_check
    _
  $region15: #{tpu_custom_call.1} parent=0 // pred_check_branch
    %24 = sbr.rel (0) target = $region17
  $region16: #{tpu_custom_call.1} parent=0 // pred_region
    _
  $region17: #{tpu_custom_call.1} parent=0 // pred_fallthru
    _
  // Predicated region
  $region18: #{tpu_custom_call.1} parent=0 // pred_check
    _
  $region19: #{tpu_custom_call.1} parent=0 // pred_check_branch
    %26 = sbr.rel (0) target = $region21
  $region20: #{tpu_custom_call.1} parent=0 // pred_region
    _
  $region21: #{tpu_custom_call.1} parent=0 // pred_fallthru
    _
  // Predicated region
  $region22: #{tpu_custom_call.1} parent=0 // pred_check
    _
  $region23: #{tpu_custom_call.1} parent=0 // pred_check_branch
    %28 = sbr.rel (0) target = $region25
  $region24: #{tpu_custom_call.1} parent=0 // pred_region
    _
  $region25: #{tpu_custom_call.1} parent=0 // pred_fallthru
    _
  // Predicated region
  $region26: #{tpu_custom_call.1} parent=0 // pred_check
    _
  $region27: #{tpu_custom_call.1} parent=0 // pred_check_branch
    %30 = sbr.rel (0) target = $region29
  $region28: #{tpu_custom_call.1} parent=0 // pred_region
    _
  $region29: #{tpu_custom_call.1} parent=0 // pred_fallthru
    _
  // Predicated region
  $region30: #{tpu_custom_call.1} parent=0 // pred_check
    _
  $region31: #{tpu_custom_call.1} parent=0 // pred_check_branch
    %32 = sbr.rel (0) target = $region33
  $region32: #{tpu_custom_call.1} parent=0 // pred_region
    _
  $region33: #{tpu_custom_call.1} parent=0 // pred_fallthru
    _
  // Predicated region
  $region34: #{tpu_custom_call.1} parent=0 // pred_check
    _
  $region35: #{tpu_custom_call.1} parent=0 // pred_check_branch
    %34 = sbr.rel (0) target = $region37
  $region36: #{tpu_custom_call.1} parent=0 // pred_region
    _
  $region37: #{tpu_custom_call.1} parent=0 // pred_fallthru
    _
  // Predicated region
  $region38: #{tpu_custom_call.1} parent=0 // pred_check
    _
  $region39: #{tpu_custom_call.1} parent=0 // pred_check_branch
    %36 = sbr.rel (0) target = $region41
  $region40: #{tpu_custom_call.1} parent=0 // pred_region
    _
  $region41: #{tpu_custom_call.1} parent=0 // pred_fallthru
    _
  %v37 = vld [vmem:[%s0] sm:$0xff]
  %v38 = vld [vmem:[%s0 + $0x8] sm:$0xff]
  %v39 = vld [vmem:[%s0 + $0x10] sm:$0xff]
  %v40 = vld [vmem:[%s0 + $0x18] sm:$0xff]
  %v41 = vld [vmem:[%s0 + $0x20] sm:$0xff]
  %v42 = vld [vmem:[%s0 + $0x28] sm:$0xff]
  %v43 = vld [vmem:[%s0 + $0x30] sm:$0xff]
  %v44 = vld [vmem:[%s0 + $0x38] sm:$0xff]
  %v45 = vld [vmem:[%s0 + $0x40] sm:$0xff]
  %v46 = vld [vmem:[%s0 + $0x48] sm:$0xff]
  %v47 = vld [vmem:[%s0 + $0x50] sm:$0xff]
  %v48 = vld [vmem:[%s0 + $0x58] sm:$0xff]
  %v49 = vld [vmem:[%s0 + $0x60] sm:$0xff]
  %v50 = vld [vmem:[%s0 + $0x68] sm:$0xff]
  %v51 = vld [vmem:[%s0 + $0x70] sm:$0xff]
  %v52 = vld [vmem:[%s0 + $0x78] sm:$0xff]
  %v53 = vld [vmem:[%s0 + $0x80] sm:$0xff]
  %v54 = vld [vmem:[%s0 + $0x88] sm:$0xff]
  %v55 = vld [vmem:[%s0 + $0x90] sm:$0xff]
  %v56 = vld [vmem:[%s0 + $0x98] sm:$0xff]
  %v57 = vld [vmem:[%s0 + $0xa0] sm:$0xff]
  %v58 = vld [vmem:[%s0 + $0xa8] sm:$0xff]
  %v59 = vld [vmem:[%s0 + $0xb0] sm:$0xff]
  %v60 = vld [vmem:[%s0 + $0xb8] sm:$0xff]
  %v61 = vld [vmem:[%s0 + $0xc0] sm:$0xff]
  %v62 = vld [vmem:[%s0 + $0xc8] sm:$0xff]
  %v63 = vld [vmem:[%s0 + $0xd0] sm:$0xff]
  %v64 = vld [vmem:[%s0 + $0xd8] sm:$0xff]
  %v65 = vld [vmem:[%s0 + $0xe0] sm:$0xff]
  %v66 = vld [vmem:[%s0 + $0xe8] sm:$0xff]
  %v67 = vld [vmem:[%s0 + $0xf0] sm:$0xff]
  %v68 = vld [vmem:[%s0 + $0xf8] sm:$0xff]
  %v69 = vld [vmem:[%s0 + $0x100] sm:$0xff]
  %v70 = vld [vmem:[%s0 + $0x108] sm:$0xff]
  %v71 = vld [vmem:[%s0 + $0x110] sm:$0xff]
  %v72 = vld [vmem:[%s0 + $0x118] sm:$0xff]
  %v73 = vld [vmem:[%s0 + $0x120] sm:$0xff]
  %v74 = vld [vmem:[%s0 + $0x128] sm:$0xff]
  %v75 = vld [vmem:[%s0 + $0x130] sm:$0xff]
  %v76 = vld [vmem:[%s0 + $0x138] sm:$0xff]
  %v77 = vld [vmem:[%s0 + $0x140] sm:$0xff]
  %v78 = vld [vmem:[%s0 + $0x148] sm:$0xff]
  %v79 = vld [vmem:[%s0 + $0x150] sm:$0xff]
  %v80 = vld [vmem:[%s0 + $0x158] sm:$0xff]
  %v81 = vld [vmem:[%s0 + $0x160] sm:$0xff]
  %v82 = vld [vmem:[%s0 + $0x168] sm:$0xff]
  %v83 = vld [vmem:[%s0 + $0x170] sm:$0xff]
  %v84 = vld [vmem:[%s0 + $0x178] sm:$0xff]
  %v85 = vld [vmem:[%s0 + $0x180] sm:$0xff]
  %v86 = vld [vmem:[%s0 + $0x188] sm:$0xff]
  %v87 = vld [vmem:[%s0 + $0x190] sm:$0xff]
  %v88 = vld [vmem:[%s0 + $0x198] sm:$0xff]
  %v89 = vld [vmem:[%s0 + $0x1a0] sm:$0xff]
  %v90 = vld [vmem:[%s0 + $0x1a8] sm:$0xff]
  %v91 = vld [vmem:[%s0 + $0x1b0] sm:$0xff]
  %v92 = vld [vmem:[%s0 + $0x1b8] sm:$0xff]
  %v93 = vld [vmem:[%s0 + $0x1c0] sm:$0xff]
  %v94 = vld [vmem:[%s0 + $0x1c8] sm:$0xff]
  %v95 = vld [vmem:[%s0 + $0x1d0] sm:$0xff]
  %v96 = vld [vmem:[%s0 + $0x1d8] sm:$0xff]
  %v97 = vld [vmem:[%s0 + $0x1e0] sm:$0xff]
  %v98 = vld [vmem:[%s0 + $0x1e8] sm:$0xff]
  %v99 = vld [vmem:[%s0 + $0x1f0] sm:$0xff]
  %v100 = vld [vmem:[%s0 + $0x1f8] sm:$0xff]
  %v101 = vld [vmem:[%s2] sm:$0xff]
  %v102 = vld [vmem:[%s2 + $0x8] sm:$0xff]
  %v103 = vld [vmem:[%s2 + $0x10] sm:$0xff]
  %v104 = vld [vmem:[%s2 + $0x18] sm:$0xff]
  %v105 = vld [vmem:[%s3] sm:$0x1]
  %v107 = vperm.slane %v105, 0
  %vm109 = vcmask 261120
  %v111 = vsel %vm109, %v37, 0
  %v114 = vsel %vm109, %v38, 0
  %v117 = vsel %vm109, %v39, 0
  %v120 = vsel %vm109, %v40, 0
  %v123 = vsel %vm109, %v41, 0
  %v126 = vsel %vm109, %v42, 0
  %v129 = vsel %vm109, %v43, 0
  %v132 = vsel %vm109, %v44, 0
  %v135 = vsel %vm109, %v45, 0
  %v138 = vsel %vm109, %v46, 0
  %v141 = vsel %vm109, %v47, 0
  %v144 = vsel %vm109, %v48, 0
  %v147 = vsel %vm109, %v49, 0
  %v150 = vsel %vm109, %v50, 0
  %v153 = vsel %vm109, %v51, 0
  %v156 = vsel %vm109, %v52, 0
  %v159 = vsel %vm109, %v53, 0
  %v162 = vsel %vm109, %v54, 0
  %v165 = vsel %vm109, %v55, 0
  %v168 = vsel %vm109, %v56, 0
  %v171 = vsel %vm109, %v57, 0
  %v174 = vsel %vm109, %v58, 0
  %v177 = vsel %vm109, %v59, 0
  %v180 = vsel %vm109, %v60, 0
  %v183 = vsel %vm109, %v61, 0
  %v186 = vsel %vm109, %v62, 0
  %v189 = vsel %vm109, %v63, 0
  %v192 = vsel %vm109, %v64, 0
  %v195 = vsel %vm109, %v65, 0
  %v198 = vsel %vm109, %v66, 0
  %v201 = vsel %vm109, %v67, 0
  %v204 = vsel %vm109, %v68, 0
  %v207 = vsel %vm109, %v69, 0
  %v210 = vsel %vm109, %v70, 0
  %v213 = vsel %vm109, %v71, 0
  %v216 = vsel %vm109, %v72, 0
  %v219 = vsel %vm109, %v73, 0
  %v222 = vsel %vm109, %v74, 0
  %v225 = vsel %vm109, %v75, 0
  %v228 = vsel %vm109, %v76, 0
  %v231 = vsel %vm109, %v77, 0
  %v234 = vsel %vm109, %v78, 0
  %v237 = vsel %vm109, %v79, 0
  %v240 = vsel %vm109, %v80, 0
  %v243 = vsel %vm109, %v81, 0
  %v246 = vsel %vm109, %v82, 0
  %v249 = vsel %vm109, %v83, 0
  %v252 = vsel %vm109, %v84, 0
  %v255 = vsel %vm109, %v85, 0
  %v258 = vsel %vm109, %v86, 0
  %v261 = vsel %vm109, %v87, 0
  %v264 = vsel %vm109, %v88, 0
  %v267 = vsel %vm109, %v89, 0
  %v270 = vsel %vm109, %v90, 0
  %v273 = vsel %vm109, %v91, 0
  %v276 = vsel %vm109, %v92, 0
  %v279 = vsel %vm109, %v93, 0
  %v282 = vsel %vm109, %v94, 0
  %v285 = vsel %vm109, %v95, 0
  %v288 = vsel %vm109, %v96, 0
  %v291 = vsel %vm109, %v97, 0
  %v294 = vsel %vm109, %v98, 0
  %v297 = vsel %vm109, %v99, 0
  %v300 = vsel %vm109, %v100, 0
  %302 = vmatpush.msra.mxu0 0.0
  %303 = vmatpush.msra.mxu0 0.0
  %304 = vmatpush.msra.mxu0 0.0
  %305 = vmatpush.msra.mxu0 0.0
  %306 = vmatpush.msra.mxu0 0.0
  %307 = vmatpush.msra.mxu0 0.0
  %308 = vmatpush.msra.mxu0 0.0
  %309 = vmatpush.msra.mxu0 0.0
  %310 = vmatpush.msra.mxu0 0.0
  %311 = vmatpush.msra.mxu0 0.0
  %312 = vmatpush.msra.mxu0 0.0
  %313 = vmatpush.msra.mxu0 0.0
  %314 = vmatpush.msra.mxu0 %v104
  %315 = vmatpush.msra.mxu0 %v103
  %316 = vmatpush.msra.mxu0 %v102
  %317 = vmatpush.msra.mxu0 %v101
  %318 = vmatmul.f32.gmra.mxu0 %v111
  %v319 = vpop.f32.mrf.mxu0
  %v320 = vadd.f32 %v107, %v319
  %321 = vmatmul.f32.gmra.mxu0 %v114
  %v322 = vpop.f32.mrf.mxu0
  %v323 = vadd.f32 %v107, %v322
  %324 = vmatmul.f32.gmra.mxu0 %v117
  %v325 = vpop.f32.mrf.mxu0
  %v326 = vadd.f32 %v107, %v325
  %327 = vmatmul.f32.gmra.mxu0 %v120
  %v328 = vpop.f32.mrf.mxu0
  %v329 = vadd.f32 %v107, %v328
  %330 = vmatmul.f32.gmra.mxu0 %v123
  %v331 = vpop.f32.mrf.mxu0
  %v332 = vadd.f32 %v107, %v331
  %333 = vmatmul.f32.gmra.mxu0 %v126
  %v334 = vpop.f32.mrf.mxu0
  %v335 = vadd.f32 %v107, %v334
  %336 = vmatmul.f32.gmra.mxu0 %v129
  %v337 = vpop.f32.mrf.mxu0
  %v338 = vadd.f32 %v107, %v337
  %339 = vmatmul.f32.gmra.mxu0 %v132
  %v340 = vpop.f32.mrf.mxu0
  %v341 = vadd.f32 %v107, %v340
  %342 = vmatmul.f32.gmra.mxu0 %v135
  %v343 = vpop.f32.mrf.mxu0
  %v344 = vadd.f32 %v107, %v343
  %345 = vmatmul.f32.gmra.mxu0 %v138
  %v346 = vpop.f32.mrf.mxu0
  %v347 = vadd.f32 %v107, %v346
  %348 = vmatmul.f32.gmra.mxu0 %v141
  %v349 = vpop.f32.mrf.mxu0
  %v350 = vadd.f32 %v107, %v349
  %351 = vmatmul.f32.gmra.mxu0 %v144
  %v352 = vpop.f32.mrf.mxu0
  %v353 = vadd.f32 %v107, %v352
  %354 = vmatmul.f32.gmra.mxu0 %v147
  %v355 = vpop.f32.mrf.mxu0
  %v356 = vadd.f32 %v107, %v355
  %357 = vmatmul.f32.gmra.mxu0 %v150
  %v358 = vpop.f32.mrf.mxu0
  %v359 = vadd.f32 %v107, %v358
  %360 = vmatmul.f32.gmra.mxu0 %v153
  %v361 = vpop.f32.mrf.mxu0
  %v362 = vadd.f32 %v107, %v361
  %363 = vmatmul.f32.gmra.mxu0 %v156
  %v364 = vpop.f32.mrf.mxu0
  %v365 = vadd.f32 %v107, %v364
  %366 = vmatmul.f32.gmra.mxu0 %v159
  %v367 = vpop.f32.mrf.mxu0
  %v368 = vadd.f32 %v107, %v367
  %369 = vmatmul.f32.gmra.mxu0 %v162
  %v370 = vpop.f32.mrf.mxu0
  %v371 = vadd.f32 %v107, %v370
  %372 = vmatmul.f32.gmra.mxu0 %v165
  %v373 = vpop.f32.mrf.mxu0
  %v374 = vadd.f32 %v107, %v373
  %375 = vmatmul.f32.gmra.mxu0 %v168
  %v376 = vpop.f32.mrf.mxu0
  %v377 = vadd.f32 %v107, %v376
  %378 = vmatmul.f32.gmra.mxu0 %v171
  %v379 = vpop.f32.mrf.mxu0
  %v380 = vadd.f32 %v107, %v379
  %381 = vmatmul.f32.gmra.mxu0 %v174
  %v382 = vpop.f32.mrf.mxu0
  %v383 = vadd.f32 %v107, %v382
  %384 = vmatmul.f32.gmra.mxu0 %v177
  %v385 = vpop.f32.mrf.mxu0
  %v386 = vadd.f32 %v107, %v385
  %387 = vmatmul.f32.gmra.mxu0 %v180
  %v388 = vpop.f32.mrf.mxu0
  %v389 = vadd.f32 %v107, %v388
  %390 = vmatmul.f32.gmra.mxu0 %v183
  %v391 = vpop.f32.mrf.mxu0
  %v392 = vadd.f32 %v107, %v391
  %393 = vmatmul.f32.gmra.mxu0 %v186
  %v394 = vpop.f32.mrf.mxu0
  %v395 = vadd.f32 %v107, %v394
  %396 = vmatmul.f32.gmra.mxu0 %v189
  %v397 = vpop.f32.mrf.mxu0
  %v398 = vadd.f32 %v107, %v397
  %399 = vmatmul.f32.gmra.mxu0 %v192
  %v400 = vpop.f32.mrf.mxu0
  %v401 = vadd.f32 %v107, %v400
  %402 = vmatmul.f32.gmra.mxu0 %v195
  %v403 = vpop.f32.mrf.mxu0
  %v404 = vadd.f32 %v107, %v403
  %405 = vmatmul.f32.gmra.mxu0 %v198
  %v406 = vpop.f32.mrf.mxu0
  %v407 = vadd.f32 %v107, %v406
  %408 = vmatmul.f32.gmra.mxu0 %v201
  %v409 = vpop.f32.mrf.mxu0
  %v410 = vadd.f32 %v107, %v409
  %411 = vmatmul.f32.gmra.mxu0 %v204
  %v412 = vpop.f32.mrf.mxu0
  %v413 = vadd.f32 %v107, %v412
  %414 = vmatmul.f32.gmra.mxu0 %v207
  %v415 = vpop.f32.mrf.mxu0
  %v416 = vadd.f32 %v107, %v415
  %417 = vmatmul.f32.gmra.mxu0 %v210
  %v418 = vpop.f32.mrf.mxu0
  %v419 = vadd.f32 %v107, %v418
  %420 = vmatmul.f32.gmra.mxu0 %v213
  %v421 = vpop.f32.mrf.mxu0
  %v422 = vadd.f32 %v107, %v421
  %423 = vmatmul.f32.gmra.mxu0 %v216
  %v424 = vpop.f32.mrf.mxu0
  %v425 = vadd.f32 %v107, %v424
  %426 = vmatmul.f32.gmra.mxu0 %v219
  %v427 = vpop.f32.mrf.mxu0
  %v428 = vadd.f32 %v107, %v427
  %429 = vmatmul.f32.gmra.mxu0 %v222
  %v430 = vpop.f32.mrf.mxu0
  %v431 = vadd.f32 %v107, %v430
  %432 = vmatmul.f32.gmra.mxu0 %v225
  %v433 = vpop.f32.mrf.mxu0
  %v434 = vadd.f32 %v107, %v433
  %435 = vmatmul.f32.gmra.mxu0 %v228
  %v436 = vpop.f32.mrf.mxu0
  %v437 = vadd.f32 %v107, %v436
  %438 = vmatmul.f32.gmra.mxu0 %v231
  %v439 = vpop.f32.mrf.mxu0
  %v440 = vadd.f32 %v107, %v439
  %441 = vmatmul.f32.gmra.mxu0 %v234
  %v442 = vpop.f32.mrf.mxu0
  %v443 = vadd.f32 %v107, %v442
  %444 = vmatmul.f32.gmra.mxu0 %v237
  %v445 = vpop.f32.mrf.mxu0
  %v446 = vadd.f32 %v107, %v445
  %447 = vmatmul.f32.gmra.mxu0 %v240
  %v448 = vpop.f32.mrf.mxu0
  %v449 = vadd.f32 %v107, %v448
  %450 = vmatmul.f32.gmra.mxu0 %v243
  %v451 = vpop.f32.mrf.mxu0
  %v452 = vadd.f32 %v107, %v451
  %453 = vmatmul.f32.gmra.mxu0 %v246
  %v454 = vpop.f32.mrf.mxu0
  %v455 = vadd.f32 %v107, %v454
  %456 = vmatmul.f32.gmra.mxu0 %v249
  %v457 = vpop.f32.mrf.mxu0
  %v458 = vadd.f32 %v107, %v457
  %459 = vmatmul.f32.gmra.mxu0 %v252
  %v460 = vpop.f32.mrf.mxu0
  %v461 = vadd.f32 %v107, %v460
  %462 = vmatmul.f32.gmra.mxu0 %v255
  %v463 = vpop.f32.mrf.mxu0
  %v464 = vadd.f32 %v107, %v463
  %465 = vmatmul.f32.gmra.mxu0 %v258
  %v466 = vpop.f32.mrf.mxu0
  %v467 = vadd.f32 %v107, %v466
  %468 = vmatmul.f32.gmra.mxu0 %v261
  %v469 = vpop.f32.mrf.mxu0
  %v470 = vadd.f32 %v107, %v469
  %471 = vmatmul.f32.gmra.mxu0 %v264
  %v472 = vpop.f32.mrf.mxu0
  %v473 = vadd.f32 %v107, %v472
  %474 = vmatmul.f32.gmra.mxu0 %v267
  %v475 = vpop.f32.mrf.mxu0
  %v476 = vadd.f32 %v107, %v475
  %477 = vmatmul.f32.gmra.mxu0 %v270
  %v478 = vpop.f32.mrf.mxu0
  %v479 = vadd.f32 %v107, %v478
  %480 = vmatmul.f32.gmra.mxu0 %v273
  %v481 = vpop.f32.mrf.mxu0
  %v482 = vadd.f32 %v107, %v481
  %483 = vmatmul.f32.gmra.mxu0 %v276
  %v484 = vpop.f32.mrf.mxu0
  %v485 = vadd.f32 %v107, %v484
  %486 = vmatmul.f32.gmra.mxu0 %v279
  %v487 = vpop.f32.mrf.mxu0
  %v488 = vadd.f32 %v107, %v487
  %489 = vmatmul.f32.gmra.mxu0 %v282
  %v490 = vpop.f32.mrf.mxu0
  %v491 = vadd.f32 %v107, %v490
  %492 = vmatmul.f32.gmra.mxu0 %v285
  %v493 = vpop.f32.mrf.mxu0
  %v494 = vadd.f32 %v107, %v493
  %495 = vmatmul.f32.gmra.mxu0 %v288
  %v496 = vpop.f32.mrf.mxu0
  %v497 = vadd.f32 %v107, %v496
  %498 = vmatmul.f32.gmra.mxu0 %v291
  %v499 = vpop.f32.mrf.mxu0
  %v500 = vadd.f32 %v107, %v499
  %501 = vmatmul.f32.gmra.mxu0 %v294
  %v502 = vpop.f32.mrf.mxu0
  %v503 = vadd.f32 %v107, %v502
  %504 = vmatmul.f32.gmra.mxu0 %v297
  %v505 = vpop.f32.mrf.mxu0
  %v506 = vadd.f32 %v107, %v505
  %507 = vmatmul.f32.gmra.mxu0 %v300
  %v508 = vpop.f32.mrf.mxu0
  %v509 = vadd.f32 %v107, %v508
  %510 = vdwg.mxu0
  %v511 = vld [vmem:[%s1] sm:$0xff]
  %v512 = vld [vmem:[%s1 + $0x8] sm:$0xff]
  %v513 = vld [vmem:[%s1 + $0x10] sm:$0xff]
  %v514 = vld [vmem:[%s1 + $0x18] sm:$0xff]
  %v515 = vld [vmem:[%s1 + $0x20] sm:$0xff]
  %v516 = vld [vmem:[%s1 + $0x28] sm:$0xff]
  %v517 = vld [vmem:[%s1 + $0x30] sm:$0xff]
  %v518 = vld [vmem:[%s1 + $0x38] sm:$0xff]
  %v519 = vld [vmem:[%s1 + $0x40] sm:$0xff]
  %v520 = vld [vmem:[%s1 + $0x48] sm:$0xff]
  %v521 = vld [vmem:[%s1 + $0x50] sm:$0xff]
  %v522 = vld [vmem:[%s1 + $0x58] sm:$0xff]
  %v523 = vld [vmem:[%s1 + $0x60] sm:$0xff]
  %v524 = vld [vmem:[%s1 + $0x68] sm:$0xff]
  %v525 = vld [vmem:[%s1 + $0x70] sm:$0xff]
  %v526 = vld [vmem:[%s1 + $0x78] sm:$0xff]
  %v527 = vld [vmem:[%s1 + $0x80] sm:$0xff]
  %v528 = vld [vmem:[%s1 + $0x88] sm:$0xff]
  %v529 = vld [vmem:[%s1 + $0x90] sm:$0xff]
  %v530 = vld [vmem:[%s1 + $0x98] sm:$0xff]
  %v531 = vld [vmem:[%s1 + $0xa0] sm:$0xff]
  %v532 = vld [vmem:[%s1 + $0xa8] sm:$0xff]
  %v533 = vld [vmem:[%s1 + $0xb0] sm:$0xff]
  %v534 = vld [vmem:[%s1 + $0xb8] sm:$0xff]
  %v535 = vld [vmem:[%s1 + $0xc0] sm:$0xff]
  %v536 = vld [vmem:[%s1 + $0xc8] sm:$0xff]
  %v537 = vld [vmem:[%s1 + $0xd0] sm:$0xff]
  %v538 = vld [vmem:[%s1 + $0xd8] sm:$0xff]
  %v539 = vld [vmem:[%s1 + $0xe0] sm:$0xff]
  %v540 = vld [vmem:[%s1 + $0xe8] sm:$0xff]
  %v541 = vld [vmem:[%s1 + $0xf0] sm:$0xff]
  %v542 = vld [vmem:[%s1 + $0xf8] sm:$0xff]
  %v543 = vld [vmem:[%s1 + $0x100] sm:$0xff]
  %v544 = vld [vmem:[%s1 + $0x108] sm:$0xff]
  %v545 = vld [vmem:[%s1 + $0x110] sm:$0xff]
  %v546 = vld [vmem:[%s1 + $0x118] sm:$0xff]
  %v547 = vld [vmem:[%s1 + $0x120] sm:$0xff]
  %v548 = vld [vmem:[%s1 + $0x128] sm:$0xff]
  %v549 = vld [vmem:[%s1 + $0x130] sm:$0xff]
  %v550 = vld [vmem:[%s1 + $0x138] sm:$0xff]
  %v551 = vld [vmem:[%s1 + $0x140] sm:$0xff]
  %v552 = vld [vmem:[%s1 + $0x148] sm:$0xff]
  %v553 = vld [vmem:[%s1 + $0x150] sm:$0xff]
  %v554 = vld [vmem:[%s1 + $0x158] sm:$0xff]
  %v555 = vld [vmem:[%s1 + $0x160] sm:$0xff]
  %v556 = vld [vmem:[%s1 + $0x168] sm:$0xff]
  %v557 = vld [vmem:[%s1 + $0x170] sm:$0xff]
  %v558 = vld [vmem:[%s1 + $0x178] sm:$0xff]
  %v559 = vld [vmem:[%s1 + $0x180] sm:$0xff]
  %v560 = vld [vmem:[%s1 + $0x188] sm:$0xff]
  %v561 = vld [vmem:[%s1 + $0x190] sm:$0xff]
  %v562 = vld [vmem:[%s1 + $0x198] sm:$0xff]
  %v563 = vld [vmem:[%s1 + $0x1a0] sm:$0xff]
  %v564 = vld [vmem:[%s1 + $0x1a8] sm:$0xff]
  %v565 = vld [vmem:[%s1 + $0x1b0] sm:$0xff]
  %v566 = vld [vmem:[%s1 + $0x1b8] sm:$0xff]
  %v567 = vld [vmem:[%s1 + $0x1c0] sm:$0xff]
  %v568 = vld [vmem:[%s1 + $0x1c8] sm:$0xff]
  %v569 = vld [vmem:[%s1 + $0x1d0] sm:$0xff]
  %v570 = vld [vmem:[%s1 + $0x1d8] sm:$0xff]
  %v571 = vld [vmem:[%s1 + $0x1e0] sm:$0xff]
  %v572 = vld [vmem:[%s1 + $0x1e8] sm:$0xff]
  %v573 = vld [vmem:[%s1 + $0x1f0] sm:$0xff]
  %v574 = vld [vmem:[%s1 + $0x1f8] sm:$0xff]
  %v575 = vld [vmem:[%s4] sm:$0xff]
  %v576 = vld [vmem:[%s4 + $0x8] sm:$0xff]
  %v577 = vld [vmem:[%s4 + $0x10] sm:$0xff]
  %v578 = vld [vmem:[%s4 + $0x18] sm:$0xff]
  %v579 = vld [vmem:[%s5] sm:$0x1]
  %v581 = vperm.slane %v579, 0
  %v584 = vsel %vm109, %v511, 0
  %v587 = vsel %vm109, %v512, 0
  %v590 = vsel %vm109, %v513, 0
  %v593 = vsel %vm109, %v514, 0
  %v596 = vsel %vm109, %v515, 0
  %v599 = vsel %vm109, %v516, 0
  %v602 = vsel %vm109, %v517, 0
  %v605 = vsel %vm109, %v518, 0
  %v608 = vsel %vm109, %v519, 0
  %v611 = vsel %vm109, %v520, 0
  %v614 = vsel %vm109, %v521, 0
  %v617 = vsel %vm109, %v522, 0
  %v620 = vsel %vm109, %v523, 0
  %v623 = vsel %vm109, %v524, 0
  %v626 = vsel %vm109, %v525, 0
  %v629 = vsel %vm109, %v526, 0
  %v632 = vsel %vm109, %v527, 0
  %v635 = vsel %vm109, %v528, 0
  %v638 = vsel %vm109, %v529, 0
  %v641 = vsel %vm109, %v530, 0
  %v644 = vsel %vm109, %v531, 0
  %v647 = vsel %vm109, %v532, 0
  %v650 = vsel %vm109, %v533, 0
  %v653 = vsel %vm109, %v534, 0
  %v656 = vsel %vm109, %v535, 0
  %v659 = vsel %vm109, %v536, 0
  %v662 = vsel %vm109, %v537, 0
  %v665 = vsel %vm109, %v538, 0
  %v668 = vsel %vm109, %v539, 0
  %v671 = vsel %vm109, %v540, 0
  %v674 = vsel %vm109, %v541, 0
  %v677 = vsel %vm109, %v542, 0
  %v680 = vsel %vm109, %v543, 0
  %v683 = vsel %vm109, %v544, 0
  %v686 = vsel %vm109, %v545, 0
  %v689 = vsel %vm109, %v546, 0
  %v692 = vsel %vm109, %v547, 0
  %v695 = vsel %vm109, %v548, 0
  %v698 = vsel %vm109, %v549, 0
  %v701 = vsel %vm109, %v550, 0
  %v704 = vsel %vm109, %v551, 0
  %v707 = vsel %vm109, %v552, 0
  %v710 = vsel %vm109, %v553, 0
  %v713 = vsel %vm109, %v554, 0
  %v716 = vsel %vm109, %v555, 0
  %v719 = vsel %vm109, %v556, 0
  %v722 = vsel %vm109, %v557, 0
  %v725 = vsel %vm109, %v558, 0
  %v728 = vsel %vm109, %v559, 0
  %v731 = vsel %vm109, %v560, 0
  %v734 = vsel %vm109, %v561, 0
  %v737 = vsel %vm109, %v562, 0
  %v740 = vsel %vm109, %v563, 0
  %v743 = vsel %vm109, %v564, 0
  %v746 = vsel %vm109, %v565, 0
  %v749 = vsel %vm109, %v566, 0
  %v752 = vsel %vm109, %v567, 0
  %v755 = vsel %vm109, %v568, 0
  %v758 = vsel %vm109, %v569, 0
  %v761 = vsel %vm109, %v570, 0
  %v764 = vsel %vm109, %v571, 0
  %v767 = vsel %vm109, %v572, 0
  %v770 = vsel %vm109, %v573, 0
  %v773 = vsel %vm109, %v574, 0
  %775 = vmatpush.msra.mxu0 0.0
  %776 = vmatpush.msra.mxu0 0.0
  %777 = vmatpush.msra.mxu0 0.0
  %778 = vmatpush.msra.mxu0 0.0
  %779 = vmatpush.msra.mxu0 0.0
  %780 = vmatpush.msra.mxu0 0.0
  %781 = vmatpush.msra.mxu0 0.0
  %782 = vmatpush.msra.mxu0 0.0
  %783 = vmatpush.msra.mxu0 0.0
  %784 = vmatpush.msra.mxu0 0.0
  %785 = vmatpush.msra.mxu0 0.0
  %786 = vmatpush.msra.mxu0 0.0
  %787 = vmatpush.msra.mxu0 %v578
  %788 = vmatpush.msra.mxu0 %v577
  %789 = vmatpush.msra.mxu0 %v576
  %790 = vmatpush.msra.mxu0 %v575
  %791 = vmatmul.f32.gmra.mxu0 %v584
  %v792 = vpop.f32.mrf.mxu0
  %v793 = vadd.f32 %v581, %v792
  %794 = vmatmul.f32.gmra.mxu0 %v587
  %v795 = vpop.f32.mrf.mxu0
  %v796 = vadd.f32 %v581, %v795
  %797 = vmatmul.f32.gmra.mxu0 %v590
  %v798 = vpop.f32.mrf.mxu0
  %v799 = vadd.f32 %v581, %v798
  %800 = vmatmul.f32.gmra.mxu0 %v593
  %v801 = vpop.f32.mrf.mxu0
  %v802 = vadd.f32 %v581, %v801
  %803 = vmatmul.f32.gmra.mxu0 %v596
  %v804 = vpop.f32.mrf.mxu0
  %v805 = vadd.f32 %v581, %v804
  %806 = vmatmul.f32.gmra.mxu0 %v599
  %v807 = vpop.f32.mrf.mxu0
  %v808 = vadd.f32 %v581, %v807
  %809 = vmatmul.f32.gmra.mxu0 %v602
  %v810 = vpop.f32.mrf.mxu0
  %v811 = vadd.f32 %v581, %v810
  %812 = vmatmul.f32.gmra.mxu0 %v605
  %v813 = vpop.f32.mrf.mxu0
  %v814 = vadd.f32 %v581, %v813
  %815 = vmatmul.f32.gmra.mxu0 %v608
  %v816 = vpop.f32.mrf.mxu0
  %v817 = vadd.f32 %v581, %v816
  %818 = vmatmul.f32.gmra.mxu0 %v611
  %v819 = vpop.f32.mrf.mxu0
  %v820 = vadd.f32 %v581, %v819
  %821 = vmatmul.f32.gmra.mxu0 %v614
  %v822 = vpop.f32.mrf.mxu0
  %v823 = vadd.f32 %v581, %v822
  %824 = vmatmul.f32.gmra.mxu0 %v617
  %v825 = vpop.f32.mrf.mxu0
  %v826 = vadd.f32 %v581, %v825
  %827 = vmatmul.f32.gmra.mxu0 %v620
  %v828 = vpop.f32.mrf.mxu0
  %v829 = vadd.f32 %v581, %v828
  %830 = vmatmul.f32.gmra.mxu0 %v623
  %v831 = vpop.f32.mrf.mxu0
  %v832 = vadd.f32 %v581, %v831
  %833 = vmatmul.f32.gmra.mxu0 %v626
  %v834 = vpop.f32.mrf.mxu0
  %v835 = vadd.f32 %v581, %v834
  %836 = vmatmul.f32.gmra.mxu0 %v629
  %v837 = vpop.f32.mrf.mxu0
  %v838 = vadd.f32 %v581, %v837
  %839 = vmatmul.f32.gmra.mxu0 %v632
  %v840 = vpop.f32.mrf.mxu0
  %v841 = vadd.f32 %v581, %v840
  %842 = vmatmul.f32.gmra.mxu0 %v635
  %v843 = vpop.f32.mrf.mxu0
  %v844 = vadd.f32 %v581, %v843
  %845 = vmatmul.f32.gmra.mxu0 %v638
  %v846 = vpop.f32.mrf.mxu0
  %v847 = vadd.f32 %v581, %v846
  %848 = vmatmul.f32.gmra.mxu0 %v641
  %v849 = vpop.f32.mrf.mxu0
  %v850 = vadd.f32 %v581, %v849
  %851 = vmatmul.f32.gmra.mxu0 %v644
  %v852 = vpop.f32.mrf.mxu0
  %v853 = vadd.f32 %v581, %v852
  %854 = vmatmul.f32.gmra.mxu0 %v647
  %v855 = vpop.f32.mrf.mxu0
  %v856 = vadd.f32 %v581, %v855
  %857 = vmatmul.f32.gmra.mxu0 %v650
  %v858 = vpop.f32.mrf.mxu0
  %v859 = vadd.f32 %v581, %v858
  %860 = vmatmul.f32.gmra.mxu0 %v653
  %v861 = vpop.f32.mrf.mxu0
  %v862 = vadd.f32 %v581, %v861
  %863 = vmatmul.f32.gmra.mxu0 %v656
  %v864 = vpop.f32.mrf.mxu0
  %v865 = vadd.f32 %v581, %v864
  %866 = vmatmul.f32.gmra.mxu0 %v659
  %v867 = vpop.f32.mrf.mxu0
  %v868 = vadd.f32 %v581, %v867
  %869 = vmatmul.f32.gmra.mxu0 %v662
  %v870 = vpop.f32.mrf.mxu0
  %v871 = vadd.f32 %v581, %v870
  %872 = vmatmul.f32.gmra.mxu0 %v665
  %v873 = vpop.f32.mrf.mxu0
  %v874 = vadd.f32 %v581, %v873
  %875 = vmatmul.f32.gmra.mxu0 %v668
  %v876 = vpop.f32.mrf.mxu0
  %v877 = vadd.f32 %v581, %v876
  %878 = vmatmul.f32.gmra.mxu0 %v671
  %v879 = vpop.f32.mrf.mxu0
  %v880 = vadd.f32 %v581, %v879
  %881 = vmatmul.f32.gmra.mxu0 %v674
  %v882 = vpop.f32.mrf.mxu0
  %v883 = vadd.f32 %v581, %v882
  %884 = vmatmul.f32.gmra.mxu0 %v677
  %v885 = vpop.f32.mrf.mxu0
  %v886 = vadd.f32 %v581, %v885
  %887 = vmatmul.f32.gmra.mxu0 %v680
  %v888 = vpop.f32.mrf.mxu0
  %v889 = vadd.f32 %v581, %v888
  %890 = vmatmul.f32.gmra.mxu0 %v683
  %v891 = vpop.f32.mrf.mxu0
  %v892 = vadd.f32 %v581, %v891
  %893 = vmatmul.f32.gmra.mxu0 %v686
  %v894 = vpop.f32.mrf.mxu0
  %v895 = vadd.f32 %v581, %v894
  %896 = vmatmul.f32.gmra.mxu0 %v689
  %v897 = vpop.f32.mrf.mxu0
  %v898 = vadd.f32 %v581, %v897
  %899 = vmatmul.f32.gmra.mxu0 %v692
  %v900 = vpop.f32.mrf.mxu0
  %v901 = vadd.f32 %v581, %v900
  %902 = vmatmul.f32.gmra.mxu0 %v695
  %v903 = vpop.f32.mrf.mxu0
  %v904 = vadd.f32 %v581, %v903
  %905 = vmatmul.f32.gmra.mxu0 %v698
  %v906 = vpop.f32.mrf.mxu0
  %v907 = vadd.f32 %v581, %v906
  %908 = vmatmul.f32.gmra.mxu0 %v701
  %v909 = vpop.f32.mrf.mxu0
  %v910 = vadd.f32 %v581, %v909
  %911 = vmatmul.f32.gmra.mxu0 %v704
  %v912 = vpop.f32.mrf.mxu0
  %v913 = vadd.f32 %v581, %v912
  %914 = vmatmul.f32.gmra.mxu0 %v707
  %v915 = vpop.f32.mrf.mxu0
  %v916 = vadd.f32 %v581, %v915
  %917 = vmatmul.f32.gmra.mxu0 %v710
  %v918 = vpop.f32.mrf.mxu0
  %v919 = vadd.f32 %v581, %v918
  %920 = vmatmul.f32.gmra.mxu0 %v713
  %v921 = vpop.f32.mrf.mxu0
  %v922 = vadd.f32 %v581, %v921
  %923 = vmatmul.f32.gmra.mxu0 %v716
  %v924 = vpop.f32.mrf.mxu0
  %v925 = vadd.f32 %v581, %v924
  %926 = vmatmul.f32.gmra.mxu0 %v719
  %v927 = vpop.f32.mrf.mxu0
  %v928 = vadd.f32 %v581, %v927
  %929 = vmatmul.f32.gmra.mxu0 %v722
  %v930 = vpop.f32.mrf.mxu0
  %v931 = vadd.f32 %v581, %v930
  %932 = vmatmul.f32.gmra.mxu0 %v725
  %v933 = vpop.f32.mrf.mxu0
  %v934 = vadd.f32 %v581, %v933
  %935 = vmatmul.f32.gmra.mxu0 %v728
  %v936 = vpop.f32.mrf.mxu0
  %v937 = vadd.f32 %v581, %v936
  %938 = vmatmul.f32.gmra.mxu0 %v731
  %v939 = vpop.f32.mrf.mxu0
  %v940 = vadd.f32 %v581, %v939
  %941 = vmatmul.f32.gmra.mxu0 %v734
  %v942 = vpop.f32.mrf.mxu0
  %v943 = vadd.f32 %v581, %v942
  %944 = vmatmul.f32.gmra.mxu0 %v737
  %v945 = vpop.f32.mrf.mxu0
  %v946 = vadd.f32 %v581, %v945
  %947 = vmatmul.f32.gmra.mxu0 %v740
  %v948 = vpop.f32.mrf.mxu0
  %v949 = vadd.f32 %v581, %v948
  %950 = vmatmul.f32.gmra.mxu0 %v743
  %v951 = vpop.f32.mrf.mxu0
  %v952 = vadd.f32 %v581, %v951
  %953 = vmatmul.f32.gmra.mxu0 %v746
  %v954 = vpop.f32.mrf.mxu0
  %v955 = vadd.f32 %v581, %v954
  %956 = vmatmul.f32.gmra.mxu0 %v749
  %v957 = vpop.f32.mrf.mxu0
  %v958 = vadd.f32 %v581, %v957
  %959 = vmatmul.f32.gmra.mxu0 %v752
  %v960 = vpop.f32.mrf.mxu0
  %v961 = vadd.f32 %v581, %v960
  %962 = vmatmul.f32.gmra.mxu0 %v755
  %v963 = vpop.f32.mrf.mxu0
  %v964 = vadd.f32 %v581, %v963
  %965 = vmatmul.f32.gmra.mxu0 %v758
  %v966 = vpop.f32.mrf.mxu0
  %v967 = vadd.f32 %v581, %v966
  %968 = vmatmul.f32.gmra.mxu0 %v761
  %v969 = vpop.f32.mrf.mxu0
  %v970 = vadd.f32 %v581, %v969
  %971 = vmatmul.f32.gmra.mxu0 %v764
  %v972 = vpop.f32.mrf.mxu0
  %v973 = vadd.f32 %v581, %v972
  %974 = vmatmul.f32.gmra.mxu0 %v767
  %v975 = vpop.f32.mrf.mxu0
  %v976 = vadd.f32 %v581, %v975
  %977 = vmatmul.f32.gmra.mxu0 %v770
  %v978 = vpop.f32.mrf.mxu0
  %v979 = vadd.f32 %v581, %v978
  %980 = vmatmul.f32.gmra.mxu0 %v773
  %v981 = vpop.f32.mrf.mxu0
  %v982 = vadd.f32 %v581, %v981
  %983 = vdwg.mxu0
  %v984 = vld [vmem:[%s6] sm:$0xff]
  %v985 = vld [vmem:[%s6 + $0x8] sm:$0xff]
  %v986 = vld [vmem:[%s6 + $0x10] sm:$0xff]
  %v987 = vld [vmem:[%s6 + $0x18] sm:$0xff]
  %v989 = vsel %vm109, %v320, 0
  %v992 = vsel %vm109, %v323, 0
  %v995 = vsel %vm109, %v326, 0
  %v998 = vsel %vm109, %v329, 0
  %v1001 = vsel %vm109, %v332, 0
  %v1004 = vsel %vm109, %v335, 0
  %v1007 = vsel %vm109, %v338, 0
  %v1010 = vsel %vm109, %v341, 0
  %v1013 = vsel %vm109, %v344, 0
  %v1016 = vsel %vm109, %v347, 0
  %v1019 = vsel %vm109, %v350, 0
  %v1022 = vsel %vm109, %v353, 0
  %v1025 = vsel %vm109, %v356, 0
  %v1028 = vsel %vm109, %v359, 0
  %v1031 = vsel %vm109, %v362, 0
  %v1034 = vsel %vm109, %v365, 0
  %v1037 = vsel %vm109, %v368, 0
  %v1040 = vsel %vm109, %v371, 0
  %v1043 = vsel %vm109, %v374, 0
  %v1046 = vsel %vm109, %v377, 0
  %v1049 = vsel %vm109, %v380, 0
  %v1052 = vsel %vm109, %v383, 0
  %v1055 = vsel %vm109, %v386, 0
  %v1058 = vsel %vm109, %v389, 0
  %v1061 = vsel %vm109, %v392, 0
  %v1064 = vsel %vm109, %v395, 0
  %v1067 = vsel %vm109, %v398, 0
  %v1070 = vsel %vm109, %v401, 0
  %v1073 = vsel %vm109, %v404, 0
  %v1076 = vsel %vm109, %v407, 0
  %v1079 = vsel %vm109, %v410, 0
  %v1082 = vsel %vm109, %v413, 0
  %v1085 = vsel %vm109, %v416, 0
  %v1088 = vsel %vm109, %v419, 0
  %v1091 = vsel %vm109, %v422, 0
  %v1094 = vsel %vm109, %v425, 0
  %v1097 = vsel %vm109, %v428, 0
  %v1100 = vsel %vm109, %v431, 0
  %v1103 = vsel %vm109, %v434, 0
  %v1106 = vsel %vm109, %v437, 0
  %v1109 = vsel %vm109, %v440, 0
  %v1112 = vsel %vm109, %v443, 0
  %v1115 = vsel %vm109, %v446, 0
  %v1118 = vsel %vm109, %v449, 0
  %v1121 = vsel %vm109, %v452, 0
  %v1124 = vsel %vm109, %v455, 0
  %v1127 = vsel %vm109, %v458, 0
  %v1130 = vsel %vm109, %v461, 0
  %v1133 = vsel %vm109, %v464, 0
  %v1136 = vsel %vm109, %v467, 0
  %v1139 = vsel %vm109, %v470, 0
  %v1142 = vsel %vm109, %v473, 0
  %v1145 = vsel %vm109, %v476, 0
  %v1148 = vsel %vm109, %v479, 0
  %v1151 = vsel %vm109, %v482, 0
  %v1154 = vsel %vm109, %v485, 0
  %v1157 = vsel %vm109, %v488, 0
  %v1160 = vsel %vm109, %v491, 0
  %v1163 = vsel %vm109, %v494, 0
  %v1166 = vsel %vm109, %v497, 0
  %v1169 = vsel %vm109, %v500, 0
  %v1172 = vsel %vm109, %v503, 0
  %v1175 = vsel %vm109, %v506, 0
  %v1178 = vsel %vm109, %v509, 0
  %1180 = vmatpush.msra.mxu0 0.0
  %1181 = vmatpush.msra.mxu0 0.0
  %1182 = vmatpush.msra.mxu0 0.0
  %1183 = vmatpush.msra.mxu0 0.0
  %1184 = vmatpush.msra.mxu0 0.0
  %1185 = vmatpush.msra.mxu0 0.0
  %1186 = vmatpush.msra.mxu0 0.0
  %1187 = vmatpush.msra.mxu0 0.0
  %1188 = vmatpush.msra.mxu0 0.0
  %1189 = vmatpush.msra.mxu0 0.0
  %1190 = vmatpush.msra.mxu0 0.0
  %1191 = vmatpush.msra.mxu0 0.0
  %1192 = vmatpush.msra.mxu0 %v987
  %1193 = vmatpush.msra.mxu0 %v986
  %1194 = vmatpush.msra.mxu0 %v985
  %1195 = vmatpush.msra.mxu0 %v984
  %1196 = vmatmul.f32.gmra.mxu0 %v989
  %v1197 = vpop.f32.mrf.mxu0
  %v1198 = vadd.f32 0.0, %v1197
  %1199 = vmatmul.f32.gmra.mxu0 %v992
  %v1200 = vpop.f32.mrf.mxu0
  %v1201 = vadd.f32 0.0, %v1200
  %1202 = vmatmul.f32.gmra.mxu0 %v995
  %v1203 = vpop.f32.mrf.mxu0
  %v1204 = vadd.f32 0.0, %v1203
  %1205 = vmatmul.f32.gmra.mxu0 %v998
  %v1206 = vpop.f32.mrf.mxu0
  %v1207 = vadd.f32 0.0, %v1206
  %1208 = vmatmul.f32.gmra.mxu0 %v1001
  %v1209 = vpop.f32.mrf.mxu0
  %v1210 = vadd.f32 0.0, %v1209
  %1211 = vmatmul.f32.gmra.mxu0 %v1004
  %v1212 = vpop.f32.mrf.mxu0
  %v1213 = vadd.f32 0.0, %v1212
  %1214 = vmatmul.f32.gmra.mxu0 %v1007
  %v1215 = vpop.f32.mrf.mxu0
  %v1216 = vadd.f32 0.0, %v1215
  %1217 = vmatmul.f32.gmra.mxu0 %v1010
  %v1218 = vpop.f32.mrf.mxu0
  %v1219 = vadd.f32 0.0, %v1218
  %1220 = vmatmul.f32.gmra.mxu0 %v1013
  %v1221 = vpop.f32.mrf.mxu0
  %v1222 = vadd.f32 0.0, %v1221
  %1223 = vmatmul.f32.gmra.mxu0 %v1016
  %v1224 = vpop.f32.mrf.mxu0
  %v1225 = vadd.f32 0.0, %v1224
  %1226 = vmatmul.f32.gmra.mxu0 %v1019
  %v1227 = vpop.f32.mrf.mxu0
  %v1228 = vadd.f32 0.0, %v1227
  %1229 = vmatmul.f32.gmra.mxu0 %v1022
  %v1230 = vpop.f32.mrf.mxu0
  %v1231 = vadd.f32 0.0, %v1230
  %1232 = vmatmul.f32.gmra.mxu0 %v1025
  %v1233 = vpop.f32.mrf.mxu0
  %v1234 = vadd.f32 0.0, %v1233
  %1235 = vmatmul.f32.gmra.mxu0 %v1028
  %v1236 = vpop.f32.mrf.mxu0
  %v1237 = vadd.f32 0.0, %v1236
  %1238 = vmatmul.f32.gmra.mxu0 %v1031
  %v1239 = vpop.f32.mrf.mxu0
  %v1240 = vadd.f32 0.0, %v1239
  %1241 = vmatmul.f32.gmra.mxu0 %v1034
  %v1242 = vpop.f32.mrf.mxu0
  %v1243 = vadd.f32 0.0, %v1242
  %1244 = vmatmul.f32.gmra.mxu0 %v1037
  %v1245 = vpop.f32.mrf.mxu0
  %v1246 = vadd.f32 0.0, %v1245
  %1247 = vmatmul.f32.gmra.mxu0 %v1040
  %v1248 = vpop.f32.mrf.mxu0
  %v1249 = vadd.f32 0.0, %v1248
  %1250 = vmatmul.f32.gmra.mxu0 %v1043
  %v1251 = vpop.f32.mrf.mxu0
  %v1252 = vadd.f32 0.0, %v1251
  %1253 = vmatmul.f32.gmra.mxu0 %v1046
  %v1254 = vpop.f32.mrf.mxu0
  %v1255 = vadd.f32 0.0, %v1254
  %1256 = vmatmul.f32.gmra.mxu0 %v1049
  %v1257 = vpop.f32.mrf.mxu0
  %v1258 = vadd.f32 0.0, %v1257
  %1259 = vmatmul.f32.gmra.mxu0 %v1052
  %v1260 = vpop.f32.mrf.mxu0
  %v1261 = vadd.f32 0.0, %v1260
  %1262 = vmatmul.f32.gmra.mxu0 %v1055
  %v1263 = vpop.f32.mrf.mxu0
  %v1264 = vadd.f32 0.0, %v1263
  %1265 = vmatmul.f32.gmra.mxu0 %v1058
  %v1266 = vpop.f32.mrf.mxu0
  %v1267 = vadd.f32 0.0, %v1266
  %1268 = vmatmul.f32.gmra.mxu0 %v1061
  %v1269 = vpop.f32.mrf.mxu0
  %v1270 = vadd.f32 0.0, %v1269
  %1271 = vmatmul.f32.gmra.mxu0 %v1064
  %v1272 = vpop.f32.mrf.mxu0
  %v1273 = vadd.f32 0.0, %v1272
  %1274 = vmatmul.f32.gmra.mxu0 %v1067
  %v1275 = vpop.f32.mrf.mxu0
  %v1276 = vadd.f32 0.0, %v1275
  %1277 = vmatmul.f32.gmra.mxu0 %v1070
  %v1278 = vpop.f32.mrf.mxu0
  %v1279 = vadd.f32 0.0, %v1278
  %1280 = vmatmul.f32.gmra.mxu0 %v1073
  %v1281 = vpop.f32.mrf.mxu0
  %v1282 = vadd.f32 0.0, %v1281
  %1283 = vmatmul.f32.gmra.mxu0 %v1076
  %v1284 = vpop.f32.mrf.mxu0
  %v1285 = vadd.f32 0.0, %v1284
  %1286 = vmatmul.f32.gmra.mxu0 %v1079
  %v1287 = vpop.f32.mrf.mxu0
  %v1288 = vadd.f32 0.0, %v1287
  %1289 = vmatmul.f32.gmra.mxu0 %v1082
  %v1290 = vpop.f32.mrf.mxu0
  %v1291 = vadd.f32 0.0, %v1290
  %1292 = vmatmul.f32.gmra.mxu0 %v1085
  %v1293 = vpop.f32.mrf.mxu0
  %v1294 = vadd.f32 0.0, %v1293
  %1295 = vmatmul.f32.gmra.mxu0 %v1088
  %v1296 = vpop.f32.mrf.mxu0
  %v1297 = vadd.f32 0.0, %v1296
  %1298 = vmatmul.f32.gmra.mxu0 %v1091
  %v1299 = vpop.f32.mrf.mxu0
  %v1300 = vadd.f32 0.0, %v1299
  %1301 = vmatmul.f32.gmra.mxu0 %v1094
  %v1302 = vpop.f32.mrf.mxu0
  %v1303 = vadd.f32 0.0, %v1302
  %1304 = vmatmul.f32.gmra.mxu0 %v1097
  %v1305 = vpop.f32.mrf.mxu0
  %v1306 = vadd.f32 0.0, %v1305
  %1307 = vmatmul.f32.gmra.mxu0 %v1100
  %v1308 = vpop.f32.mrf.mxu0
  %v1309 = vadd.f32 0.0, %v1308
  %1310 = vmatmul.f32.gmra.mxu0 %v1103
  %v1311 = vpop.f32.mrf.mxu0
  %v1312 = vadd.f32 0.0, %v1311
  %1313 = vmatmul.f32.gmra.mxu0 %v1106
  %v1314 = vpop.f32.mrf.mxu0
  %v1315 = vadd.f32 0.0, %v1314
  %1316 = vmatmul.f32.gmra.mxu0 %v1109
  %v1317 = vpop.f32.mrf.mxu0
  %v1318 = vadd.f32 0.0, %v1317
  %1319 = vmatmul.f32.gmra.mxu0 %v1112
  %v1320 = vpop.f32.mrf.mxu0
  %v1321 = vadd.f32 0.0, %v1320
  %1322 = vmatmul.f32.gmra.mxu0 %v1115
  %v1323 = vpop.f32.mrf.mxu0
  %v1324 = vadd.f32 0.0, %v1323
  %1325 = vmatmul.f32.gmra.mxu0 %v1118
  %v1326 = vpop.f32.mrf.mxu0
  %v1327 = vadd.f32 0.0, %v1326
  %1328 = vmatmul.f32.gmra.mxu0 %v1121
  %v1329 = vpop.f32.mrf.mxu0
  %v1330 = vadd.f32 0.0, %v1329
  %1331 = vmatmul.f32.gmra.mxu0 %v1124
  %v1332 = vpop.f32.mrf.mxu0
  %v1333 = vadd.f32 0.0, %v1332
  %1334 = vmatmul.f32.gmra.mxu0 %v1127
  %v1335 = vpop.f32.mrf.mxu0
  %v1336 = vadd.f32 0.0, %v1335
  %1337 = vmatmul.f32.gmra.mxu0 %v1130
  %v1338 = vpop.f32.mrf.mxu0
  %v1339 = vadd.f32 0.0, %v1338
  %1340 = vmatmul.f32.gmra.mxu0 %v1133
  %v1341 = vpop.f32.mrf.mxu0
  %v1342 = vadd.f32 0.0, %v1341
  %1343 = vmatmul.f32.gmra.mxu0 %v1136
  %v1344 = vpop.f32.mrf.mxu0
  %v1345 = vadd.f32 0.0, %v1344
  %1346 = vmatmul.f32.gmra.mxu0 %v1139
  %v1347 = vpop.f32.mrf.mxu0
  %v1348 = vadd.f32 0.0, %v1347
  %1349 = vmatmul.f32.gmra.mxu0 %v1142
  %v1350 = vpop.f32.mrf.mxu0
  %v1351 = vadd.f32 0.0, %v1350
  %1352 = vmatmul.f32.gmra.mxu0 %v1145
  %v1353 = vpop.f32.mrf.mxu0
  %v1354 = vadd.f32 0.0, %v1353
  %1355 = vmatmul.f32.gmra.mxu0 %v1148
  %v1356 = vpop.f32.mrf.mxu0
  %v1357 = vadd.f32 0.0, %v1356
  %1358 = vmatmul.f32.gmra.mxu0 %v1151
  %v1359 = vpop.f32.mrf.mxu0
  %v1360 = vadd.f32 0.0, %v1359
  %1361 = vmatmul.f32.gmra.mxu0 %v1154
  %v1362 = vpop.f32.mrf.mxu0
  %v1363 = vadd.f32 0.0, %v1362
  %1364 = vmatmul.f32.gmra.mxu0 %v1157
  %v1365 = vpop.f32.mrf.mxu0
  %v1366 = vadd.f32 0.0, %v1365
  %1367 = vmatmul.f32.gmra.mxu0 %v1160
  %v1368 = vpop.f32.mrf.mxu0
  %v1369 = vadd.f32 0.0, %v1368
  %1370 = vmatmul.f32.gmra.mxu0 %v1163
  %v1371 = vpop.f32.mrf.mxu0
  %v1372 = vadd.f32 0.0, %v1371
  %1373 = vmatmul.f32.gmra.mxu0 %v1166
  %v1374 = vpop.f32.mrf.mxu0
  %v1375 = vadd.f32 0.0, %v1374
  %1376 = vmatmul.f32.gmra.mxu0 %v1169
  %v1377 = vpop.f32.mrf.mxu0
  %v1378 = vadd.f32 0.0, %v1377
  %1379 = vmatmul.f32.gmra.mxu0 %v1172
  %v1380 = vpop.f32.mrf.mxu0
  %v1381 = vadd.f32 0.0, %v1380
  %1382 = vmatmul.f32.gmra.mxu0 %v1175
  %v1383 = vpop.f32.mrf.mxu0
  %v1384 = vadd.f32 0.0, %v1383
  %1385 = vmatmul.f32.gmra.mxu0 %v1178
  %v1386 = vpop.f32.mrf.mxu0
  %v1387 = vadd.f32 0.0, %v1386
  %1388 = vdwg.mxu0
  %v1389 = vld [vmem:[%s8] sm:$0xff]
  %v1390 = vld [vmem:[%s8 + $0x8] sm:$0xff]
  %v1391 = vld [vmem:[%s8 + $0x10] sm:$0xff]
  %v1392 = vld [vmem:[%s8 + $0x18] sm:$0xff]
  %v1393 = vld [vmem:[%s8 + $0x20] sm:$0xff]
  %v1394 = vld [vmem:[%s8 + $0x28] sm:$0xff]
  %v1395 = vld [vmem:[%s8 + $0x30] sm:$0xff]
  %v1396 = vld [vmem:[%s8 + $0x38] sm:$0xff]
  %v1398 = vsel %vm109, %v793, 0
  %v1401 = vsel %vm109, %v796, 0
  %v1404 = vsel %vm109, %v799, 0
  %v1407 = vsel %vm109, %v802, 0
  %v1410 = vsel %vm109, %v805, 0
  %v1413 = vsel %vm109, %v808, 0
  %v1416 = vsel %vm109, %v811, 0
  %v1419 = vsel %vm109, %v814, 0
  %v1422 = vsel %vm109, %v817, 0
  %v1425 = vsel %vm109, %v820, 0
  %v1428 = vsel %vm109, %v823, 0
  %v1431 = vsel %vm109, %v826, 0
  %v1434 = vsel %vm109, %v829, 0
  %v1437 = vsel %vm109, %v832, 0
  %v1440 = vsel %vm109, %v835, 0
  %v1443 = vsel %vm109, %v838, 0
  %v1446 = vsel %vm109, %v841, 0
  %v1449 = vsel %vm109, %v844, 0
  %v1452 = vsel %vm109, %v847, 0
  %v1455 = vsel %vm109, %v850, 0
  %v1458 = vsel %vm109, %v853, 0
  %v1461 = vsel %vm109, %v856, 0
  %v1464 = vsel %vm109, %v859, 0
  %v1467 = vsel %vm109, %v862, 0
  %v1470 = vsel %vm109, %v865, 0
  %v1473 = vsel %vm109, %v868, 0
  %v1476 = vsel %vm109, %v871, 0
  %v1479 = vsel %vm109, %v874, 0
  %v1482 = vsel %vm109, %v877, 0
  %v1485 = vsel %vm109, %v880, 0
  %v1488 = vsel %vm109, %v883, 0
  %v1491 = vsel %vm109, %v886, 0
  %v1494 = vsel %vm109, %v889, 0
  %v1497 = vsel %vm109, %v892, 0
  %v1500 = vsel %vm109, %v895, 0
  %v1503 = vsel %vm109, %v898, 0
  %v1506 = vsel %vm109, %v901, 0
  %v1509 = vsel %vm109, %v904, 0
  %v1512 = vsel %vm109, %v907, 0
  %v1515 = vsel %vm109, %v910, 0
  %v1518 = vsel %vm109, %v913, 0
  %v1521 = vsel %vm109, %v916, 0
  %v1524 = vsel %vm109, %v919, 0
  %v1527 = vsel %vm109, %v922, 0
  %v1530 = vsel %vm109, %v925, 0
  %v1533 = vsel %vm109, %v928, 0
  %v1536 = vsel %vm109, %v931, 0
  %v1539 = vsel %vm109, %v934, 0
  %v1542 = vsel %vm109, %v937, 0
  %v1545 = vsel %vm109, %v940, 0
  %v1548 = vsel %vm109, %v943, 0
  %v1551 = vsel %vm109, %v946, 0
  %v1554 = vsel %vm109, %v949, 0
  %v1557 = vsel %vm109, %v952, 0
  %v1560 = vsel %vm109, %v955, 0
  %v1563 = vsel %vm109, %v958, 0
  %v1566 = vsel %vm109, %v961, 0
  %v1569 = vsel %vm109, %v964, 0
  %v1572 = vsel %vm109, %v967, 0
  %v1575 = vsel %vm109, %v970, 0
  %v1578 = vsel %vm109, %v973, 0
  %v1581 = vsel %vm109, %v976, 0
  %v1584 = vsel %vm109, %v979, 0
  %v1587 = vsel %vm109, %v982, 0
  %1589 = vmatpush.msra.mxu0 0.0
  %1590 = vmatpush.msra.mxu0 0.0
  %1591 = vmatpush.msra.mxu0 0.0
  %1592 = vmatpush.msra.mxu0 0.0
  %1593 = vmatpush.msra.mxu0 0.0
  %1594 = vmatpush.msra.mxu0 0.0
  %1595 = vmatpush.msra.mxu0 0.0
  %1596 = vmatpush.msra.mxu0 0.0
  %1597 = vmatpush.msra.mxu0 0.0
  %1598 = vmatpush.msra.mxu0 0.0
  %1599 = vmatpush.msra.mxu0 0.0
  %1600 = vmatpush.msra.mxu0 0.0
  %1601 = vmatpush.msra.mxu0 %v1395
  %1602 = vmatpush.msra.mxu0 %v1393
  %1603 = vmatpush.msra.mxu0 %v1391
  %1604 = vmatpush.msra.mxu0 %v1389
  %1605 = vmatmul.f32.gmra.mxu0 %v1398
  %v1606 = vpop.f32.mrf.mxu0
  %v1607 = vadd.f32 0.0, %v1606
  %1608 = vmatmul.f32.gmra.mxu0 %v1401
  %v1609 = vpop.f32.mrf.mxu0
  %v1610 = vadd.f32 0.0, %v1609
  %1611 = vmatmul.f32.gmra.mxu0 %v1404
  %v1612 = vpop.f32.mrf.mxu0
  %v1613 = vadd.f32 0.0, %v1612
  %1614 = vmatmul.f32.gmra.mxu0 %v1407
  %v1615 = vpop.f32.mrf.mxu0
  %v1616 = vadd.f32 0.0, %v1615
  %1617 = vmatmul.f32.gmra.mxu0 %v1410
  %v1618 = vpop.f32.mrf.mxu0
  %v1619 = vadd.f32 0.0, %v1618
  %1620 = vmatmul.f32.gmra.mxu0 %v1413
  %v1621 = vpop.f32.mrf.mxu0
  %v1622 = vadd.f32 0.0, %v1621
  %1623 = vmatmul.f32.gmra.mxu0 %v1416
  %v1624 = vpop.f32.mrf.mxu0
  %v1625 = vadd.f32 0.0, %v1624
  %1626 = vmatmul.f32.gmra.mxu0 %v1419
  %v1627 = vpop.f32.mrf.mxu0
  %v1628 = vadd.f32 0.0, %v1627
  %1629 = vmatmul.f32.gmra.mxu0 %v1422
  %v1630 = vpop.f32.mrf.mxu0
  %v1631 = vadd.f32 0.0, %v1630
  %1632 = vmatmul.f32.gmra.mxu0 %v1425
  %v1633 = vpop.f32.mrf.mxu0
  %v1634 = vadd.f32 0.0, %v1633
  %1635 = vmatmul.f32.gmra.mxu0 %v1428
  %v1636 = vpop.f32.mrf.mxu0
  %v1637 = vadd.f32 0.0, %v1636
  %1638 = vmatmul.f32.gmra.mxu0 %v1431
  %v1639 = vpop.f32.mrf.mxu0
  %v1640 = vadd.f32 0.0, %v1639
  %1641 = vmatmul.f32.gmra.mxu0 %v1434
  %v1642 = vpop.f32.mrf.mxu0
  %v1643 = vadd.f32 0.0, %v1642
  %1644 = vmatmul.f32.gmra.mxu0 %v1437
  %v1645 = vpop.f32.mrf.mxu0
  %v1646 = vadd.f32 0.0, %v1645
  %1647 = vmatmul.f32.gmra.mxu0 %v1440
  %v1648 = vpop.f32.mrf.mxu0
  %v1649 = vadd.f32 0.0, %v1648
  %1650 = vmatmul.f32.gmra.mxu0 %v1443
  %v1651 = vpop.f32.mrf.mxu0
  %v1652 = vadd.f32 0.0, %v1651
  %1653 = vmatmul.f32.gmra.mxu0 %v1446
  %v1654 = vpop.f32.mrf.mxu0
  %v1655 = vadd.f32 0.0, %v1654
  %1656 = vmatmul.f32.gmra.mxu0 %v1449
  %v1657 = vpop.f32.mrf.mxu0
  %v1658 = vadd.f32 0.0, %v1657
  %1659 = vmatmul.f32.gmra.mxu0 %v1452
  %v1660 = vpop.f32.mrf.mxu0
  %v1661 = vadd.f32 0.0, %v1660
  %1662 = vmatmul.f32.gmra.mxu0 %v1455
  %v1663 = vpop.f32.mrf.mxu0
  %v1664 = vadd.f32 0.0, %v1663
  %1665 = vmatmul.f32.gmra.mxu0 %v1458
  %v1666 = vpop.f32.mrf.mxu0
  %v1667 = vadd.f32 0.0, %v1666
  %1668 = vmatmul.f32.gmra.mxu0 %v1461
  %v1669 = vpop.f32.mrf.mxu0
  %v1670 = vadd.f32 0.0, %v1669
  %1671 = vmatmul.f32.gmra.mxu0 %v1464
  %v1672 = vpop.f32.mrf.mxu0
  %v1673 = vadd.f32 0.0, %v1672
  %1674 = vmatmul.f32.gmra.mxu0 %v1467
  %v1675 = vpop.f32.mrf.mxu0
  %v1676 = vadd.f32 0.0, %v1675
  %1677 = vmatmul.f32.gmra.mxu0 %v1470
  %v1678 = vpop.f32.mrf.mxu0
  %v1679 = vadd.f32 0.0, %v1678
  %1680 = vmatmul.f32.gmra.mxu0 %v1473
  %v1681 = vpop.f32.mrf.mxu0
  %v1682 = vadd.f32 0.0, %v1681
  %1683 = vmatmul.f32.gmra.mxu0 %v1476
  %v1684 = vpop.f32.mrf.mxu0
  %v1685 = vadd.f32 0.0, %v1684
  %1686 = vmatmul.f32.gmra.mxu0 %v1479
  %v1687 = vpop.f32.mrf.mxu0
  %v1688 = vadd.f32 0.0, %v1687
  %1689 = vmatmul.f32.gmra.mxu0 %v1482
  %v1690 = vpop.f32.mrf.mxu0
  %v1691 = vadd.f32 0.0, %v1690
  %1692 = vmatmul.f32.gmra.mxu0 %v1485
  %v1693 = vpop.f32.mrf.mxu0
  %v1694 = vadd.f32 0.0, %v1693
  %1695 = vmatmul.f32.gmra.mxu0 %v1488
  %v1696 = vpop.f32.mrf.mxu0
  %v1697 = vadd.f32 0.0, %v1696
  %1698 = vmatmul.f32.gmra.mxu0 %v1491
  %v1699 = vpop.f32.mrf.mxu0
  %v1700 = vadd.f32 0.0, %v1699
  %1701 = vmatmul.f32.gmra.mxu0 %v1494
  %v1702 = vpop.f32.mrf.mxu0
  %v1703 = vadd.f32 0.0, %v1702
  %1704 = vmatmul.f32.gmra.mxu0 %v1497
  %v1705 = vpop.f32.mrf.mxu0
  %v1706 = vadd.f32 0.0, %v1705
  %1707 = vmatmul.f32.gmra.mxu0 %v1500
  %v1708 = vpop.f32.mrf.mxu0
  %v1709 = vadd.f32 0.0, %v1708
  %1710 = vmatmul.f32.gmra.mxu0 %v1503
  %v1711 = vpop.f32.mrf.mxu0
  %v1712 = vadd.f32 0.0, %v1711
  %1713 = vmatmul.f32.gmra.mxu0 %v1506
  %v1714 = vpop.f32.mrf.mxu0
  %v1715 = vadd.f32 0.0, %v1714
  %1716 = vmatmul.f32.gmra.mxu0 %v1509
  %v1717 = vpop.f32.mrf.mxu0
  %v1718 = vadd.f32 0.0, %v1717
  %1719 = vmatmul.f32.gmra.mxu0 %v1512
  %v1720 = vpop.f32.mrf.mxu0
  %v1721 = vadd.f32 0.0, %v1720
  %1722 = vmatmul.f32.gmra.mxu0 %v1515
  %v1723 = vpop.f32.mrf.mxu0
  %v1724 = vadd.f32 0.0, %v1723
  %1725 = vmatmul.f32.gmra.mxu0 %v1518
  %v1726 = vpop.f32.mrf.mxu0
  %v1727 = vadd.f32 0.0, %v1726
  %1728 = vmatmul.f32.gmra.mxu0 %v1521
  %v1729 = vpop.f32.mrf.mxu0
  %v1730 = vadd.f32 0.0, %v1729
  %1731 = vmatmul.f32.gmra.mxu0 %v1524
  %v1732 = vpop.f32.mrf.mxu0
  %v1733 = vadd.f32 0.0, %v1732
  %1734 = vmatmul.f32.gmra.mxu0 %v1527
  %v1735 = vpop.f32.mrf.mxu0
  %v1736 = vadd.f32 0.0, %v1735
  %1737 = vmatmul.f32.gmra.mxu0 %v1530
  %v1738 = vpop.f32.mrf.mxu0
  %v1739 = vadd.f32 0.0, %v1738
  %1740 = vmatmul.f32.gmra.mxu0 %v1533
  %v1741 = vpop.f32.mrf.mxu0
  %v1742 = vadd.f32 0.0, %v1741
  %1743 = vmatmul.f32.gmra.mxu0 %v1536
  %v1744 = vpop.f32.mrf.mxu0
  %v1745 = vadd.f32 0.0, %v1744
  %1746 = vmatmul.f32.gmra.mxu0 %v1539
  %v1747 = vpop.f32.mrf.mxu0
  %v1748 = vadd.f32 0.0, %v1747
  %1749 = vmatmul.f32.gmra.mxu0 %v1542
  %v1750 = vpop.f32.mrf.mxu0
  %v1751 = vadd.f32 0.0, %v1750
  %1752 = vmatmul.f32.gmra.mxu0 %v1545
  %v1753 = vpop.f32.mrf.mxu0
  %v1754 = vadd.f32 0.0, %v1753
  %1755 = vmatmul.f32.gmra.mxu0 %v1548
  %v1756 = vpop.f32.mrf.mxu0
  %v1757 = vadd.f32 0.0, %v1756
  %1758 = vmatmul.f32.gmra.mxu0 %v1551
  %v1759 = vpop.f32.mrf.mxu0
  %v1760 = vadd.f32 0.0, %v1759
  %1761 = vmatmul.f32.gmra.mxu0 %v1554
  %v1762 = vpop.f32.mrf.mxu0
  %v1763 = vadd.f32 0.0, %v1762
  %1764 = vmatmul.f32.gmra.mxu0 %v1557
  %v1765 = vpop.f32.mrf.mxu0
  %v1766 = vadd.f32 0.0, %v1765
  %1767 = vmatmul.f32.gmra.mxu0 %v1560
  %v1768 = vpop.f32.mrf.mxu0
  %v1769 = vadd.f32 0.0, %v1768
  %1770 = vmatmul.f32.gmra.mxu0 %v1563
  %v1771 = vpop.f32.mrf.mxu0
  %v1772 = vadd.f32 0.0, %v1771
  %1773 = vmatmul.f32.gmra.mxu0 %v1566
  %v1774 = vpop.f32.mrf.mxu0
  %v1775 = vadd.f32 0.0, %v1774
  %1776 = vmatmul.f32.gmra.mxu0 %v1569
  %v1777 = vpop.f32.mrf.mxu0
  %v1778 = vadd.f32 0.0, %v1777
  %1779 = vmatmul.f32.gmra.mxu0 %v1572
  %v1780 = vpop.f32.mrf.mxu0
  %v1781 = vadd.f32 0.0, %v1780
  %1782 = vmatmul.f32.gmra.mxu0 %v1575
  %v1783 = vpop.f32.mrf.mxu0
  %v1784 = vadd.f32 0.0, %v1783
  %1785 = vmatmul.f32.gmra.mxu0 %v1578
  %v1786 = vpop.f32.mrf.mxu0
  %v1787 = vadd.f32 0.0, %v1786
  %1788 = vmatmul.f32.gmra.mxu0 %v1581
  %v1789 = vpop.f32.mrf.mxu0
  %v1790 = vadd.f32 0.0, %v1789
  %1791 = vmatmul.f32.gmra.mxu0 %v1584
  %v1792 = vpop.f32.mrf.mxu0
  %v1793 = vadd.f32 0.0, %v1792
  %1794 = vmatmul.f32.gmra.mxu0 %v1587
  %v1795 = vpop.f32.mrf.mxu0
  %v1796 = vadd.f32 0.0, %v1795
  %1797 = vdwg.mxu0
  %1798 = vmatpush.msra.mxu0 0.0
  %1799 = vmatpush.msra.mxu0 0.0
  %1800 = vmatpush.msra.mxu0 0.0
  %1801 = vmatpush.msra.mxu0 0.0
  %1802 = vmatpush.msra.mxu0 0.0
  %1803 = vmatpush.msra.mxu0 0.0
  %1804 = vmatpush.msra.mxu0 0.0
  %1805 = vmatpush.msra.mxu0 0.0
  %1806 = vmatpush.msra.mxu0 0.0
  %1807 = vmatpush.msra.mxu0 0.0
  %1808 = vmatpush.msra.mxu0 0.0
  %1809 = vmatpush.msra.mxu0 0.0
  %1810 = vmatpush.msra.mxu0 %v1396
  %1811 = vmatpush.msra.mxu0 %v1394
  %1812 = vmatpush.msra.mxu0 %v1392
  %1813 = vmatpush.msra.mxu0 %v1390
  %1814 = vmatmul.f32.gmra.mxu0 %v1398
  %v1815 = vpop.f32.mrf.mxu0
  %v1816 = vadd.f32 0.0, %v1815
  %1817 = vmatmul.f32.gmra.mxu0 %v1401
  %v1818 = vpop.f32.mrf.mxu0
  %v1819 = vadd.f32 0.0, %v1818
  %1820 = vmatmul.f32.gmra.mxu0 %v1404
  %v1821 = vpop.f32.mrf.mxu0
  %v1822 = vadd.f32 0.0, %v1821
  %1823 = vmatmul.f32.gmra.mxu0 %v1407
  %v1824 = vpop.f32.mrf.mxu0
  %v1825 = vadd.f32 0.0, %v1824
  %1826 = vmatmul.f32.gmra.mxu0 %v1410
  %v1827 = vpop.f32.mrf.mxu0
  %v1828 = vadd.f32 0.0, %v1827
  %1829 = vmatmul.f32.gmra.mxu0 %v1413
  %v1830 = vpop.f32.mrf.mxu0
  %v1831 = vadd.f32 0.0, %v1830
  %1832 = vmatmul.f32.gmra.mxu0 %v1416
  %v1833 = vpop.f32.mrf.mxu0
  %v1834 = vadd.f32 0.0, %v1833
  %1835 = vmatmul.f32.gmra.mxu0 %v1419
  %v1836 = vpop.f32.mrf.mxu0
  %v1837 = vadd.f32 0.0, %v1836
  %1838 = vmatmul.f32.gmra.mxu0 %v1422
  %v1839 = vpop.f32.mrf.mxu0
  %v1840 = vadd.f32 0.0, %v1839
  %1841 = vmatmul.f32.gmra.mxu0 %v1425
  %v1842 = vpop.f32.mrf.mxu0
  %v1843 = vadd.f32 0.0, %v1842
  %1844 = vmatmul.f32.gmra.mxu0 %v1428
  %v1845 = vpop.f32.mrf.mxu0
  %v1846 = vadd.f32 0.0, %v1845
  %1847 = vmatmul.f32.gmra.mxu0 %v1431
  %v1848 = vpop.f32.mrf.mxu0
  %v1849 = vadd.f32 0.0, %v1848
  %1850 = vmatmul.f32.gmra.mxu0 %v1434
  %v1851 = vpop.f32.mrf.mxu0
  %v1852 = vadd.f32 0.0, %v1851
  %1853 = vmatmul.f32.gmra.mxu0 %v1437
  %v1854 = vpop.f32.mrf.mxu0
  %v1855 = vadd.f32 0.0, %v1854
  %1856 = vmatmul.f32.gmra.mxu0 %v1440
  %v1857 = vpop.f32.mrf.mxu0
  %v1858 = vadd.f32 0.0, %v1857
  %1859 = vmatmul.f32.gmra.mxu0 %v1443
  %v1860 = vpop.f32.mrf.mxu0
  %v1861 = vadd.f32 0.0, %v1860
  %1862 = vmatmul.f32.gmra.mxu0 %v1446
  %v1863 = vpop.f32.mrf.mxu0
  %v1864 = vadd.f32 0.0, %v1863
  %1865 = vmatmul.f32.gmra.mxu0 %v1449
  %v1866 = vpop.f32.mrf.mxu0
  %v1867 = vadd.f32 0.0, %v1866
  %1868 = vmatmul.f32.gmra.mxu0 %v1452
  %v1869 = vpop.f32.mrf.mxu0
  %v1870 = vadd.f32 0.0, %v1869
  %1871 = vmatmul.f32.gmra.mxu0 %v1455
  %v1872 = vpop.f32.mrf.mxu0
  %v1873 = vadd.f32 0.0, %v1872
  %1874 = vmatmul.f32.gmra.mxu0 %v1458
  %v1875 = vpop.f32.mrf.mxu0
  %v1876 = vadd.f32 0.0, %v1875
  %1877 = vmatmul.f32.gmra.mxu0 %v1461
  %v1878 = vpop.f32.mrf.mxu0
  %v1879 = vadd.f32 0.0, %v1878
  %1880 = vmatmul.f32.gmra.mxu0 %v1464
  %v1881 = vpop.f32.mrf.mxu0
  %v1882 = vadd.f32 0.0, %v1881
  %1883 = vmatmul.f32.gmra.mxu0 %v1467
  %v1884 = vpop.f32.mrf.mxu0
  %v1885 = vadd.f32 0.0, %v1884
  %1886 = vmatmul.f32.gmra.mxu0 %v1470
  %v1887 = vpop.f32.mrf.mxu0
  %v1888 = vadd.f32 0.0, %v1887
  %1889 = vmatmul.f32.gmra.mxu0 %v1473
  %v1890 = vpop.f32.mrf.mxu0
  %v1891 = vadd.f32 0.0, %v1890
  %1892 = vmatmul.f32.gmra.mxu0 %v1476
  %v1893 = vpop.f32.mrf.mxu0
  %v1894 = vadd.f32 0.0, %v1893
  %1895 = vmatmul.f32.gmra.mxu0 %v1479
  %v1896 = vpop.f32.mrf.mxu0
  %v1897 = vadd.f32 0.0, %v1896
  %1898 = vmatmul.f32.gmra.mxu0 %v1482
  %v1899 = vpop.f32.mrf.mxu0
  %v1900 = vadd.f32 0.0, %v1899
  %1901 = vmatmul.f32.gmra.mxu0 %v1485
  %v1902 = vpop.f32.mrf.mxu0
  %v1903 = vadd.f32 0.0, %v1902
  %1904 = vmatmul.f32.gmra.mxu0 %v1488
  %v1905 = vpop.f32.mrf.mxu0
  %v1906 = vadd.f32 0.0, %v1905
  %1907 = vmatmul.f32.gmra.mxu0 %v1491
  %v1908 = vpop.f32.mrf.mxu0
  %v1909 = vadd.f32 0.0, %v1908
  %1910 = vmatmul.f32.gmra.mxu0 %v1494
  %v1911 = vpop.f32.mrf.mxu0
  %v1912 = vadd.f32 0.0, %v1911
  %1913 = vmatmul.f32.gmra.mxu0 %v1497
  %v1914 = vpop.f32.mrf.mxu0
  %v1915 = vadd.f32 0.0, %v1914
  %1916 = vmatmul.f32.gmra.mxu0 %v1500
  %v1917 = vpop.f32.mrf.mxu0
  %v1918 = vadd.f32 0.0, %v1917
  %1919 = vmatmul.f32.gmra.mxu0 %v1503
  %v1920 = vpop.f32.mrf.mxu0
  %v1921 = vadd.f32 0.0, %v1920
  %1922 = vmatmul.f32.gmra.mxu0 %v1506
  %v1923 = vpop.f32.mrf.mxu0
  %v1924 = vadd.f32 0.0, %v1923
  %1925 = vmatmul.f32.gmra.mxu0 %v1509
  %v1926 = vpop.f32.mrf.mxu0
  %v1927 = vadd.f32 0.0, %v1926
  %1928 = vmatmul.f32.gmra.mxu0 %v1512
  %v1929 = vpop.f32.mrf.mxu0
  %v1930 = vadd.f32 0.0, %v1929
  %1931 = vmatmul.f32.gmra.mxu0 %v1515
  %v1932 = vpop.f32.mrf.mxu0
  %v1933 = vadd.f32 0.0, %v1932
  %1934 = vmatmul.f32.gmra.mxu0 %v1518
  %v1935 = vpop.f32.mrf.mxu0
  %v1936 = vadd.f32 0.0, %v1935
  %1937 = vmatmul.f32.gmra.mxu0 %v1521
  %v1938 = vpop.f32.mrf.mxu0
  %v1939 = vadd.f32 0.0, %v1938
  %1940 = vmatmul.f32.gmra.mxu0 %v1524
  %v1941 = vpop.f32.mrf.mxu0
  %v1942 = vadd.f32 0.0, %v1941
  %1943 = vmatmul.f32.gmra.mxu0 %v1527
  %v1944 = vpop.f32.mrf.mxu0
  %v1945 = vadd.f32 0.0, %v1944
  %1946 = vmatmul.f32.gmra.mxu0 %v1530
  %v1947 = vpop.f32.mrf.mxu0
  %v1948 = vadd.f32 0.0, %v1947
  %1949 = vmatmul.f32.gmra.mxu0 %v1533
  %v1950 = vpop.f32.mrf.mxu0
  %v1951 = vadd.f32 0.0, %v1950
  %1952 = vmatmul.f32.gmra.mxu0 %v1536
  %v1953 = vpop.f32.mrf.mxu0
  %v1954 = vadd.f32 0.0, %v1953
  %1955 = vmatmul.f32.gmra.mxu0 %v1539
  %v1956 = vpop.f32.mrf.mxu0
  %v1957 = vadd.f32 0.0, %v1956
  %1958 = vmatmul.f32.gmra.mxu0 %v1542
  %v1959 = vpop.f32.mrf.mxu0
  %v1960 = vadd.f32 0.0, %v1959
  %1961 = vmatmul.f32.gmra.mxu0 %v1545
  %v1962 = vpop.f32.mrf.mxu0
  %v1963 = vadd.f32 0.0, %v1962
  %1964 = vmatmul.f32.gmra.mxu0 %v1548
  %v1965 = vpop.f32.mrf.mxu0
  %v1966 = vadd.f32 0.0, %v1965
  %1967 = vmatmul.f32.gmra.mxu0 %v1551
  %v1968 = vpop.f32.mrf.mxu0
  %v1969 = vadd.f32 0.0, %v1968
  %1970 = vmatmul.f32.gmra.mxu0 %v1554
  %v1971 = vpop.f32.mrf.mxu0
  %v1972 = vadd.f32 0.0, %v1971
  %1973 = vmatmul.f32.gmra.mxu0 %v1557
  %v1974 = vpop.f32.mrf.mxu0
  %v1975 = vadd.f32 0.0, %v1974
  %1976 = vmatmul.f32.gmra.mxu0 %v1560
  %v1977 = vpop.f32.mrf.mxu0
  %v1978 = vadd.f32 0.0, %v1977
  %1979 = vmatmul.f32.gmra.mxu0 %v1563
  %v1980 = vpop.f32.mrf.mxu0
  %v1981 = vadd.f32 0.0, %v1980
  %1982 = vmatmul.f32.gmra.mxu0 %v1566
  %v1983 = vpop.f32.mrf.mxu0
  %v1984 = vadd.f32 0.0, %v1983
  %1985 = vmatmul.f32.gmra.mxu0 %v1569
  %v1986 = vpop.f32.mrf.mxu0
  %v1987 = vadd.f32 0.0, %v1986
  %1988 = vmatmul.f32.gmra.mxu0 %v1572
  %v1989 = vpop.f32.mrf.mxu0
  %v1990 = vadd.f32 0.0, %v1989
  %1991 = vmatmul.f32.gmra.mxu0 %v1575
  %v1992 = vpop.f32.mrf.mxu0
  %v1993 = vadd.f32 0.0, %v1992
  %1994 = vmatmul.f32.gmra.mxu0 %v1578
  %v1995 = vpop.f32.mrf.mxu0
  %v1996 = vadd.f32 0.0, %v1995
  %1997 = vmatmul.f32.gmra.mxu0 %v1581
  %v1998 = vpop.f32.mrf.mxu0
  %v1999 = vadd.f32 0.0, %v1998
  %2000 = vmatmul.f32.gmra.mxu0 %v1584
  %v2001 = vpop.f32.mrf.mxu0
  %v2002 = vadd.f32 0.0, %v2001
  %2003 = vmatmul.f32.gmra.mxu0 %v1587
  %v2004 = vpop.f32.mrf.mxu0
  %v2005 = vadd.f32 0.0, %v2004
  %2006 = vdwg.mxu0
  %v2007 = vld [vmem:[%s9] sm:$0xff]
  %v2008 = vld [vmem:[%s9 + $0x8] sm:$0xff]
  %v2009 = vld [vmem:[%s9 + $0x10] sm:$0xff]
  %v2010 = vld [vmem:[%s9 + $0x18] sm:$0xff]
  %v2011 = vld [vmem:[%s9 + $0x20] sm:$0xff]
  %v2012 = vld [vmem:[%s9 + $0x28] sm:$0xff]
  %v2013 = vld [vmem:[%s9 + $0x30] sm:$0xff]
  %v2014 = vld [vmem:[%s9 + $0x38] sm:$0xff]
  %v2015 = vld [vmem:[%s9 + $0x40] sm:$0xff]
  %v2016 = vld [vmem:[%s9 + $0x48] sm:$0xff]
  %v2017 = vld [vmem:[%s9 + $0x50] sm:$0xff]
  %v2018 = vld [vmem:[%s9 + $0x58] sm:$0xff]
  %v2019 = vld [vmem:[%s9 + $0x60] sm:$0xff]
  %v2020 = vld [vmem:[%s9 + $0x68] sm:$0xff]
  %v2021 = vld [vmem:[%s9 + $0x70] sm:$0xff]
  %v2022 = vld [vmem:[%s9 + $0x78] sm:$0xff]
  %v2023 = vld [vmem:[%s9 + $0x80] sm:$0xff]
  %v2024 = vld [vmem:[%s9 + $0x88] sm:$0xff]
  %v2025 = vld [vmem:[%s9 + $0x90] sm:$0xff]
  %v2026 = vld [vmem:[%s9 + $0x98] sm:$0xff]
  %v2027 = vld [vmem:[%s9 + $0xa0] sm:$0xff]
  %v2028 = vld [vmem:[%s9 + $0xa8] sm:$0xff]
  %v2029 = vld [vmem:[%s9 + $0xb0] sm:$0xff]
  %v2030 = vld [vmem:[%s9 + $0xb8] sm:$0xff]
  %v2031 = vld [vmem:[%s9 + $0xc0] sm:$0xff]
  %v2032 = vld [vmem:[%s9 + $0xc8] sm:$0xff]
  %v2033 = vld [vmem:[%s9 + $0xd0] sm:$0xff]
  %v2034 = vld [vmem:[%s9 + $0xd8] sm:$0xff]
  %v2035 = vld [vmem:[%s9 + $0xe0] sm:$0xff]
  %v2036 = vld [vmem:[%s9 + $0xe8] sm:$0xff]
  %v2037 = vld [vmem:[%s9 + $0xf0] sm:$0xff]
  %v2038 = vld [vmem:[%s9 + $0xf8] sm:$0xff]
  %2039 = vmatpush.msra.mxu0 %v2022
  %2040 = vmatpush.msra.mxu0 %v2021
  %2041 = vmatpush.msra.mxu0 %v2020
  %2042 = vmatpush.msra.mxu0 %v2019
  %2043 = vmatpush.msra.mxu0 %v2018
  %2044 = vmatpush.msra.mxu0 %v2017
  %2045 = vmatpush.msra.mxu0 %v2016
  %2046 = vmatpush.msra.mxu0 %v2015
  %2047 = vmatpush.msra.mxu0 %v2014
  %2048 = vmatpush.msra.mxu0 %v2013
  %2049 = vmatpush.msra.mxu0 %v2012
  %2050 = vmatpush.msra.mxu0 %v2011
  %2051 = vmatpush.msra.mxu0 %v2010
  %2052 = vmatpush.msra.mxu0 %v2009
  %2053 = vmatpush.msra.mxu0 %v2008
  %2054 = vmatpush.msra.mxu0 %v2007
  %2055 = vmatmul.f32.gmra.mxu0 %v1607
  %v2056 = vpop.f32.mrf.mxu0
  %v2057 = vadd.f32 0.0, %v2056
  %2058 = vmatmul.f32.gmra.mxu0 %v1610
  %v2059 = vpop.f32.mrf.mxu0
  %v2060 = vadd.f32 0.0, %v2059
  %2061 = vmatmul.f32.gmra.mxu0 %v1613
  %v2062 = vpop.f32.mrf.mxu0
  %v2063 = vadd.f32 0.0, %v2062
  %2064 = vmatmul.f32.gmra.mxu0 %v1616
  %v2065 = vpop.f32.mrf.mxu0
  %v2066 = vadd.f32 0.0, %v2065
  %2067 = vmatmul.f32.gmra.mxu0 %v1619
  %v2068 = vpop.f32.mrf.mxu0
  %v2069 = vadd.f32 0.0, %v2068
  %2070 = vmatmul.f32.gmra.mxu0 %v1622
  %v2071 = vpop.f32.mrf.mxu0
  %v2072 = vadd.f32 0.0, %v2071
  %2073 = vmatmul.f32.gmra.mxu0 %v1625
  %v2074 = vpop.f32.mrf.mxu0
  %v2075 = vadd.f32 0.0, %v2074
  %2076 = vmatmul.f32.gmra.mxu0 %v1628
  %v2077 = vpop.f32.mrf.mxu0
  %v2078 = vadd.f32 0.0, %v2077
  %2079 = vmatmul.f32.gmra.mxu0 %v1631
  %v2080 = vpop.f32.mrf.mxu0
  %v2081 = vadd.f32 0.0, %v2080
  %2082 = vmatmul.f32.gmra.mxu0 %v1634
  %v2083 = vpop.f32.mrf.mxu0
  %v2084 = vadd.f32 0.0, %v2083
  %2085 = vmatmul.f32.gmra.mxu0 %v1637
  %v2086 = vpop.f32.mrf.mxu0
  %v2087 = vadd.f32 0.0, %v2086
  %2088 = vmatmul.f32.gmra.mxu0 %v1640
  %v2089 = vpop.f32.mrf.mxu0
  %v2090 = vadd.f32 0.0, %v2089
  %2091 = vmatmul.f32.gmra.mxu0 %v1643
  %v2092 = vpop.f32.mrf.mxu0
  %v2093 = vadd.f32 0.0, %v2092
  %2094 = vmatmul.f32.gmra.mxu0 %v1646
  %v2095 = vpop.f32.mrf.mxu0
  %v2096 = vadd.f32 0.0, %v2095
  %2097 = vmatmul.f32.gmra.mxu0 %v1649
  %v2098 = vpop.f32.mrf.mxu0
  %v2099 = vadd.f32 0.0, %v2098
  %2100 = vmatmul.f32.gmra.mxu0 %v1652
  %v2101 = vpop.f32.mrf.mxu0
  %v2102 = vadd.f32 0.0, %v2101
  %2103 = vmatmul.f32.gmra.mxu0 %v1655
  %v2104 = vpop.f32.mrf.mxu0
  %v2105 = vadd.f32 0.0, %v2104
  %2106 = vmatmul.f32.gmra.mxu0 %v1658
  %v2107 = vpop.f32.mrf.mxu0
  %v2108 = vadd.f32 0.0, %v2107
  %2109 = vmatmul.f32.gmra.mxu0 %v1661
  %v2110 = vpop.f32.mrf.mxu0
  %v2111 = vadd.f32 0.0, %v2110
  %2112 = vmatmul.f32.gmra.mxu0 %v1664
  %v2113 = vpop.f32.mrf.mxu0
  %v2114 = vadd.f32 0.0, %v2113
  %2115 = vmatmul.f32.gmra.mxu0 %v1667
  %v2116 = vpop.f32.mrf.mxu0
  %v2117 = vadd.f32 0.0, %v2116
  %2118 = vmatmul.f32.gmra.mxu0 %v1670
  %v2119 = vpop.f32.mrf.mxu0
  %v2120 = vadd.f32 0.0, %v2119
  %2121 = vmatmul.f32.gmra.mxu0 %v1673
  %v2122 = vpop.f32.mrf.mxu0
  %v2123 = vadd.f32 0.0, %v2122
  %2124 = vmatmul.f32.gmra.mxu0 %v1676
  %v2125 = vpop.f32.mrf.mxu0
  %v2126 = vadd.f32 0.0, %v2125
  %2127 = vmatmul.f32.gmra.mxu0 %v1679
  %v2128 = vpop.f32.mrf.mxu0
  %v2129 = vadd.f32 0.0, %v2128
  %2130 = vmatmul.f32.gmra.mxu0 %v1682
  %v2131 = vpop.f32.mrf.mxu0
  %v2132 = vadd.f32 0.0, %v2131
  %2133 = vmatmul.f32.gmra.mxu0 %v1685
  %v2134 = vpop.f32.mrf.mxu0
  %v2135 = vadd.f32 0.0, %v2134
  %2136 = vmatmul.f32.gmra.mxu0 %v1688
  %v2137 = vpop.f32.mrf.mxu0
  %v2138 = vadd.f32 0.0, %v2137
  %2139 = vmatmul.f32.gmra.mxu0 %v1691
  %v2140 = vpop.f32.mrf.mxu0
  %v2141 = vadd.f32 0.0, %v2140
  %2142 = vmatmul.f32.gmra.mxu0 %v1694
  %v2143 = vpop.f32.mrf.mxu0
  %v2144 = vadd.f32 0.0, %v2143
  %2145 = vmatmul.f32.gmra.mxu0 %v1697
  %v2146 = vpop.f32.mrf.mxu0
  %v2147 = vadd.f32 0.0, %v2146
  %2148 = vmatmul.f32.gmra.mxu0 %v1700
  %v2149 = vpop.f32.mrf.mxu0
  %v2150 = vadd.f32 0.0, %v2149
  %2151 = vmatmul.f32.gmra.mxu0 %v1703
  %v2152 = vpop.f32.mrf.mxu0
  %v2153 = vadd.f32 0.0, %v2152
  %2154 = vmatmul.f32.gmra.mxu0 %v1706
  %v2155 = vpop.f32.mrf.mxu0
  %v2156 = vadd.f32 0.0, %v2155
  %2157 = vmatmul.f32.gmra.mxu0 %v1709
  %v2158 = vpop.f32.mrf.mxu0
  %v2159 = vadd.f32 0.0, %v2158
  %2160 = vmatmul.f32.gmra.mxu0 %v1712
  %v2161 = vpop.f32.mrf.mxu0
  %v2162 = vadd.f32 0.0, %v2161
  %2163 = vmatmul.f32.gmra.mxu0 %v1715
  %v2164 = vpop.f32.mrf.mxu0
  %v2165 = vadd.f32 0.0, %v2164
  %2166 = vmatmul.f32.gmra.mxu0 %v1718
  %v2167 = vpop.f32.mrf.mxu0
  %v2168 = vadd.f32 0.0, %v2167
  %2169 = vmatmul.f32.gmra.mxu0 %v1721
  %v2170 = vpop.f32.mrf.mxu0
  %v2171 = vadd.f32 0.0, %v2170
  %2172 = vmatmul.f32.gmra.mxu0 %v1724
  %v2173 = vpop.f32.mrf.mxu0
  %v2174 = vadd.f32 0.0, %v2173
  %2175 = vmatmul.f32.gmra.mxu0 %v1727
  %v2176 = vpop.f32.mrf.mxu0
  %v2177 = vadd.f32 0.0, %v2176
  %2178 = vmatmul.f32.gmra.mxu0 %v1730
  %v2179 = vpop.f32.mrf.mxu0
  %v2180 = vadd.f32 0.0, %v2179
  %2181 = vmatmul.f32.gmra.mxu0 %v1733
  %v2182 = vpop.f32.mrf.mxu0
  %v2183 = vadd.f32 0.0, %v2182
  %2184 = vmatmul.f32.gmra.mxu0 %v1736
  %v2185 = vpop.f32.mrf.mxu0
  %v2186 = vadd.f32 0.0, %v2185
  %2187 = vmatmul.f32.gmra.mxu0 %v1739
  %v2188 = vpop.f32.mrf.mxu0
  %v2189 = vadd.f32 0.0, %v2188
  %2190 = vmatmul.f32.gmra.mxu0 %v1742
  %v2191 = vpop.f32.mrf.mxu0
  %v2192 = vadd.f32 0.0, %v2191
  %2193 = vmatmul.f32.gmra.mxu0 %v1745
  %v2194 = vpop.f32.mrf.mxu0
  %v2195 = vadd.f32 0.0, %v2194
  %2196 = vmatmul.f32.gmra.mxu0 %v1748
  %v2197 = vpop.f32.mrf.mxu0
  %v2198 = vadd.f32 0.0, %v2197
  %2199 = vmatmul.f32.gmra.mxu0 %v1751
  %v2200 = vpop.f32.mrf.mxu0
  %v2201 = vadd.f32 0.0, %v2200
  %2202 = vmatmul.f32.gmra.mxu0 %v1754
  %v2203 = vpop.f32.mrf.mxu0
  %v2204 = vadd.f32 0.0, %v2203
  %2205 = vmatmul.f32.gmra.mxu0 %v1757
  %v2206 = vpop.f32.mrf.mxu0
  %v2207 = vadd.f32 0.0, %v2206
  %2208 = vmatmul.f32.gmra.mxu0 %v1760
  %v2209 = vpop.f32.mrf.mxu0
  %v2210 = vadd.f32 0.0, %v2209
  %2211 = vmatmul.f32.gmra.mxu0 %v1763
  %v2212 = vpop.f32.mrf.mxu0
  %v2213 = vadd.f32 0.0, %v2212
  %2214 = vmatmul.f32.gmra.mxu0 %v1766
  %v2215 = vpop.f32.mrf.mxu0
  %v2216 = vadd.f32 0.0, %v2215
  %2217 = vmatmul.f32.gmra.mxu0 %v1769
  %v2218 = vpop.f32.mrf.mxu0
  %v2219 = vadd.f32 0.0, %v2218
  %2220 = vmatmul.f32.gmra.mxu0 %v1772
  %v2221 = vpop.f32.mrf.mxu0
  %v2222 = vadd.f32 0.0, %v2221
  %2223 = vmatmul.f32.gmra.mxu0 %v1775
  %v2224 = vpop.f32.mrf.mxu0
  %v2225 = vadd.f32 0.0, %v2224
  %2226 = vmatmul.f32.gmra.mxu0 %v1778
  %v2227 = vpop.f32.mrf.mxu0
  %v2228 = vadd.f32 0.0, %v2227
  %2229 = vmatmul.f32.gmra.mxu0 %v1781
  %v2230 = vpop.f32.mrf.mxu0
  %v2231 = vadd.f32 0.0, %v2230
  %2232 = vmatmul.f32.gmra.mxu0 %v1784
  %v2233 = vpop.f32.mrf.mxu0
  %v2234 = vadd.f32 0.0, %v2233
  %2235 = vmatmul.f32.gmra.mxu0 %v1787
  %v2236 = vpop.f32.mrf.mxu0
  %v2237 = vadd.f32 0.0, %v2236
  %2238 = vmatmul.f32.gmra.mxu0 %v1790
  %v2239 = vpop.f32.mrf.mxu0
  %v2240 = vadd.f32 0.0, %v2239
  %2241 = vmatmul.f32.gmra.mxu0 %v1793
  %v2242 = vpop.f32.mrf.mxu0
  %v2243 = vadd.f32 0.0, %v2242
  %2244 = vmatmul.f32.gmra.mxu0 %v1796
  %v2245 = vpop.f32.mrf.mxu0
  %v2246 = vadd.f32 0.0, %v2245
  %2247 = vdwg.mxu0
  %2248 = vmatpush.msra.mxu0 %v2038
  %2249 = vmatpush.msra.mxu0 %v2037
  %2250 = vmatpush.msra.mxu0 %v2036
  %2251 = vmatpush.msra.mxu0 %v2035
  %2252 = vmatpush.msra.mxu0 %v2034
  %2253 = vmatpush.msra.mxu0 %v2033
  %2254 = vmatpush.msra.mxu0 %v2032
  %2255 = vmatpush.msra.mxu0 %v2031
  %2256 = vmatpush.msra.mxu0 %v2030
  %2257 = vmatpush.msra.mxu0 %v2029
  %2258 = vmatpush.msra.mxu0 %v2028
  %2259 = vmatpush.msra.mxu0 %v2027
  %2260 = vmatpush.msra.mxu0 %v2026
  %2261 = vmatpush.msra.mxu0 %v2025
  %2262 = vmatpush.msra.mxu0 %v2024
  %2263 = vmatpush.msra.mxu0 %v2023
  %2264 = vmatmul.f32.gmra.mxu0 %v1816
  %v2265 = vpop.f32.mrf.mxu0
  %v2266 = vadd.f32 %v2057, %v2265
  %2267 = vmatmul.f32.gmra.mxu0 %v1819
  %v2268 = vpop.f32.mrf.mxu0
  %v2269 = vadd.f32 %v2060, %v2268
  %2270 = vmatmul.f32.gmra.mxu0 %v1822
  %v2271 = vpop.f32.mrf.mxu0
  %v2272 = vadd.f32 %v2063, %v2271
  %2273 = vmatmul.f32.gmra.mxu0 %v1825
  %v2274 = vpop.f32.mrf.mxu0
  %v2275 = vadd.f32 %v2066, %v2274
  %2276 = vmatmul.f32.gmra.mxu0 %v1828
  %v2277 = vpop.f32.mrf.mxu0
  %v2278 = vadd.f32 %v2069, %v2277
  %2279 = vmatmul.f32.gmra.mxu0 %v1831
  %v2280 = vpop.f32.mrf.mxu0
  %v2281 = vadd.f32 %v2072, %v2280
  %2282 = vmatmul.f32.gmra.mxu0 %v1834
  %v2283 = vpop.f32.mrf.mxu0
  %v2284 = vadd.f32 %v2075, %v2283
  %2285 = vmatmul.f32.gmra.mxu0 %v1837
  %v2286 = vpop.f32.mrf.mxu0
  %v2287 = vadd.f32 %v2078, %v2286
  %2288 = vmatmul.f32.gmra.mxu0 %v1840
  %v2289 = vpop.f32.mrf.mxu0
  %v2290 = vadd.f32 %v2081, %v2289
  %2291 = vmatmul.f32.gmra.mxu0 %v1843
  %v2292 = vpop.f32.mrf.mxu0
  %v2293 = vadd.f32 %v2084, %v2292
  %2294 = vmatmul.f32.gmra.mxu0 %v1846
  %v2295 = vpop.f32.mrf.mxu0
  %v2296 = vadd.f32 %v2087, %v2295
  %2297 = vmatmul.f32.gmra.mxu0 %v1849
  %v2298 = vpop.f32.mrf.mxu0
  %v2299 = vadd.f32 %v2090, %v2298
  %2300 = vmatmul.f32.gmra.mxu0 %v1852
  %v2301 = vpop.f32.mrf.mxu0
  %v2302 = vadd.f32 %v2093, %v2301
  %2303 = vmatmul.f32.gmra.mxu0 %v1855
  %v2304 = vpop.f32.mrf.mxu0
  %v2305 = vadd.f32 %v2096, %v2304
  %2306 = vmatmul.f32.gmra.mxu0 %v1858
  %v2307 = vpop.f32.mrf.mxu0
  %v2308 = vadd.f32 %v2099, %v2307
  %2309 = vmatmul.f32.gmra.mxu0 %v1861
  %v2310 = vpop.f32.mrf.mxu0
  %v2311 = vadd.f32 %v2102, %v2310
  %2312 = vmatmul.f32.gmra.mxu0 %v1864
  %v2313 = vpop.f32.mrf.mxu0
  %v2314 = vadd.f32 %v2105, %v2313
  %2315 = vmatmul.f32.gmra.mxu0 %v1867
  %v2316 = vpop.f32.mrf.mxu0
  %v2317 = vadd.f32 %v2108, %v2316
  %2318 = vmatmul.f32.gmra.mxu0 %v1870
  %v2319 = vpop.f32.mrf.mxu0
  %v2320 = vadd.f32 %v2111, %v2319
  %2321 = vmatmul.f32.gmra.mxu0 %v1873
  %v2322 = vpop.f32.mrf.mxu0
  %v2323 = vadd.f32 %v2114, %v2322
  %2324 = vmatmul.f32.gmra.mxu0 %v1876
  %v2325 = vpop.f32.mrf.mxu0
  %v2326 = vadd.f32 %v2117, %v2325
  %2327 = vmatmul.f32.gmra.mxu0 %v1879
  %v2328 = vpop.f32.mrf.mxu0
  %v2329 = vadd.f32 %v2120, %v2328
  %2330 = vmatmul.f32.gmra.mxu0 %v1882
  %v2331 = vpop.f32.mrf.mxu0
  %v2332 = vadd.f32 %v2123, %v2331
  %2333 = vmatmul.f32.gmra.mxu0 %v1885
  %v2334 = vpop.f32.mrf.mxu0
  %v2335 = vadd.f32 %v2126, %v2334
  %2336 = vmatmul.f32.gmra.mxu0 %v1888
  %v2337 = vpop.f32.mrf.mxu0
  %v2338 = vadd.f32 %v2129, %v2337
  %2339 = vmatmul.f32.gmra.mxu0 %v1891
  %v2340 = vpop.f32.mrf.mxu0
  %v2341 = vadd.f32 %v2132, %v2340
  %2342 = vmatmul.f32.gmra.mxu0 %v1894
  %v2343 = vpop.f32.mrf.mxu0
  %v2344 = vadd.f32 %v2135, %v2343
  %2345 = vmatmul.f32.gmra.mxu0 %v1897
  %v2346 = vpop.f32.mrf.mxu0
  %v2347 = vadd.f32 %v2138, %v2346
  %2348 = vmatmul.f32.gmra.mxu0 %v1900
  %v2349 = vpop.f32.mrf.mxu0
  %v2350 = vadd.f32 %v2141, %v2349
  %2351 = vmatmul.f32.gmra.mxu0 %v1903
  %v2352 = vpop.f32.mrf.mxu0
  %v2353 = vadd.f32 %v2144, %v2352
  %2354 = vmatmul.f32.gmra.mxu0 %v1906
  %v2355 = vpop.f32.mrf.mxu0
  %v2356 = vadd.f32 %v2147, %v2355
  %2357 = vmatmul.f32.gmra.mxu0 %v1909
  %v2358 = vpop.f32.mrf.mxu0
  %v2359 = vadd.f32 %v2150, %v2358
  %2360 = vmatmul.f32.gmra.mxu0 %v1912
  %v2361 = vpop.f32.mrf.mxu0
  %v2362 = vadd.f32 %v2153, %v2361
  %2363 = vmatmul.f32.gmra.mxu0 %v1915
  %v2364 = vpop.f32.mrf.mxu0
  %v2365 = vadd.f32 %v2156, %v2364
  %2366 = vmatmul.f32.gmra.mxu0 %v1918
  %v2367 = vpop.f32.mrf.mxu0
  %v2368 = vadd.f32 %v2159, %v2367
  %2369 = vmatmul.f32.gmra.mxu0 %v1921
  %v2370 = vpop.f32.mrf.mxu0
  %v2371 = vadd.f32 %v2162, %v2370
  %2372 = vmatmul.f32.gmra.mxu0 %v1924
  %v2373 = vpop.f32.mrf.mxu0
  %v2374 = vadd.f32 %v2165, %v2373
  %2375 = vmatmul.f32.gmra.mxu0 %v1927
  %v2376 = vpop.f32.mrf.mxu0
  %v2377 = vadd.f32 %v2168, %v2376
  %2378 = vmatmul.f32.gmra.mxu0 %v1930
  %v2379 = vpop.f32.mrf.mxu0
  %v2380 = vadd.f32 %v2171, %v2379
  %2381 = vmatmul.f32.gmra.mxu0 %v1933
  %v2382 = vpop.f32.mrf.mxu0
  %v2383 = vadd.f32 %v2174, %v2382
  %2384 = vmatmul.f32.gmra.mxu0 %v1936
  %v2385 = vpop.f32.mrf.mxu0
  %v2386 = vadd.f32 %v2177, %v2385
  %2387 = vmatmul.f32.gmra.mxu0 %v1939
  %v2388 = vpop.f32.mrf.mxu0
  %v2389 = vadd.f32 %v2180, %v2388
  %2390 = vmatmul.f32.gmra.mxu0 %v1942
  %v2391 = vpop.f32.mrf.mxu0
  %v2392 = vadd.f32 %v2183, %v2391
  %2393 = vmatmul.f32.gmra.mxu0 %v1945
  %v2394 = vpop.f32.mrf.mxu0
  %v2395 = vadd.f32 %v2186, %v2394
  %2396 = vmatmul.f32.gmra.mxu0 %v1948
  %v2397 = vpop.f32.mrf.mxu0
  %v2398 = vadd.f32 %v2189, %v2397
  %2399 = vmatmul.f32.gmra.mxu0 %v1951
  %v2400 = vpop.f32.mrf.mxu0
  %v2401 = vadd.f32 %v2192, %v2400
  %2402 = vmatmul.f32.gmra.mxu0 %v1954
  %v2403 = vpop.f32.mrf.mxu0
  %v2404 = vadd.f32 %v2195, %v2403
  %2405 = vmatmul.f32.gmra.mxu0 %v1957
  %v2406 = vpop.f32.mrf.mxu0
  %v2407 = vadd.f32 %v2198, %v2406
  %2408 = vmatmul.f32.gmra.mxu0 %v1960
  %v2409 = vpop.f32.mrf.mxu0
  %v2410 = vadd.f32 %v2201, %v2409
  %2411 = vmatmul.f32.gmra.mxu0 %v1963
  %v2412 = vpop.f32.mrf.mxu0
  %v2413 = vadd.f32 %v2204, %v2412
  %2414 = vmatmul.f32.gmra.mxu0 %v1966
  %v2415 = vpop.f32.mrf.mxu0
  %v2416 = vadd.f32 %v2207, %v2415
  %2417 = vmatmul.f32.gmra.mxu0 %v1969
  %v2418 = vpop.f32.mrf.mxu0
  %v2419 = vadd.f32 %v2210, %v2418
  %2420 = vmatmul.f32.gmra.mxu0 %v1972
  %v2421 = vpop.f32.mrf.mxu0
  %v2422 = vadd.f32 %v2213, %v2421
  %2423 = vmatmul.f32.gmra.mxu0 %v1975
  %v2424 = vpop.f32.mrf.mxu0
  %v2425 = vadd.f32 %v2216, %v2424
  %2426 = vmatmul.f32.gmra.mxu0 %v1978
  %v2427 = vpop.f32.mrf.mxu0
  %v2428 = vadd.f32 %v2219, %v2427
  %2429 = vmatmul.f32.gmra.mxu0 %v1981
  %v2430 = vpop.f32.mrf.mxu0
  %v2431 = vadd.f32 %v2222, %v2430
  %2432 = vmatmul.f32.gmra.mxu0 %v1984
  %v2433 = vpop.f32.mrf.mxu0
  %v2434 = vadd.f32 %v2225, %v2433
  %2435 = vmatmul.f32.gmra.mxu0 %v1987
  %v2436 = vpop.f32.mrf.mxu0
  %v2437 = vadd.f32 %v2228, %v2436
  %2438 = vmatmul.f32.gmra.mxu0 %v1990
  %v2439 = vpop.f32.mrf.mxu0
  %v2440 = vadd.f32 %v2231, %v2439
  %2441 = vmatmul.f32.gmra.mxu0 %v1993
  %v2442 = vpop.f32.mrf.mxu0
  %v2443 = vadd.f32 %v2234, %v2442
  %2444 = vmatmul.f32.gmra.mxu0 %v1996
  %v2445 = vpop.f32.mrf.mxu0
  %v2446 = vadd.f32 %v2237, %v2445
  %2447 = vmatmul.f32.gmra.mxu0 %v1999
  %v2448 = vpop.f32.mrf.mxu0
  %v2449 = vadd.f32 %v2240, %v2448
  %2450 = vmatmul.f32.gmra.mxu0 %v2002
  %v2451 = vpop.f32.mrf.mxu0
  %v2452 = vadd.f32 %v2243, %v2451
  %2453 = vmatmul.f32.gmra.mxu0 %v2005
  %v2454 = vpop.f32.mrf.mxu0
  %v2455 = vadd.f32 %v2246, %v2454
  %2456 = vdwg.mxu0
  %v2457 = vpack.c.bf16 %v1816, %v1607
  %v2458 = vpack.c.bf16 %v1198, %v1198
  %v2459 = vpack.c.bf16 %v1819, %v1610
  %v2460 = vpack.c.bf16 %v1201, %v1201
  %v2461 = vpack.c.bf16 %v1822, %v1613
  %v2462 = vpack.c.bf16 %v1204, %v1204
  %v2463 = vpack.c.bf16 %v1825, %v1616
  %v2464 = vpack.c.bf16 %v1207, %v1207
  %v2465 = vpack.c.bf16 %v1828, %v1619
  %v2466 = vpack.c.bf16 %v1210, %v1210
  %v2467 = vpack.c.bf16 %v1831, %v1622
  %v2468 = vpack.c.bf16 %v1213, %v1213
  %v2469 = vpack.c.bf16 %v1834, %v1625
  %v2470 = vpack.c.bf16 %v1216, %v1216
  %v2471 = vpack.c.bf16 %v1837, %v1628
  %v2472 = vpack.c.bf16 %v1219, %v1219
  %v2473 = vpack.c.bf16 %v1840, %v1631
  %v2474 = vpack.c.bf16 %v1222, %v1222
  %v2475 = vpack.c.bf16 %v1843, %v1634
  %v2476 = vpack.c.bf16 %v1225, %v1225
  %v2477 = vpack.c.bf16 %v1846, %v1637
  %v2478 = vpack.c.bf16 %v1228, %v1228
  %v2479 = vpack.c.bf16 %v1849, %v1640
  %v2480 = vpack.c.bf16 %v1231, %v1231
  %v2481 = vpack.c.bf16 %v1852, %v1643
  %v2482 = vpack.c.bf16 %v1234, %v1234
  %v2483 = vpack.c.bf16 %v1855, %v1646
  %v2484 = vpack.c.bf16 %v1237, %v1237
  %v2485 = vpack.c.bf16 %v1858, %v1649
  %v2486 = vpack.c.bf16 %v1240, %v1240
  %v2487 = vpack.c.bf16 %v1861, %v1652
  %v2488 = vpack.c.bf16 %v1243, %v1243
  %v2489 = vpack.c.bf16 %v1864, %v1655
  %v2490 = vpack.c.bf16 %v1246, %v1246
  %v2491 = vpack.c.bf16 %v1867, %v1658
  %v2492 = vpack.c.bf16 %v1249, %v1249
  %v2493 = vpack.c.bf16 %v1870, %v1661
  %v2494 = vpack.c.bf16 %v1252, %v1252
  %v2495 = vpack.c.bf16 %v1873, %v1664
  %v2496 = vpack.c.bf16 %v1255, %v1255
  %v2497 = vpack.c.bf16 %v1876, %v1667
  %v2498 = vpack.c.bf16 %v1258, %v1258
  %v2499 = vpack.c.bf16 %v1879, %v1670
  %v2500 = vpack.c.bf16 %v1261, %v1261
  %v2501 = vpack.c.bf16 %v1882, %v1673
  %v2502 = vpack.c.bf16 %v1264, %v1264
  %v2503 = vpack.c.bf16 %v1885, %v1676
  %v2504 = vpack.c.bf16 %v1267, %v1267
  %v2505 = vpack.c.bf16 %v1888, %v1679
  %v2506 = vpack.c.bf16 %v1270, %v1270
  %v2507 = vpack.c.bf16 %v1891, %v1682
  %v2508 = vpack.c.bf16 %v1273, %v1273
  %v2509 = vpack.c.bf16 %v1894, %v1685
  %v2510 = vpack.c.bf16 %v1276, %v1276
  %v2511 = vpack.c.bf16 %v1897, %v1688
  %v2512 = vpack.c.bf16 %v1279, %v1279
  %v2513 = vpack.c.bf16 %v1900, %v1691
  %v2514 = vpack.c.bf16 %v1282, %v1282
  %v2515 = vpack.c.bf16 %v1903, %v1694
  %v2516 = vpack.c.bf16 %v1285, %v1285
  %v2517 = vpack.c.bf16 %v1906, %v1697
  %v2518 = vpack.c.bf16 %v1288, %v1288
  %v2519 = vpack.c.bf16 %v1909, %v1700
  %v2520 = vpack.c.bf16 %v1291, %v1291
  %v2521 = vpack.c.bf16 %v1912, %v1703
  %v2522 = vpack.c.bf16 %v1294, %v1294
  %v2523 = vpack.c.bf16 %v1915, %v1706
  %v2524 = vpack.c.bf16 %v1297, %v1297
  %v2525 = vpack.c.bf16 %v1918, %v1709
  %v2526 = vpack.c.bf16 %v1300, %v1300
  %v2527 = vpack.c.bf16 %v1921, %v1712
  %v2528 = vpack.c.bf16 %v1303, %v1303
  %v2529 = vpack.c.bf16 %v1924, %v1715
  %v2530 = vpack.c.bf16 %v1306, %v1306
  %v2531 = vpack.c.bf16 %v1927, %v1718
  %v2532 = vpack.c.bf16 %v1309, %v1309
  %v2533 = vpack.c.bf16 %v1930, %v1721
  %v2534 = vpack.c.bf16 %v1312, %v1312
  %v2535 = vpack.c.bf16 %v1933, %v1724
  %v2536 = vpack.c.bf16 %v1315, %v1315
  %v2537 = vpack.c.bf16 %v1936, %v1727
  %v2538 = vpack.c.bf16 %v1318, %v1318
  %v2539 = vpack.c.bf16 %v1939, %v1730
  %v2540 = vpack.c.bf16 %v1321, %v1321
  %v2541 = vpack.c.bf16 %v1942, %v1733
  %v2542 = vpack.c.bf16 %v1324, %v1324
  %v2543 = vpack.c.bf16 %v1945, %v1736
  %v2544 = vpack.c.bf16 %v1327, %v1327
  %v2545 = vpack.c.bf16 %v1948, %v1739
  %v2546 = vpack.c.bf16 %v1330, %v1330
  %v2547 = vpack.c.bf16 %v1951, %v1742
  %v2548 = vpack.c.bf16 %v1333, %v1333
  %v2549 = vpack.c.bf16 %v1954, %v1745
  %v2550 = vpack.c.bf16 %v1336, %v1336
  %v2551 = vpack.c.bf16 %v1957, %v1748
  %v2552 = vpack.c.bf16 %v1339, %v1339
  %v2553 = vpack.c.bf16 %v1960, %v1751
  %v2554 = vpack.c.bf16 %v1342, %v1342
  %v2555 = vpack.c.bf16 %v1963, %v1754
  %v2556 = vpack.c.bf16 %v1345, %v1345
  %v2557 = vpack.c.bf16 %v1966, %v1757
  %v2558 = vpack.c.bf16 %v1348, %v1348
  %v2559 = vpack.c.bf16 %v1969, %v1760
  %v2560 = vpack.c.bf16 %v1351, %v1351
  %v2561 = vpack.c.bf16 %v1972, %v1763
  %v2562 = vpack.c.bf16 %v1354, %v1354
  %v2563 = vpack.c.bf16 %v1975, %v1766
  %v2564 = vpack.c.bf16 %v1357, %v1357
  %v2565 = vpack.c.bf16 %v1978, %v1769
  %v2566 = vpack.c.bf16 %v1360, %v1360
  %v2567 = vpack.c.bf16 %v1981, %v1772
  %v2568 = vpack.c.bf16 %v1363, %v1363
  %v2569 = vpack.c.bf16 %v1984, %v1775
  %v2570 = vpack.c.bf16 %v1366, %v1366
  %v2571 = vpack.c.bf16 %v1987, %v1778
  %v2572 = vpack.c.bf16 %v1369, %v1369
  %v2573 = vpack.c.bf16 %v1990, %v1781
  %v2574 = vpack.c.bf16 %v1372, %v1372
  %v2575 = vpack.c.bf16 %v1993, %v1784
  %v2576 = vpack.c.bf16 %v1375, %v1375
  %v2577 = vpack.c.bf16 %v1996, %v1787
  %v2578 = vpack.c.bf16 %v1378, %v1378
  %v2579 = vpack.c.bf16 %v1999, %v1790
  %v2580 = vpack.c.bf16 %v1381, %v1381
  %v2581 = vpack.c.bf16 %v2002, %v1793
  %v2582 = vpack.c.bf16 %v1384, %v1384
  %v2583 = vpack.c.bf16 %v2005, %v1796
  %v2584 = vpack.c.bf16 %v1387, %v1387
  %2585 = vst [vmem:[%s10] sm:$0xff] %v2457
  %vm2586 = vcmask 257024
  %2587 = vst.msk [vmem:[%s10 + $0x8] sm:$0xf] %vm2586, %v2458
  %2588 = vst [vmem:[%s10 + $0xc] sm:$0xff] %v2459
  %2589 = vst.msk [vmem:[%s10 + $0x14] sm:$0xf] %vm2586, %v2460
  %2590 = vst [vmem:[%s10 + $0x18] sm:$0xff] %v2461
  %2591 = vst.msk [vmem:[%s10 + $0x20] sm:$0xf] %vm2586, %v2462
  %2592 = vst [vmem:[%s10 + $0x24] sm:$0xff] %v2463
  %2593 = vst.msk [vmem:[%s10 + $0x2c] sm:$0xf] %vm2586, %v2464
  %2594 = vst [vmem:[%s10 + $0x30] sm:$0xff] %v2465
  %2595 = vst.msk [vmem:[%s10 + $0x38] sm:$0xf] %vm2586, %v2466
  %2596 = vst [vmem:[%s10 + $0x3c] sm:$0xff] %v2467
  %2597 = vst.msk [vmem:[%s10 + $0x44] sm:$0xf] %vm2586, %v2468
  %2598 = vst [vmem:[%s10 + $0x48] sm:$0xff] %v2469
  %2599 = vst.msk [vmem:[%s10 + $0x50] sm:$0xf] %vm2586, %v2470
  %2600 = vst [vmem:[%s10 + $0x54] sm:$0xff] %v2471
  %2601 = vst.msk [vmem:[%s10 + $0x5c] sm:$0xf] %vm2586, %v2472
  %2602 = vst [vmem:[%s10 + $0x60] sm:$0xff] %v2473
  %2603 = vst.msk [vmem:[%s10 + $0x68] sm:$0xf] %vm2586, %v2474
  %2604 = vst [vmem:[%s10 + $0x6c] sm:$0xff] %v2475
  %2605 = vst.msk [vmem:[%s10 + $0x74] sm:$0xf] %vm2586, %v2476
  %2606 = vst [vmem:[%s10 + $0x78] sm:$0xff] %v2477
  %2607 = vst.msk [vmem:[%s10 + $0x80] sm:$0xf] %vm2586, %v2478
  %2608 = vst [vmem:[%s10 + $0x84] sm:$0xff] %v2479
  %2609 = vst.msk [vmem:[%s10 + $0x8c] sm:$0xf] %vm2586, %v2480
  %2610 = vst [vmem:[%s10 + $0x90] sm:$0xff] %v2481
  %2611 = vst.msk [vmem:[%s10 + $0x98] sm:$0xf] %vm2586, %v2482
  %2612 = vst [vmem:[%s10 + $0x9c] sm:$0xff] %v2483
  %2613 = vst.msk [vmem:[%s10 + $0xa4] sm:$0xf] %vm2586, %v2484
  %2614 = vst [vmem:[%s10 + $0xa8] sm:$0xff] %v2485
  %2615 = vst.msk [vmem:[%s10 + $0xb0] sm:$0xf] %vm2586, %v2486
  %2616 = vst [vmem:[%s10 + $0xb4] sm:$0xff] %v2487
  %2617 = vst.msk [vmem:[%s10 + $0xbc] sm:$0xf] %vm2586, %v2488
  %2618 = vst [vmem:[%s10 + $0xc0] sm:$0xff] %v2489
  %2619 = vst.msk [vmem:[%s10 + $0xc8] sm:$0xf] %vm2586, %v2490
  %2620 = vst [vmem:[%s10 + $0xcc] sm:$0xff] %v2491
  %2621 = vst.msk [vmem:[%s10 + $0xd4] sm:$0xf] %vm2586, %v2492
  %2622 = vst [vmem:[%s10 + $0xd8] sm:$0xff] %v2493
  %2623 = vst.msk [vmem:[%s10 + $0xe0] sm:$0xf] %vm2586, %v2494
  %2624 = vst [vmem:[%s10 + $0xe4] sm:$0xff] %v2495
  %2625 = vst.msk [vmem:[%s10 + $0xec] sm:$0xf] %vm2586, %v2496
  %2626 = vst [vmem:[%s10 + $0xf0] sm:$0xff] %v2497
  %2627 = vst.msk [vmem:[%s10 + $0xf8] sm:$0xf] %vm2586, %v2498
  %2628 = vst [vmem:[%s10 + $0xfc] sm:$0xff] %v2499
  %2629 = vst.msk [vmem:[%s10 + $0x104] sm:$0xf] %vm2586, %v2500
  %2630 = vst [vmem:[%s10 + $0x108] sm:$0xff] %v2501
  %2631 = vst.msk [vmem:[%s10 + $0x110] sm:$0xf] %vm2586, %v2502
  %2632 = vst [vmem:[%s10 + $0x114] sm:$0xff] %v2503
  %2633 = vst.msk [vmem:[%s10 + $0x11c] sm:$0xf] %vm2586, %v2504
  %2634 = vst [vmem:[%s10 + $0x120] sm:$0xff] %v2505
  %2635 = vst.msk [vmem:[%s10 + $0x128] sm:$0xf] %vm2586, %v2506
  %2636 = vst [vmem:[%s10 + $0x12c] sm:$0xff] %v2507
  %2637 = vst.msk [vmem:[%s10 + $0x134] sm:$0xf] %vm2586, %v2508
  %2638 = vst [vmem:[%s10 + $0x138] sm:$0xff] %v2509
  %2639 = vst.msk [vmem:[%s10 + $0x140] sm:$0xf] %vm2586, %v2510
  %2640 = vst [vmem:[%s10 + $0x144] sm:$0xff] %v2511
  %2641 = vst.msk [vmem:[%s10 + $0x14c] sm:$0xf] %vm2586, %v2512
  %2642 = vst [vmem:[%s10 + $0x150] sm:$0xff] %v2513
  %2643 = vst.msk [vmem:[%s10 + $0x158] sm:$0xf] %vm2586, %v2514
  %2644 = vst [vmem:[%s10 + $0x15c] sm:$0xff] %v2515
  %2645 = vst.msk [vmem:[%s10 + $0x164] sm:$0xf] %vm2586, %v2516
  %2646 = vst [vmem:[%s10 + $0x168] sm:$0xff] %v2517
  %2647 = vst.msk [vmem:[%s10 + $0x170] sm:$0xf] %vm2586, %v2518
  %2648 = vst [vmem:[%s10 + $0x174] sm:$0xff] %v2519
  %2649 = vst.msk [vmem:[%s10 + $0x17c] sm:$0xf] %vm2586, %v2520
  %2650 = vst [vmem:[%s10 + $0x180] sm:$0xff] %v2521
  %2651 = vst.msk [vmem:[%s10 + $0x188] sm:$0xf] %vm2586, %v2522
  %2652 = vst [vmem:[%s10 + $0x18c] sm:$0xff] %v2523
  %2653 = vst.msk [vmem:[%s10 + $0x194] sm:$0xf] %vm2586, %v2524
  %2654 = vst [vmem:[%s10 + $0x198] sm:$0xff] %v2525
  %2655 = vst.msk [vmem:[%s10 + $0x1a0] sm:$0xf] %vm2586, %v2526
  %2656 = vst [vmem:[%s10 + $0x1a4] sm:$0xff] %v2527
  %2657 = vst.msk [vmem:[%s10 + $0x1ac] sm:$0xf] %vm2586, %v2528
  %2658 = vst [vmem:[%s10 + $0x1b0] sm:$0xff] %v2529
  %2659 = vst.msk [vmem:[%s10 + $0x1b8] sm:$0xf] %vm2586, %v2530
  %2660 = vst [vmem:[%s10 + $0x1bc] sm:$0xff] %v2531
  %2661 = vst.msk [vmem:[%s10 + $0x1c4] sm:$0xf] %vm2586, %v2532
  %2662 = vst [vmem:[%s10 + $0x1c8] sm:$0xff] %v2533
  %2663 = vst.msk [vmem:[%s10 + $0x1d0] sm:$0xf] %vm2586, %v2534
  %2664 = vst [vmem:[%s10 + $0x1d4] sm:$0xff] %v2535
  %2665 = vst.msk [vmem:[%s10 + $0x1dc] sm:$0xf] %vm2586, %v2536
  %2666 = vst [vmem:[%s10 + $0x1e0] sm:$0xff] %v2537
  %2667 = vst.msk [vmem:[%s10 + $0x1e8] sm:$0xf] %vm2586, %v2538
  %2668 = vst [vmem:[%s10 + $0x1ec] sm:$0xff] %v2539
  %2669 = vst.msk [vmem:[%s10 + $0x1f4] sm:$0xf] %vm2586, %v2540
  %2670 = vst [vmem:[%s10 + $0x1f8] sm:$0xff] %v2541
  %2671 = vst.msk [vmem:[%s10 + $0x200] sm:$0xf] %vm2586, %v2542
  %2672 = vst [vmem:[%s10 + $0x204] sm:$0xff] %v2543
  %2673 = vst.msk [vmem:[%s10 + $0x20c] sm:$0xf] %vm2586, %v2544
  %2674 = vst [vmem:[%s10 + $0x210] sm:$0xff] %v2545
  %2675 = vst.msk [vmem:[%s10 + $0x218] sm:$0xf] %vm2586, %v2546
  %2676 = vst [vmem:[%s10 + $0x21c] sm:$0xff] %v2547
  %2677 = vst.msk [vmem:[%s10 + $0x224] sm:$0xf] %vm2586, %v2548
  %2678 = vst [vmem:[%s10 + $0x228] sm:$0xff] %v2549
  %2679 = vst.msk [vmem:[%s10 + $0x230] sm:$0xf] %vm2586, %v2550
  %2680 = vst [vmem:[%s10 + $0x234] sm:$0xff] %v2551
  %2681 = vst.msk [vmem:[%s10 + $0x23c] sm:$0xf] %vm2586, %v2552
  %2682 = vst [vmem:[%s10 + $0x240] sm:$0xff] %v2553
  %2683 = vst.msk [vmem:[%s10 + $0x248] sm:$0xf] %vm2586, %v2554
  %2684 = vst [vmem:[%s10 + $0x24c] sm:$0xff] %v2555
  %2685 = vst.msk [vmem:[%s10 + $0x254] sm:$0xf] %vm2586, %v2556
  %2686 = vst [vmem:[%s10 + $0x258] sm:$0xff] %v2557
  %2687 = vst.msk [vmem:[%s10 + $0x260] sm:$0xf] %vm2586, %v2558
  %2688 = vst [vmem:[%s10 + $0x264] sm:$0xff] %v2559
  %2689 = vst.msk [vmem:[%s10 + $0x26c] sm:$0xf] %vm2586, %v2560
  %2690 = vst [vmem:[%s10 + $0x270] sm:$0xff] %v2561
  %2691 = vst.msk [vmem:[%s10 + $0x278] sm:$0xf] %vm2586, %v2562
  %2692 = vst [vmem:[%s10 + $0x27c] sm:$0xff] %v2563
  %2693 = vst.msk [vmem:[%s10 + $0x284] sm:$0xf] %vm2586, %v2564
  %2694 = vst [vmem:[%s10 + $0x288] sm:$0xff] %v2565
  %2695 = vst.msk [vmem:[%s10 + $0x290] sm:$0xf] %vm2586, %v2566
  %2696 = vst [vmem:[%s10 + $0x294] sm:$0xff] %v2567
  %2697 = vst.msk [vmem:[%s10 + $0x29c] sm:$0xf] %vm2586, %v2568
  %2698 = vst [vmem:[%s10 + $0x2a0] sm:$0xff] %v2569
  %2699 = vst.msk [vmem:[%s10 + $0x2a8] sm:$0xf] %vm2586, %v2570
  %2700 = vst [vmem:[%s10 + $0x2ac] sm:$0xff] %v2571
  %2701 = vst.msk [vmem:[%s10 + $0x2b4] sm:$0xf] %vm2586, %v2572
  %2702 = vst [vmem:[%s10 + $0x2b8] sm:$0xff] %v2573
  %2703 = vst.msk [vmem:[%s10 + $0x2c0] sm:$0xf] %vm2586, %v2574
  %2704 = vst [vmem:[%s10 + $0x2c4] sm:$0xff] %v2575
  %2705 = vst.msk [vmem:[%s10 + $0x2cc] sm:$0xf] %vm2586, %v2576
  %2706 = vst [vmem:[%s10 + $0x2d0] sm:$0xff] %v2577
  %2707 = vst.msk [vmem:[%s10 + $0x2d8] sm:$0xf] %vm2586, %v2578
  %2708 = vst [vmem:[%s10 + $0x2dc] sm:$0xff] %v2579
  %2709 = vst.msk [vmem:[%s10 + $0x2e4] sm:$0xf] %vm2586, %v2580
  %2710 = vst [vmem:[%s10 + $0x2e8] sm:$0xff] %v2581
  %2711 = vst.msk [vmem:[%s10 + $0x2f0] sm:$0xf] %vm2586, %v2582
  %2712 = vst [vmem:[%s10 + $0x2f4] sm:$0xff] %v2583
  %2713 = vst.msk [vmem:[%s10 + $0x2fc] sm:$0xf] %vm2586, %v2584
  %v2714 = vld [vmem:[%s7] sm:$0x1]
  %v2716 = vperm.slane %v2714, 0
  %2717 = vrot.lane.b32.xlu0 %v2716, 32
  %v2718 = vpop.permute.xlu0 %2717
  %v2720 = vadd.f32 %v1198, %v2718
  %v2721 = vadd.f32 %v1201, %v2718
  %v2722 = vadd.f32 %v1204, %v2718
  %v2723 = vadd.f32 %v1207, %v2718
  %v2724 = vadd.f32 %v1210, %v2718
  %v2725 = vadd.f32 %v1213, %v2718
  %v2726 = vadd.f32 %v1216, %v2718
  %v2727 = vadd.f32 %v1219, %v2718
  %v2728 = vadd.f32 %v1222, %v2718
  %v2729 = vadd.f32 %v1225, %v2718
  %v2730 = vadd.f32 %v1228, %v2718
  %v2731 = vadd.f32 %v1231, %v2718
  %v2732 = vadd.f32 %v1234, %v2718
  %v2733 = vadd.f32 %v1237, %v2718
  %v2734 = vadd.f32 %v1240, %v2718
  %v2735 = vadd.f32 %v1243, %v2718
  %v2736 = vadd.f32 %v1246, %v2718
  %v2737 = vadd.f32 %v1249, %v2718
  %v2738 = vadd.f32 %v1252, %v2718
  %v2739 = vadd.f32 %v1255, %v2718
  %v2740 = vadd.f32 %v1258, %v2718
  %v2741 = vadd.f32 %v1261, %v2718
  %v2742 = vadd.f32 %v1264, %v2718
  %v2743 = vadd.f32 %v1267, %v2718
  %v2744 = vadd.f32 %v1270, %v2718
  %v2745 = vadd.f32 %v1273, %v2718
  %v2746 = vadd.f32 %v1276, %v2718
  %v2747 = vadd.f32 %v1279, %v2718
  %v2748 = vadd.f32 %v1282, %v2718
  %v2749 = vadd.f32 %v1285, %v2718
  %v2750 = vadd.f32 %v1288, %v2718
  %v2751 = vadd.f32 %v1291, %v2718
  %v2752 = vadd.f32 %v1294, %v2718
  %v2753 = vadd.f32 %v1297, %v2718
  %v2754 = vadd.f32 %v1300, %v2718
  %v2755 = vadd.f32 %v1303, %v2718
  %v2756 = vadd.f32 %v1306, %v2718
  %v2757 = vadd.f32 %v1309, %v2718
  %v2758 = vadd.f32 %v1312, %v2718
  %v2759 = vadd.f32 %v1315, %v2718
  %v2760 = vadd.f32 %v1318, %v2718
  %v2761 = vadd.f32 %v1321, %v2718
  %v2762 = vadd.f32 %v1324, %v2718
  %v2763 = vadd.f32 %v1327, %v2718
  %v2764 = vadd.f32 %v1330, %v2718
  %v2765 = vadd.f32 %v1333, %v2718
  %v2766 = vadd.f32 %v1336, %v2718
  %v2767 = vadd.f32 %v1339, %v2718
  %v2768 = vadd.f32 %v1342, %v2718
  %v2769 = vadd.f32 %v1345, %v2718
  %v2770 = vadd.f32 %v1348, %v2718
  %v2771 = vadd.f32 %v1351, %v2718
  %v2772 = vadd.f32 %v1354, %v2718
  %v2773 = vadd.f32 %v1357, %v2718
  %v2774 = vadd.f32 %v1360, %v2718
  %v2775 = vadd.f32 %v1363, %v2718
  %v2776 = vadd.f32 %v1366, %v2718
  %v2777 = vadd.f32 %v1369, %v2718
  %v2778 = vadd.f32 %v1372, %v2718
  %v2779 = vadd.f32 %v1375, %v2718
  %v2780 = vadd.f32 %v1378, %v2718
  %v2781 = vadd.f32 %v1381, %v2718
  %v2782 = vadd.f32 %v1384, %v2718
  %v2783 = vadd.f32 %v1387, %v2718
  %2848 = vrot.lane.b32.xlu0 %v2720, 96
  %v2849 = vpop.permute.xlu0 %2848
  %2850 = vrot.lane.b32.xlu0 %v2721, 96
  %v2851 = vpop.permute.xlu0 %2850
  %2852 = vrot.lane.b32.xlu0 %v2722, 96
  %v2853 = vpop.permute.xlu0 %2852
  %2854 = vrot.lane.b32.xlu0 %v2723, 96
  %v2855 = vpop.permute.xlu0 %2854
  %2856 = vrot.lane.b32.xlu0 %v2724, 96
  %v2857 = vpop.permute.xlu0 %2856
  %2858 = vrot.lane.b32.xlu0 %v2725, 96
  %v2859 = vpop.permute.xlu0 %2858
  %2860 = vrot.lane.b32.xlu0 %v2726, 96
  %v2861 = vpop.permute.xlu0 %2860
  %2862 = vrot.lane.b32.xlu0 %v2727, 96
  %v2863 = vpop.permute.xlu0 %2862
  %2864 = vrot.lane.b32.xlu0 %v2728, 96
  %v2865 = vpop.permute.xlu0 %2864
  %2866 = vrot.lane.b32.xlu0 %v2729, 96
  %v2867 = vpop.permute.xlu0 %2866
  %2868 = vrot.lane.b32.xlu0 %v2730, 96
  %v2869 = vpop.permute.xlu0 %2868
  %2870 = vrot.lane.b32.xlu0 %v2731, 96
  %v2871 = vpop.permute.xlu0 %2870
  %2872 = vrot.lane.b32.xlu0 %v2732, 96
  %v2873 = vpop.permute.xlu0 %2872
  %2874 = vrot.lane.b32.xlu0 %v2733, 96
  %v2875 = vpop.permute.xlu0 %2874
  %2876 = vrot.lane.b32.xlu0 %v2734, 96
  %v2877 = vpop.permute.xlu0 %2876
  %2878 = vrot.lane.b32.xlu0 %v2735, 96
  %v2879 = vpop.permute.xlu0 %2878
  %2880 = vrot.lane.b32.xlu0 %v2736, 96
  %v2881 = vpop.permute.xlu0 %2880
  %2882 = vrot.lane.b32.xlu0 %v2737, 96
  %v2883 = vpop.permute.xlu0 %2882
  %2884 = vrot.lane.b32.xlu0 %v2738, 96
  %v2885 = vpop.permute.xlu0 %2884
  %2886 = vrot.lane.b32.xlu0 %v2739, 96
  %v2887 = vpop.permute.xlu0 %2886
  %2888 = vrot.lane.b32.xlu0 %v2740, 96
  %v2889 = vpop.permute.xlu0 %2888
  %2890 = vrot.lane.b32.xlu0 %v2741, 96
  %v2891 = vpop.permute.xlu0 %2890
  %2892 = vrot.lane.b32.xlu0 %v2742, 96
  %v2893 = vpop.permute.xlu0 %2892
  %2894 = vrot.lane.b32.xlu0 %v2743, 96
  %v2895 = vpop.permute.xlu0 %2894
  %2896 = vrot.lane.b32.xlu0 %v2744, 96
  %v2897 = vpop.permute.xlu0 %2896
  %2898 = vrot.lane.b32.xlu0 %v2745, 96
  %v2899 = vpop.permute.xlu0 %2898
  %2900 = vrot.lane.b32.xlu0 %v2746, 96
  %v2901 = vpop.permute.xlu0 %2900
  %2902 = vrot.lane.b32.xlu0 %v2747, 96
  %v2903 = vpop.permute.xlu0 %2902
  %2904 = vrot.lane.b32.xlu0 %v2748, 96
  %v2905 = vpop.permute.xlu0 %2904
  %2906 = vrot.lane.b32.xlu0 %v2749, 96
  %v2907 = vpop.permute.xlu0 %2906
  %2908 = vrot.lane.b32.xlu0 %v2750, 96
  %v2909 = vpop.permute.xlu0 %2908
  %2910 = vrot.lane.b32.xlu0 %v2751, 96
  %v2911 = vpop.permute.xlu0 %2910
  %2912 = vrot.lane.b32.xlu0 %v2752, 96
  %v2913 = vpop.permute.xlu0 %2912
  %2914 = vrot.lane.b32.xlu0 %v2753, 96
  %v2915 = vpop.permute.xlu0 %2914
  %2916 = vrot.lane.b32.xlu0 %v2754, 96
  %v2917 = vpop.permute.xlu0 %2916
  %2918 = vrot.lane.b32.xlu0 %v2755, 96
  %v2919 = vpop.permute.xlu0 %2918
  %2920 = vrot.lane.b32.xlu0 %v2756, 96
  %v2921 = vpop.permute.xlu0 %2920
  %2922 = vrot.lane.b32.xlu0 %v2757, 96
  %v2923 = vpop.permute.xlu0 %2922
  %2924 = vrot.lane.b32.xlu0 %v2758, 96
  %v2925 = vpop.permute.xlu0 %2924
  %2926 = vrot.lane.b32.xlu0 %v2759, 96
  %v2927 = vpop.permute.xlu0 %2926
  %2928 = vrot.lane.b32.xlu0 %v2760, 96
  %v2929 = vpop.permute.xlu0 %2928
  %2930 = vrot.lane.b32.xlu0 %v2761, 96
  %v2931 = vpop.permute.xlu0 %2930
  %2932 = vrot.lane.b32.xlu0 %v2762, 96
  %v2933 = vpop.permute.xlu0 %2932
  %2934 = vrot.lane.b32.xlu0 %v2763, 96
  %v2935 = vpop.permute.xlu0 %2934
  %2936 = vrot.lane.b32.xlu0 %v2764, 96
  %v2937 = vpop.permute.xlu0 %2936
  %2938 = vrot.lane.b32.xlu0 %v2765, 96
  %v2939 = vpop.permute.xlu0 %2938
  %2940 = vrot.lane.b32.xlu0 %v2766, 96
  %v2941 = vpop.permute.xlu0 %2940
  %2942 = vrot.lane.b32.xlu0 %v2767, 96
  %v2943 = vpop.permute.xlu0 %2942
  %2944 = vrot.lane.b32.xlu0 %v2768, 96
  %v2945 = vpop.permute.xlu0 %2944
  %2946 = vrot.lane.b32.xlu0 %v2769, 96
  %v2947 = vpop.permute.xlu0 %2946
  %2948 = vrot.lane.b32.xlu0 %v2770, 96
  %v2949 = vpop.permute.xlu0 %2948
  %2950 = vrot.lane.b32.xlu0 %v2771, 96
  %v2951 = vpop.permute.xlu0 %2950
  %2952 = vrot.lane.b32.xlu0 %v2772, 96
  %v2953 = vpop.permute.xlu0 %2952
  %2954 = vrot.lane.b32.xlu0 %v2773, 96
  %v2955 = vpop.permute.xlu0 %2954
  %2956 = vrot.lane.b32.xlu0 %v2774, 96
  %v2957 = vpop.permute.xlu0 %2956
  %2958 = vrot.lane.b32.xlu0 %v2775, 96
  %v2959 = vpop.permute.xlu0 %2958
  %2960 = vrot.lane.b32.xlu0 %v2776, 96
  %v2961 = vpop.permute.xlu0 %2960
  %2962 = vrot.lane.b32.xlu0 %v2777, 96
  %v2963 = vpop.permute.xlu0 %2962
  %2964 = vrot.lane.b32.xlu0 %v2778, 96
  %v2965 = vpop.permute.xlu0 %2964
  %2966 = vrot.lane.b32.xlu0 %v2779, 96
  %v2967 = vpop.permute.xlu0 %2966
  %2968 = vrot.lane.b32.xlu0 %v2780, 96
  %v2969 = vpop.permute.xlu0 %2968
  %2970 = vrot.lane.b32.xlu0 %v2781, 96
  %v2971 = vpop.permute.xlu0 %2970
  %2972 = vrot.lane.b32.xlu0 %v2782, 96
  %v2973 = vpop.permute.xlu0 %2972
  %2974 = vrot.lane.b32.xlu0 %v2783, 96
  %v2975 = vpop.permute.xlu0 %2974
  %3104 = vrot.lane.b32.xlu0 %v2266, 32
  %v3105 = vpop.permute.xlu0 %3104
  %3106 = vrot.lane.b32.xlu0 %v2269, 32
  %v3107 = vpop.permute.xlu0 %3106
  %3108 = vrot.lane.b32.xlu0 %v2272, 32
  %v3109 = vpop.permute.xlu0 %3108
  %3110 = vrot.lane.b32.xlu0 %v2275, 32
  %v3111 = vpop.permute.xlu0 %3110
  %3112 = vrot.lane.b32.xlu0 %v2278, 32
  %v3113 = vpop.permute.xlu0 %3112
  %3114 = vrot.lane.b32.xlu0 %v2281, 32
  %v3115 = vpop.permute.xlu0 %3114
  %3116 = vrot.lane.b32.xlu0 %v2284, 32
  %v3117 = vpop.permute.xlu0 %3116
  %3118 = vrot.lane.b32.xlu0 %v2287, 32
  %v3119 = vpop.permute.xlu0 %3118
  %3120 = vrot.lane.b32.xlu0 %v2290, 32
  %v3121 = vpop.permute.xlu0 %3120
  %3122 = vrot.lane.b32.xlu0 %v2293, 32
  %v3123 = vpop.permute.xlu0 %3122
  %3124 = vrot.lane.b32.xlu0 %v2296, 32
  %v3125 = vpop.permute.xlu0 %3124
  %3126 = vrot.lane.b32.xlu0 %v2299, 32
  %v3127 = vpop.permute.xlu0 %3126
  %3128 = vrot.lane.b32.xlu0 %v2302, 32
  %v3129 = vpop.permute.xlu0 %3128
  %3130 = vrot.lane.b32.xlu0 %v2305, 32
  %v3131 = vpop.permute.xlu0 %3130
  %3132 = vrot.lane.b32.xlu0 %v2308, 32
  %v3133 = vpop.permute.xlu0 %3132
  %3134 = vrot.lane.b32.xlu0 %v2311, 32
  %v3135 = vpop.permute.xlu0 %3134
  %3136 = vrot.lane.b32.xlu0 %v2314, 32
  %v3137 = vpop.permute.xlu0 %3136
  %3138 = vrot.lane.b32.xlu0 %v2317, 32
  %v3139 = vpop.permute.xlu0 %3138
  %3140 = vrot.lane.b32.xlu0 %v2320, 32
  %v3141 = vpop.permute.xlu0 %3140
  %3142 = vrot.lane.b32.xlu0 %v2323, 32
  %v3143 = vpop.permute.xlu0 %3142
  %3144 = vrot.lane.b32.xlu0 %v2326, 32
  %v3145 = vpop.permute.xlu0 %3144
  %3146 = vrot.lane.b32.xlu0 %v2329, 32
  %v3147 = vpop.permute.xlu0 %3146
  %3148 = vrot.lane.b32.xlu0 %v2332, 32
  %v3149 = vpop.permute.xlu0 %3148
  %3150 = vrot.lane.b32.xlu0 %v2335, 32
  %v3151 = vpop.permute.xlu0 %3150
  %3152 = vrot.lane.b32.xlu0 %v2338, 32
  %v3153 = vpop.permute.xlu0 %3152
  %3154 = vrot.lane.b32.xlu0 %v2341, 32
  %v3155 = vpop.permute.xlu0 %3154
  %3156 = vrot.lane.b32.xlu0 %v2344, 32
  %v3157 = vpop.permute.xlu0 %3156
  %3158 = vrot.lane.b32.xlu0 %v2347, 32
  %v3159 = vpop.permute.xlu0 %3158
  %3160 = vrot.lane.b32.xlu0 %v2350, 32
  %v3161 = vpop.permute.xlu0 %3160
  %3162 = vrot.lane.b32.xlu0 %v2353, 32
  %v3163 = vpop.permute.xlu0 %3162
  %3164 = vrot.lane.b32.xlu0 %v2356, 32
  %v3165 = vpop.permute.xlu0 %3164
  %3166 = vrot.lane.b32.xlu0 %v2359, 32
  %v3167 = vpop.permute.xlu0 %3166
  %3168 = vrot.lane.b32.xlu0 %v2362, 32
  %v3169 = vpop.permute.xlu0 %3168
  %3170 = vrot.lane.b32.xlu0 %v2365, 32
  %v3171 = vpop.permute.xlu0 %3170
  %3172 = vrot.lane.b32.xlu0 %v2368, 32
  %v3173 = vpop.permute.xlu0 %3172
  %3174 = vrot.lane.b32.xlu0 %v2371, 32
  %v3175 = vpop.permute.xlu0 %3174
  %3176 = vrot.lane.b32.xlu0 %v2374, 32
  %v3177 = vpop.permute.xlu0 %3176
  %3178 = vrot.lane.b32.xlu0 %v2377, 32
  %v3179 = vpop.permute.xlu0 %3178
  %3180 = vrot.lane.b32.xlu0 %v2380, 32
  %v3181 = vpop.permute.xlu0 %3180
  %3182 = vrot.lane.b32.xlu0 %v2383, 32
  %v3183 = vpop.permute.xlu0 %3182
  %3184 = vrot.lane.b32.xlu0 %v2386, 32
  %v3185 = vpop.permute.xlu0 %3184
  %3186 = vrot.lane.b32.xlu0 %v2389, 32
  %v3187 = vpop.permute.xlu0 %3186
  %3188 = vrot.lane.b32.xlu0 %v2392, 32
  %v3189 = vpop.permute.xlu0 %3188
  %3190 = vrot.lane.b32.xlu0 %v2395, 32
  %v3191 = vpop.permute.xlu0 %3190
  %3192 = vrot.lane.b32.xlu0 %v2398, 32
  %v3193 = vpop.permute.xlu0 %3192
  %3194 = vrot.lane.b32.xlu0 %v2401, 32
  %v3195 = vpop.permute.xlu0 %3194
  %3196 = vrot.lane.b32.xlu0 %v2404, 32
  %v3197 = vpop.permute.xlu0 %3196
  %3198 = vrot.lane.b32.xlu0 %v2407, 32
  %v3199 = vpop.permute.xlu0 %3198
  %3200 = vrot.lane.b32.xlu0 %v2410, 32
  %v3201 = vpop.permute.xlu0 %3200
  %3202 = vrot.lane.b32.xlu0 %v2413, 32
  %v3203 = vpop.permute.xlu0 %3202
  %3204 = vrot.lane.b32.xlu0 %v2416, 32
  %v3205 = vpop.permute.xlu0 %3204
  %3206 = vrot.lane.b32.xlu0 %v2419, 32
  %v3207 = vpop.permute.xlu0 %3206
  %3208 = vrot.lane.b32.xlu0 %v2422, 32
  %v3209 = vpop.permute.xlu0 %3208
  %3210 = vrot.lane.b32.xlu0 %v2425, 32
  %v3211 = vpop.permute.xlu0 %3210
  %3212 = vrot.lane.b32.xlu0 %v2428, 32
  %v3213 = vpop.permute.xlu0 %3212
  %3214 = vrot.lane.b32.xlu0 %v2431, 32
  %v3215 = vpop.permute.xlu0 %3214
  %3216 = vrot.lane.b32.xlu0 %v2434, 32
  %v3217 = vpop.permute.xlu0 %3216
  %3218 = vrot.lane.b32.xlu0 %v2437, 32
  %v3219 = vpop.permute.xlu0 %3218
  %3220 = vrot.lane.b32.xlu0 %v2440, 32
  %v3221 = vpop.permute.xlu0 %3220
  %3222 = vrot.lane.b32.xlu0 %v2443, 32
  %v3223 = vpop.permute.xlu0 %3222
  %3224 = vrot.lane.b32.xlu0 %v2446, 32
  %v3225 = vpop.permute.xlu0 %3224
  %3226 = vrot.lane.b32.xlu0 %v2449, 32
  %v3227 = vpop.permute.xlu0 %3226
  %3228 = vrot.lane.b32.xlu0 %v2452, 32
  %v3229 = vpop.permute.xlu0 %3228
  %3230 = vrot.lane.b32.xlu0 %v2455, 32
  %v3231 = vpop.permute.xlu0 %3230
  %v3296 = vsel %vm109, %v2849, %v3105
  %v3297 = vsel %vm109, %v2851, %v3107
  %v3298 = vsel %vm109, %v2853, %v3109
  %v3299 = vsel %vm109, %v2855, %v3111
  %v3300 = vsel %vm109, %v2857, %v3113
  %v3301 = vsel %vm109, %v2859, %v3115
  %v3302 = vsel %vm109, %v2861, %v3117
  %v3303 = vsel %vm109, %v2863, %v3119
  %v3304 = vsel %vm109, %v2865, %v3121
  %v3305 = vsel %vm109, %v2867, %v3123
  %v3306 = vsel %vm109, %v2869, %v3125
  %v3307 = vsel %vm109, %v2871, %v3127
  %v3308 = vsel %vm109, %v2873, %v3129
  %v3309 = vsel %vm109, %v2875, %v3131
  %v3310 = vsel %vm109, %v2877, %v3133
  %v3311 = vsel %vm109, %v2879, %v3135
  %v3312 = vsel %vm109, %v2881, %v3137
  %v3313 = vsel %vm109, %v2883, %v3139
  %v3314 = vsel %vm109, %v2885, %v3141
  %v3315 = vsel %vm109, %v2887, %v3143
  %v3316 = vsel %vm109, %v2889, %v3145
  %v3317 = vsel %vm109, %v2891, %v3147
  %v3318 = vsel %vm109, %v2893, %v3149
  %v3319 = vsel %vm109, %v2895, %v3151
  %v3320 = vsel %vm109, %v2897, %v3153
  %v3321 = vsel %vm109, %v2899, %v3155
  %v3322 = vsel %vm109, %v2901, %v3157
  %v3323 = vsel %vm109, %v2903, %v3159
  %v3324 = vsel %vm109, %v2905, %v3161
  %v3325 = vsel %vm109, %v2907, %v3163
  %v3326 = vsel %vm109, %v2909, %v3165
  %v3327 = vsel %vm109, %v2911, %v3167
  %v3328 = vsel %vm109, %v2913, %v3169
  %v3329 = vsel %vm109, %v2915, %v3171
  %v3330 = vsel %vm109, %v2917, %v3173
  %v3331 = vsel %vm109, %v2919, %v3175
  %v3332 = vsel %vm109, %v2921, %v3177
  %v3333 = vsel %vm109, %v2923, %v3179
  %v3334 = vsel %vm109, %v2925, %v3181
  %v3335 = vsel %vm109, %v2927, %v3183
  %v3336 = vsel %vm109, %v2929, %v3185
  %v3337 = vsel %vm109, %v2931, %v3187
  %v3338 = vsel %vm109, %v2933, %v3189
  %v3339 = vsel %vm109, %v2935, %v3191
  %v3340 = vsel %vm109, %v2937, %v3193
  %v3341 = vsel %vm109, %v2939, %v3195
  %v3342 = vsel %vm109, %v2941, %v3197
  %v3343 = vsel %vm109, %v2943, %v3199
  %v3344 = vsel %vm109, %v2945, %v3201
  %v3345 = vsel %vm109, %v2947, %v3203
  %v3346 = vsel %vm109, %v2949, %v3205
  %v3347 = vsel %vm109, %v2951, %v3207
  %v3348 = vsel %vm109, %v2953, %v3209
  %v3349 = vsel %vm109, %v2955, %v3211
  %v3350 = vsel %vm109, %v2957, %v3213
  %v3351 = vsel %vm109, %v2959, %v3215
  %v3352 = vsel %vm109, %v2961, %v3217
  %v3353 = vsel %vm109, %v2963, %v3219
  %v3354 = vsel %vm109, %v2965, %v3221
  %v3355 = vsel %vm109, %v2967, %v3223
  %v3356 = vsel %vm109, %v2969, %v3225
  %v3357 = vsel %vm109, %v2971, %v3227
  %v3358 = vsel %vm109, %v2973, %v3229
  %v3359 = vsel %vm109, %v2975, %v3231
  %vm3360 = vcmask 392192
  %3361 = vst.msk [vmem:[%s11] sm:$0xff] %vm3360, %v3296
  %3362 = vst.msk [vmem:[%s11 + $0x8] sm:$0xff] %vm3360, %v3297
  %3363 = vst.msk [vmem:[%s11 + $0x10] sm:$0xff] %vm3360, %v3298
  %3364 = vst.msk [vmem:[%s11 + $0x18] sm:$0xff] %vm3360, %v3299
  %3365 = vst.msk [vmem:[%s11 + $0x20] sm:$0xff] %vm3360, %v3300
  %3366 = vst.msk [vmem:[%s11 + $0x28] sm:$0xff] %vm3360, %v3301
  %3367 = vst.msk [vmem:[%s11 + $0x30] sm:$0xff] %vm3360, %v3302
  %3368 = vst.msk [vmem:[%s11 + $0x38] sm:$0xff] %vm3360, %v3303
  %3369 = vst.msk [vmem:[%s11 + $0x40] sm:$0xff] %vm3360, %v3304
  %3370 = vst.msk [vmem:[%s11 + $0x48] sm:$0xff] %vm3360, %v3305
  %3371 = vst.msk [vmem:[%s11 + $0x50] sm:$0xff] %vm3360, %v3306
  %3372 = vst.msk [vmem:[%s11 + $0x58] sm:$0xff] %vm3360, %v3307
  %3373 = vst.msk [vmem:[%s11 + $0x60] sm:$0xff] %vm3360, %v3308
  %3374 = vst.msk [vmem:[%s11 + $0x68] sm:$0xff] %vm3360, %v3309
  %3375 = vst.msk [vmem:[%s11 + $0x70] sm:$0xff] %vm3360, %v3310
  %3376 = vst.msk [vmem:[%s11 + $0x78] sm:$0xff] %vm3360, %v3311
  %3377 = vst.msk [vmem:[%s11 + $0x80] sm:$0xff] %vm3360, %v3312
  %3378 = vst.msk [vmem:[%s11 + $0x88] sm:$0xff] %vm3360, %v3313
  %3379 = vst.msk [vmem:[%s11 + $0x90] sm:$0xff] %vm3360, %v3314
  %3380 = vst.msk [vmem:[%s11 + $0x98] sm:$0xff] %vm3360, %v3315
  %3381 = vst.msk [vmem:[%s11 + $0xa0] sm:$0xff] %vm3360, %v3316
  %3382 = vst.msk [vmem:[%s11 + $0xa8] sm:$0xff] %vm3360, %v3317
  %3383 = vst.msk [vmem:[%s11 + $0xb0] sm:$0xff] %vm3360, %v3318
  %3384 = vst.msk [vmem:[%s11 + $0xb8] sm:$0xff] %vm3360, %v3319
  %3385 = vst.msk [vmem:[%s11 + $0xc0] sm:$0xff] %vm3360, %v3320
  %3386 = vst.msk [vmem:[%s11 + $0xc8] sm:$0xff] %vm3360, %v3321
  %3387 = vst.msk [vmem:[%s11 + $0xd0] sm:$0xff] %vm3360, %v3322
  %3388 = vst.msk [vmem:[%s11 + $0xd8] sm:$0xff] %vm3360, %v3323
  %3389 = vst.msk [vmem:[%s11 + $0xe0] sm:$0xff] %vm3360, %v3324
  %3390 = vst.msk [vmem:[%s11 + $0xe8] sm:$0xff] %vm3360, %v3325
  %3391 = vst.msk [vmem:[%s11 + $0xf0] sm:$0xff] %vm3360, %v3326
  %3392 = vst.msk [vmem:[%s11 + $0xf8] sm:$0xff] %vm3360, %v3327
  %3393 = vst.msk [vmem:[%s11 + $0x100] sm:$0xff] %vm3360, %v3328
  %3394 = vst.msk [vmem:[%s11 + $0x108] sm:$0xff] %vm3360, %v3329
  %3395 = vst.msk [vmem:[%s11 + $0x110] sm:$0xff] %vm3360, %v3330
  %3396 = vst.msk [vmem:[%s11 + $0x118] sm:$0xff] %vm3360, %v3331
  %3397 = vst.msk [vmem:[%s11 + $0x120] sm:$0xff] %vm3360, %v3332
  %3398 = vst.msk [vmem:[%s11 + $0x128] sm:$0xff] %vm3360, %v3333
  %3399 = vst.msk [vmem:[%s11 + $0x130] sm:$0xff] %vm3360, %v3334
  %3400 = vst.msk [vmem:[%s11 + $0x138] sm:$0xff] %vm3360, %v3335
  %3401 = vst.msk [vmem:[%s11 + $0x140] sm:$0xff] %vm3360, %v3336
  %3402 = vst.msk [vmem:[%s11 + $0x148] sm:$0xff] %vm3360, %v3337
  %3403 = vst.msk [vmem:[%s11 + $0x150] sm:$0xff] %vm3360, %v3338
  %3404 = vst.msk [vmem:[%s11 + $0x158] sm:$0xff] %vm3360, %v3339
  %3405 = vst.msk [vmem:[%s11 + $0x160] sm:$0xff] %vm3360, %v3340
  %3406 = vst.msk [vmem:[%s11 + $0x168] sm:$0xff] %vm3360, %v3341
  %3407 = vst.msk [vmem:[%s11 + $0x170] sm:$0xff] %vm3360, %v3342
  %3408 = vst.msk [vmem:[%s11 + $0x178] sm:$0xff] %vm3360, %v3343
  %3409 = vst.msk [vmem:[%s11 + $0x180] sm:$0xff] %vm3360, %v3344
  %3410 = vst.msk [vmem:[%s11 + $0x188] sm:$0xff] %vm3360, %v3345
  %3411 = vst.msk [vmem:[%s11 + $0x190] sm:$0xff] %vm3360, %v3346
  %3412 = vst.msk [vmem:[%s11 + $0x198] sm:$0xff] %vm3360, %v3347
  %3413 = vst.msk [vmem:[%s11 + $0x1a0] sm:$0xff] %vm3360, %v3348
  %3414 = vst.msk [vmem:[%s11 + $0x1a8] sm:$0xff] %vm3360, %v3349
  %3415 = vst.msk [vmem:[%s11 + $0x1b0] sm:$0xff] %vm3360, %v3350
  %3416 = vst.msk [vmem:[%s11 + $0x1b8] sm:$0xff] %vm3360, %v3351
  %3417 = vst.msk [vmem:[%s11 + $0x1c0] sm:$0xff] %vm3360, %v3352
  %3418 = vst.msk [vmem:[%s11 + $0x1c8] sm:$0xff] %vm3360, %v3353
  %3419 = vst.msk [vmem:[%s11 + $0x1d0] sm:$0xff] %vm3360, %v3354
  %3420 = vst.msk [vmem:[%s11 + $0x1d8] sm:$0xff] %vm3360, %v3355
  %3421 = vst.msk [vmem:[%s11 + $0x1e0] sm:$0xff] %vm3360, %v3356
  %3422 = vst.msk [vmem:[%s11 + $0x1e8] sm:$0xff] %vm3360, %v3357
  %3423 = vst.msk [vmem:[%s11 + $0x1f0] sm:$0xff] %vm3360, %v3358
  %3424 = vst.msk [vmem:[%s11 + $0x1f8] sm:$0xff] %vm3360, %v3359
  // Predicated region
  $region42: #{tpu_custom_call.1} parent=0 // pred_check
    _
  $region43: #{tpu_custom_call.1} parent=0 // pred_check_branch
    %3426 = sbr.rel (0) target = $region45
  $region44: #{tpu_custom_call.1} parent=0 // pred_region
    _
  $region45: #{tpu_custom_call.1} parent=0 // pred_fallthru
    _
  // Predicated region
  $region46: #{tpu_custom_call.1} parent=0 // pred_check
    _
  $region47: #{tpu_custom_call.1} parent=0 // pred_check_branch
    %3428 = sbr.rel (0) target = $region49
  $region48: #{tpu_custom_call.1} parent=0 // pred_region
    _
  $region49: #{tpu_custom_call.1} parent=0 // pred_fallthru
    _
  // Predicated region
  $region50: #{tpu_custom_call.1} parent=0 // pred_check
    _
  $region51: #{tpu_custom_call.1} parent=0 // pred_check_branch
    %3430 = sbr.rel (0) target = $region53
  $region52: #{tpu_custom_call.1} parent=0 // pred_region
    _
  $region53: #{tpu_custom_call.1} parent=0 // pred_fallthru
    _
  // Predicated region
  $region54: #{tpu_custom_call.1} parent=0 // pred_check
    _
  $region55: #{tpu_custom_call.1} parent=0 // pred_check_branch
    %3432 = sbr.rel (0) target = $region57
  $region56: #{tpu_custom_call.1} parent=0 // pred_region
    _
  $region57: #{tpu_custom_call.1} parent=0 // pred_fallthru
    _

</llo_original>
